<compile_context>
chip_gen: v5e
topology: v5e:2x2
jax: 0.10.0
libtpu: 0.0.40
codegen_flags: <defaults>
</compile_context>

<pallas_src>
import functools

import jax
import jax.numpy as jnp
from jax import lax
from jax.experimental import pallas as pl
from jax.experimental.pallas import tpu as pltpu


# ----------------------------------------------------------------------------
# Fused kernel: whole batch, x (B, C, N) -> y (B, C, N)
# ----------------------------------------------------------------------------
def _fused_mhsa_kernel(x_ref, wqkv_ref, bqkv_ref, wo_ref, bo_ref, y_ref,
                       qkv_s, out_s, *, heads, dim_head, batch):
    """
    x_ref:    (B, C, N)     channel-major inputs
    wqkv_ref: (3*HD, C)     bf16, rows ordered [q(m,d) | k(m,d) | v(m,d)], q pre-scaled
    bqkv_ref: (3*HD, 1)     f32, matching row order (q part pre-scaled)
    wo_ref:   (C, HD)       bf16, original W_0 1x1-conv weight
    bo_ref:   (C, 1)        f32
    qkv_s:    VMEM scratch (B, 3*HD, N) f32
    out_s:    VMEM scratch (B, HD, N) f32
    """
    hd = heads * dim_head

    w_qkv = wqkv_ref[...]            # (3HD, C) bf16, loaded once, VMEM-resident
    b_qkv = bqkv_ref[...]            # (3HD, 1) f32
    w_o = wo_ref[...]                # (C, HD) bf16
    b_o = bo_ref[...]                # (C, 1) f32

    for b in range(batch):           # B is tiny and static -> unrolled
        # --- QKV projection: canonical (3HD, C) @ (C, N) -> (3HD, N) ---
        x_b = x_ref[b].astype(jnp.bfloat16)
        qkv_s[b] = jnp.dot(w_qkv, x_b,
                           preferred_element_type=jnp.float32) + b_qkv

        # --- per-head attention (row-block slices; heads is small) ---
        for m in range(heads):
            lo = m * dim_head
            q = qkv_s[b, lo:lo + dim_head, :].astype(jnp.bfloat16)            # (d, N)
            k = qkv_s[b, hd + lo:hd + lo + dim_head, :].astype(jnp.bfloat16)  # (d, N)
            v = qkv_s[b, 2 * hd + lo:2 * hd + lo + dim_head, :].astype(jnp.bfloat16)

            # scores s[j, i] = k_j . q_i  (contract the leading d axis; scale
            # is already folded into q).  Keys on rows -> softmax over sublanes.
            s = lax.dot_general(k, q, (((0,), (0,)), ((), ())),
                                preferred_element_type=jnp.float32)   # (Nj, Ni)
            s = s - jnp.max(s, axis=0, keepdims=True)
            p = jnp.exp(s)                                            # (Nj, Ni) f32
            l = jnp.sum(p, axis=0, keepdims=True)                     # (1, Ni)

            # PV: (d, Nj) @ (Nj, Ni) -> (d, Ni).  Normalization is deferred so
            # the MXU push does not wait on the sum/reciprocal.
            o = jnp.dot(v, p.astype(jnp.bfloat16),
                        preferred_element_type=jnp.float32)           # (d, Ni)
            out_s[b, lo:lo + dim_head, :] = o * pl.reciprocal(l, approx=True)

        # --- output projection: canonical (C, HD) @ (HD, N) -> (C, N) ---
        y = jnp.dot(w_o, out_s[b].astype(jnp.bfloat16),
                    preferred_element_type=jnp.float32) + b_o
        y_ref[b] = y.astype(y_ref.dtype)


# ----------------------------------------------------------------------------
# One-time parameter prep (hoisted out of the per-step forward)
# ----------------------------------------------------------------------------
def prepare_params(params, heads):
    w_qkv = params["w_qkv"]          # (3*dim, dim)  conv1x1 weight (out_ch, in_ch)
    b_qkv = params["b_qkv"]          # (3*dim,)
    w_o = params["w_o"]              # (dim, HD)
    b_o = params["b_o"]              # (dim,)

    three_hd = w_qkv.shape[0]
    hd = three_hd // 3
    dh = hd // heads
    scale = float(dh) ** -0.5

    # conv output-channel index is d*(3*heads) + kk*heads + m  (rearrange
    # 'b (d k m) h w'); reorder rows to (kk, m, d) so each head's q/k/v is a
    # contiguous ROW block inside the kernel.
    perm = jnp.array(
        [d * 3 * heads + kk * heads + m
         for kk in range(3) for m in range(heads) for d in range(dh)],
        dtype=jnp.int32)
    # fold the attention scale into the q slab (weights + bias)
    qscale = jnp.concatenate([jnp.full((hd,), scale, jnp.float32),
                              jnp.ones((2 * hd,), jnp.float32)])

    return {
        "w_in": (w_qkv[perm, :] * qscale[:, None]).astype(jnp.bfloat16),  # (3HD, C)
        "b_in": (b_qkv[perm] * qscale)[:, None].astype(jnp.float32),      # (3HD, 1)
        "w_o": w_o.astype(jnp.bfloat16),                                  # (C, HD)
        "b_o": b_o[:, None].astype(jnp.float32),                          # (C, 1)
    }


# ----------------------------------------------------------------------------
# Module forward: NCHW in, NCHW out (only free reshapes outside the kernel)
# ----------------------------------------------------------------------------
def multi_head_self_attention(x, prepped, heads):
    B, C, H, W = x.shape
    N = H * W
    HD = prepped["w_in"].shape[0] // 3
    dh = HD // heads

    x_cn = x.reshape(B, C, N)        # free reshape (contiguous NCHW)

    kernel = functools.partial(_fused_mhsa_kernel,
                               heads=heads, dim_head=dh, batch=B)
    y_cn = pl.pallas_call(
        kernel,
        grid=(1,),   # whole (tiny) batch in one invocation: no per-step overhead
        in_specs=[
            pl.BlockSpec((B, C, N), lambda i: (0, 0, 0)),        # x
            pl.BlockSpec((3 * HD, C), lambda i: (0, 0)),         # w_qkv (VMEM-resident)
            pl.BlockSpec((3 * HD, 1), lambda i: (0, 0)),         # b_qkv
            pl.BlockSpec((C, HD), lambda i: (0, 0)),             # w_o
            pl.BlockSpec((C, 1), lambda i: (0, 0)),              # b_o
        ],
        out_specs=pl.BlockSpec((B, C, N), lambda i: (0, 0, 0)),
        out_shape=jax.ShapeDtypeStruct((B, C, N), x.dtype),
        scratch_shapes=[
            pltpu.VMEM((B, 3 * HD, N), jnp.float32),   # qkv_s (transposed layout)
            pltpu.VMEM((B, HD, N), jnp.float32),       # out_s
        ],
        compiler_params=pltpu.CompilerParams(
            dimension_semantics=("arbitrary",),
            vmem_limit_bytes=16 * 1024 * 1024),
    )(x_cn, prepped["w_in"], prepped["b_in"], prepped["w_o"], prepped["b_o"])

    return y_cn.reshape(B, C, H, W)


# ----------------------------------------------------------------------------
# Pure-JAX reference for verification
# ----------------------------------------------------------------------------
def reference(x, params, heads):
    B, C, H, W = x.shape
    N = H * W
    d = C // heads
    x_seq = jnp.transpose(x.reshape(B, C, N), (0, 2, 1))
    qkv = x_seq @ params["w_qkv"].T + params["b_qkv"]
    qkv = qkv.reshape(B, N, d, 3, heads)
    q = jnp.transpose(qkv[:, :, :, 0, :], (0, 3, 1, 2))
    k = jnp.transpose(qkv[:, :, :, 1, :], (0, 3, 1, 2))
    v = jnp.transpose(qkv[:, :, :, 2, :], (0, 3, 1, 2))
    s = jnp.einsum("bmid,bmjd->bmij", q, k) * (float(d) ** -0.5)
    a = jax.nn.softmax(s, axis=-1)
    o = jnp.einsum("bmij,bmjd->bmid", a, v)
    o_seq = jnp.transpose(o, (0, 2, 1, 3)).reshape(B, N, heads * d)
    y = o_seq @ params["w_o"].T + params["b_o"]
    return jnp.transpose(y, (0, 2, 1)).reshape(B, C, H, W)


if __name__ == "__main__":
    # Module config: dim=32, heads=8 -> dim_head=4, spatial 8x8 -> N=64
    B, dim, H, W, heads = 2, 32, 8, 8, 8
    key = jax.random.PRNGKey(0)
    kx, kw1, kb1, kw2, kb2 = jax.random.split(key, 5)

    x = jax.random.normal(kx, (B, dim, H, W), dtype=jnp.float32)
    params = {
        "w_qkv": jax.random.normal(kw1, (3 * dim, dim), dtype=jnp.float32) * 0.1,
        "b_qkv": jax.random.normal(kb1, (3 * dim,), dtype=jnp.float32) * 0.1,
        "w_o":   jax.random.normal(kw2, (dim, dim), dtype=jnp.float32) * 0.1,
        "b_o":   jax.random.normal(kb2, (dim,), dtype=jnp.float32) * 0.1,
    }

    # one-time parameter prep (outside the jitted per-step forward)
    prepped = prepare_params(params, heads)

    fwd = jax.jit(functools.partial(multi_head_self_attention, heads=heads))
    y = jax.block_until_ready(fwd(x, prepped))

    y_ref = reference(x, params, heads)
    assert y.shape == (B, dim, H, W)
    # bf16 MXU operands (f32 accumulation) + approx softmax reciprocal
    # -> allow ~1e-2-scale worst-case absolute error vs the f32 reference.
    err = float(jnp.max(jnp.abs(y - y_ref)))
    assert err < 2e-2, f"mismatch vs reference: max abs err {err}"
    print("KERNEL_OK")
</pallas_src>

<mosaic_0001>
module attributes {stable_mosaic.version = 11 : i64} {
  func.func @_fused_mhsa_kernel(%arg0: i32, %arg1: memref<2x32x64xf32, #tpu.memory_space<vmem>>, %arg2: memref<96x32xbf16, #tpu.memory_space<vmem>>, %arg3: memref<96x1xf32, #tpu.memory_space<vmem>>, %arg4: memref<32x32xbf16, #tpu.memory_space<vmem>>, %arg5: memref<32x1xf32, #tpu.memory_space<vmem>>, %arg6: memref<2x32x64xf32, #tpu.memory_space<vmem>>, %arg7: memref<2x96x64xf32, #tpu.memory_space<vmem>>, %arg8: memref<2x32x64xf32, #tpu.memory_space<vmem>>) attributes {dimension_semantics = [#tpu.dimension_semantics<arbitrary>], iteration_bounds = array<i64: 1>, scalar_prefetch = 0 : i64, scratch_operands = 2 : i64, tpu.core_type = #tpu.core_type<tc>, window_params = [{pipeline_mode = #tpu.pipeline_mode<synchronous>, transform_indices = @transform_0, window_bounds = array<i64: 2, 32, 64>}, {pipeline_mode = #tpu.pipeline_mode<synchronous>, transform_indices = @transform_1, window_bounds = array<i64: 96, 32>}, {pipeline_mode = #tpu.pipeline_mode<synchronous>, transform_indices = @transform_2, window_bounds = array<i64: 96, 1>}, {pipeline_mode = #tpu.pipeline_mode<synchronous>, transform_indices = @transform_3, window_bounds = array<i64: 32, 32>}, {pipeline_mode = #tpu.pipeline_mode<synchronous>, transform_indices = @transform_4, window_bounds = array<i64: 32, 1>}, {pipeline_mode = #tpu.pipeline_mode<synchronous>, transform_indices = @transform_5, window_bounds = array<i64: 2, 32, 64>}]} {
    %c0 = arith.constant 0 : index
    %c0_0 = arith.constant 0 : index
    %0 = vector.load %arg2[%c0, %c0_0] : memref<96x32xbf16, #tpu.memory_space<vmem>>, vector<96x32xbf16>
    %c0_1 = arith.constant 0 : index
    %c0_2 = arith.constant 0 : index
    %1 = vector.load %arg3[%c0_1, %c0_2] : memref<96x1xf32, #tpu.memory_space<vmem>>, vector<96x1xf32>
    %c0_3 = arith.constant 0 : index
    %c0_4 = arith.constant 0 : index
    %2 = vector.load %arg4[%c0_3, %c0_4] : memref<32x32xbf16, #tpu.memory_space<vmem>>, vector<32x32xbf16>
    %c0_5 = arith.constant 0 : index
    %c0_6 = arith.constant 0 : index
    %3 = vector.load %arg5[%c0_5, %c0_6] : memref<32x1xf32, #tpu.memory_space<vmem>>, vector<32x1xf32>
    %c0_7 = arith.constant 0 : index
    %c0_8 = arith.constant 0 : index
    %c0_9 = arith.constant 0 : index
    %4 = vector.load %arg1[%c0_7, %c0_8, %c0_9] : memref<2x32x64xf32, #tpu.memory_space<vmem>>, vector<1x32x64xf32>
    %5 = vector.shape_cast %4 : vector<1x32x64xf32> to vector<32x64xf32>
    %6 = arith.truncf %5 : vector<32x64xf32> to vector<32x64xbf16>
    %cst = arith.constant dense<0.000000e+00> : vector<96x64xf32>
    %7 = tpu.matmul %0, %6, %cst {dimension_numbers = #tpu.dot_dimension_numbers<[1], [0], [0], [1], [0, 0, 1, 1], [], []>} : vector<96x32xbf16>, vector<32x64xbf16>, vector<96x64xf32> -> vector<96x64xf32>
    %8 = vector.broadcast %1 : vector<96x1xf32> to vector<96x64xf32>
    %9 = arith.addf %7, %8 : vector<96x64xf32>
    %c0_10 = arith.constant 0 : index
    %c0_11 = arith.constant 0 : index
    %c0_12 = arith.constant 0 : index
    %10 = vector.load %arg7[%c0_10, %c0_11, %c0_12] : memref<2x96x64xf32, #tpu.memory_space<vmem>>, vector<1x96x64xf32>
    %11 = vector.shape_cast %10 : vector<1x96x64xf32> to vector<96x64xf32>
    %12 = vector.shape_cast %9 : vector<96x64xf32> to vector<1x96x64xf32>
    tpu.vector_store %arg7[%c0_10, %c0_11, %c0_12], %12 {strides = array<i32>} : memref<2x96x64xf32, #tpu.memory_space<vmem>>, vector<1x96x64xf32>,
    %c0_13 = arith.constant 0 : index
    %c0_14 = arith.constant 0 : index
    %c0_15 = arith.constant 0 : index
    %13 = vector.load %arg7[%c0_13, %c0_14, %c0_15] : memref<2x96x64xf32, #tpu.memory_space<vmem>>, vector<1x4x64xf32>
    %14 = vector.shape_cast %13 : vector<1x4x64xf32> to vector<4x64xf32>
    %15 = arith.truncf %14 : vector<4x64xf32> to vector<4x64xbf16>
    %c0_16 = arith.constant 0 : index
    %c32 = arith.constant 32 : index
    %c0_17 = arith.constant 0 : index
    %16 = vector.load %arg7[%c0_16, %c32, %c0_17] : memref<2x96x64xf32, #tpu.memory_space<vmem>>, vector<1x4x64xf32>
    %17 = vector.shape_cast %16 : vector<1x4x64xf32> to vector<4x64xf32>
    %18 = arith.truncf %17 : vector<4x64xf32> to vector<4x64xbf16>
    %c0_18 = arith.constant 0 : index
    %c64 = arith.constant 64 : index
    %c0_19 = arith.constant 0 : index
    %19 = vector.load %arg7[%c0_18, %c64, %c0_19] : memref<2x96x64xf32, #tpu.memory_space<vmem>>, vector<1x4x64xf32>
    %20 = vector.shape_cast %19 : vector<1x4x64xf32> to vector<4x64xf32>
    %21 = arith.truncf %20 : vector<4x64xf32> to vector<4x64xbf16>
    %cst_20 = arith.constant dense<0.000000e+00> : vector<64x64xf32>
    %22 = tpu.matmul %18, %15, %cst_20 {dimension_numbers = #tpu.dot_dimension_numbers<[0], [0], [1], [1], [0, 1, 1, 1], [], []>} : vector<4x64xbf16>, vector<4x64xbf16>, vector<64x64xf32> -> vector<64x64xf32>
    %cst_21 = arith.constant dense<0xFF800000> : vector<64xf32>
    %23 = vector.multi_reduction <maximumf>, %22, %cst_21 [0] : vector<64x64xf32> to vector<64xf32>
    %24 = vector.shape_cast %23 : vector<64xf32> to vector<1x64xf32>
    %25 = vector.broadcast %24 : vector<1x64xf32> to vector<64x64xf32>
    %26 = arith.subf %22, %25 : vector<64x64xf32>
    %27 = math.exp %26 : vector<64x64xf32>
    %cst_22 = arith.constant dense<0.000000e+00> : vector<64xf32>
    %28 = vector.multi_reduction <add>, %27, %cst_22 [0] : vector<64x64xf32> to vector<64xf32>
    %29 = vector.shape_cast %28 : vector<64xf32> to vector<1x64xf32>
    %30 = arith.truncf %27 : vector<64x64xf32> to vector<64x64xbf16>
    %cst_23 = arith.constant dense<0.000000e+00> : vector<4x64xf32>
    %31 = tpu.matmul %21, %30, %cst_23 {dimension_numbers = #tpu.dot_dimension_numbers<[1], [0], [0], [1], [0, 0, 1, 1], [], []>} : vector<4x64xbf16>, vector<64x64xbf16>, vector<4x64xf32> -> vector<4x64xf32>
    %32 = tpu.reciprocal %29 {approx = true} : vector<1x64xf32> -> vector<1x64xf32>
    %33 = vector.broadcast %32 : vector<1x64xf32> to vector<4x64xf32>
    %34 = arith.mulf %31, %33 : vector<4x64xf32>
    %c0_24 = arith.constant 0 : index
    %c0_25 = arith.constant 0 : index
    %c0_26 = arith.constant 0 : index
    %35 = vector.load %arg8[%c0_24, %c0_25, %c0_26] : memref<2x32x64xf32, #tpu.memory_space<vmem>>, vector<1x4x64xf32>
    %36 = vector.shape_cast %35 : vector<1x4x64xf32> to vector<4x64xf32>
    %37 = vector.shape_cast %34 : vector<4x64xf32> to vector<1x4x64xf32>
    tpu.vector_store %arg8[%c0_24, %c0_25, %c0_26], %37 {strides = array<i32>} : memref<2x32x64xf32, #tpu.memory_space<vmem>>, vector<1x4x64xf32>,
    %c0_27 = arith.constant 0 : index
    %c4 = arith.constant 4 : index
    %c0_28 = arith.constant 0 : index
    %38 = vector.load %arg7[%c0_27, %c4, %c0_28] : memref<2x96x64xf32, #tpu.memory_space<vmem>>, vector<1x4x64xf32>
    %39 = vector.shape_cast %38 : vector<1x4x64xf32> to vector<4x64xf32>
    %40 = arith.truncf %39 : vector<4x64xf32> to vector<4x64xbf16>
    %c0_29 = arith.constant 0 : index
    %c36 = arith.constant 36 : index
    %c0_30 = arith.constant 0 : index
    %41 = vector.load %arg7[%c0_29, %c36, %c0_30] : memref<2x96x64xf32, #tpu.memory_space<vmem>>, vector<1x4x64xf32>
    %42 = vector.shape_cast %41 : vector<1x4x64xf32> to vector<4x64xf32>
    %43 = arith.truncf %42 : vector<4x64xf32> to vector<4x64xbf16>
    %c0_31 = arith.constant 0 : index
    %c68 = arith.constant 68 : index
    %c0_32 = arith.constant 0 : index
    %44 = vector.load %arg7[%c0_31, %c68, %c0_32] : memref<2x96x64xf32, #tpu.memory_space<vmem>>, vector<1x4x64xf32>
    %45 = vector.shape_cast %44 : vector<1x4x64xf32> to vector<4x64xf32>
    %46 = arith.truncf %45 : vector<4x64xf32> to vector<4x64xbf16>
    %cst_33 = arith.constant dense<0.000000e+00> : vector<64x64xf32>
    %47 = tpu.matmul %43, %40, %cst_33 {dimension_numbers = #tpu.dot_dimension_numbers<[0], [0], [1], [1], [0, 1, 1, 1], [], []>} : vector<4x64xbf16>, vector<4x64xbf16>, vector<64x64xf32> -> vector<64x64xf32>
    %cst_34 = arith.constant dense<0xFF800000> : vector<64xf32>
    %48 = vector.multi_reduction <maximumf>, %47, %cst_34 [0] : vector<64x64xf32> to vector<64xf32>
    %49 = vector.shape_cast %48 : vector<64xf32> to vector<1x64xf32>
    %50 = vector.broadcast %49 : vector<1x64xf32> to vector<64x64xf32>
    %51 = arith.subf %47, %50 : vector<64x64xf32>
    %52 = math.exp %51 : vector<64x64xf32>
    %cst_35 = arith.constant dense<0.000000e+00> : vector<64xf32>
    %53 = vector.multi_reduction <add>, %52, %cst_35 [0] : vector<64x64xf32> to vector<64xf32>
    %54 = vector.shape_cast %53 : vector<64xf32> to vector<1x64xf32>
    %55 = arith.truncf %52 : vector<64x64xf32> to vector<64x64xbf16>
    %cst_36 = arith.constant dense<0.000000e+00> : vector<4x64xf32>
    %56 = tpu.matmul %46, %55, %cst_36 {dimension_numbers = #tpu.dot_dimension_numbers<[1], [0], [0], [1], [0, 0, 1, 1], [], []>} : vector<4x64xbf16>, vector<64x64xbf16>, vector<4x64xf32> -> vector<4x64xf32>
    %57 = tpu.reciprocal %54 {approx = true} : vector<1x64xf32> -> vector<1x64xf32>
    %58 = vector.broadcast %57 : vector<1x64xf32> to vector<4x64xf32>
    %59 = arith.mulf %56, %58 : vector<4x64xf32>
    %c0_37 = arith.constant 0 : index
    %c4_38 = arith.constant 4 : index
    %c0_39 = arith.constant 0 : index
    %60 = vector.load %arg8[%c0_37, %c4_38, %c0_39] : memref<2x32x64xf32, #tpu.memory_space<vmem>>, vector<1x4x64xf32>
    %61 = vector.shape_cast %60 : vector<1x4x64xf32> to vector<4x64xf32>
    %62 = vector.shape_cast %59 : vector<4x64xf32> to vector<1x4x64xf32>
    tpu.vector_store %arg8[%c0_37, %c4_38, %c0_39], %62 {strides = array<i32>} : memref<2x32x64xf32, #tpu.memory_space<vmem>>, vector<1x4x64xf32>,
    %c0_40 = arith.constant 0 : index
    %c8 = arith.constant 8 : index
    %c0_41 = arith.constant 0 : index
    %63 = vector.load %arg7[%c0_40, %c8, %c0_41] : memref<2x96x64xf32, #tpu.memory_space<vmem>>, vector<1x4x64xf32>
    %64 = vector.shape_cast %63 : vector<1x4x64xf32> to vector<4x64xf32>
    %65 = arith.truncf %64 : vector<4x64xf32> to vector<4x64xbf16>
    %c0_42 = arith.constant 0 : index
    %c40 = arith.constant 40 : index
    %c0_43 = arith.constant 0 : index
    %66 = vector.load %arg7[%c0_42, %c40, %c0_43] : memref<2x96x64xf32, #tpu.memory_space<vmem>>, vector<1x4x64xf32>
    %67 = vector.shape_cast %66 : vector<1x4x64xf32> to vector<4x64xf32>
    %68 = arith.truncf %67 : vector<4x64xf32> to vector<4x64xbf16>
    %c0_44 = arith.constant 0 : index
    %c72 = arith.constant 72 : index
    %c0_45 = arith.constant 0 : index
    %69 = vector.load %arg7[%c0_44, %c72, %c0_45] : memref<2x96x64xf32, #tpu.memory_space<vmem>>, vector<1x4x64xf32>
    %70 = vector.shape_cast %69 : vector<1x4x64xf32> to vector<4x64xf32>
    %71 = arith.truncf %70 : vector<4x64xf32> to vector<4x64xbf16>
    %cst_46 = arith.constant dense<0.000000e+00> : vector<64x64xf32>
    %72 = tpu.matmul %68, %65, %cst_46 {dimension_numbers = #tpu.dot_dimension_numbers<[0], [0], [1], [1], [0, 1, 1, 1], [], []>} : vector<4x64xbf16>, vector<4x64xbf16>, vector<64x64xf32> -> vector<64x64xf32>
    %cst_47 = arith.constant dense<0xFF800000> : vector<64xf32>
    %73 = vector.multi_reduction <maximumf>, %72, %cst_47 [0] : vector<64x64xf32> to vector<64xf32>
    %74 = vector.shape_cast %73 : vector<64xf32> to vector<1x64xf32>
    %75 = vector.broadcast %74 : vector<1x64xf32> to vector<64x64xf32>
    %76 = arith.subf %72, %75 : vector<64x64xf32>
    %77 = math.exp %76 : vector<64x64xf32>
    %cst_48 = arith.constant dense<0.000000e+00> : vector<64xf32>
    %78 = vector.multi_reduction <add>, %77, %cst_48 [0] : vector<64x64xf32> to vector<64xf32>
    %79 = vector.shape_cast %78 : vector<64xf32> to vector<1x64xf32>
    %80 = arith.truncf %77 : vector<64x64xf32> to vector<64x64xbf16>
    %cst_49 = arith.constant dense<0.000000e+00> : vector<4x64xf32>
    %81 = tpu.matmul %71, %80, %cst_49 {dimension_numbers = #tpu.dot_dimension_numbers<[1], [0], [0], [1], [0, 0, 1, 1], [], []>} : vector<4x64xbf16>, vector<64x64xbf16>, vector<4x64xf32> -> vector<4x64xf32>
    %82 = tpu.reciprocal %79 {approx = true} : vector<1x64xf32> -> vector<1x64xf32>
    %83 = vector.broadcast %82 : vector<1x64xf32> to vector<4x64xf32>
    %84 = arith.mulf %81, %83 : vector<4x64xf32>
    %c0_50 = arith.constant 0 : index
    %c8_51 = arith.constant 8 : index
    %c0_52 = arith.constant 0 : index
    %85 = vector.load %arg8[%c0_50, %c8_51, %c0_52] : memref<2x32x64xf32, #tpu.memory_space<vmem>>, vector<1x4x64xf32>
    %86 = vector.shape_cast %85 : vector<1x4x64xf32> to vector<4x64xf32>
    %87 = vector.shape_cast %84 : vector<4x64xf32> to vector<1x4x64xf32>
    tpu.vector_store %arg8[%c0_50, %c8_51, %c0_52], %87 {strides = array<i32>} : memref<2x32x64xf32, #tpu.memory_space<vmem>>, vector<1x4x64xf32>,
    %c0_53 = arith.constant 0 : index
    %c12 = arith.constant 12 : index
    %c0_54 = arith.constant 0 : index
    %88 = vector.load %arg7[%c0_53, %c12, %c0_54] : memref<2x96x64xf32, #tpu.memory_space<vmem>>, vector<1x4x64xf32>
    %89 = vector.shape_cast %88 : vector<1x4x64xf32> to vector<4x64xf32>
    %90 = arith.truncf %89 : vector<4x64xf32> to vector<4x64xbf16>
    %c0_55 = arith.constant 0 : index
    %c44 = arith.constant 44 : index
    %c0_56 = arith.constant 0 : index
    %91 = vector.load %arg7[%c0_55, %c44, %c0_56] : memref<2x96x64xf32, #tpu.memory_space<vmem>>, vector<1x4x64xf32>
    %92 = vector.shape_cast %91 : vector<1x4x64xf32> to vector<4x64xf32>
    %93 = arith.truncf %92 : vector<4x64xf32> to vector<4x64xbf16>
    %c0_57 = arith.constant 0 : index
    %c76 = arith.constant 76 : index
    %c0_58 = arith.constant 0 : index
    %94 = vector.load %arg7[%c0_57, %c76, %c0_58] : memref<2x96x64xf32, #tpu.memory_space<vmem>>, vector<1x4x64xf32>
    %95 = vector.shape_cast %94 : vector<1x4x64xf32> to vector<4x64xf32>
    %96 = arith.truncf %95 : vector<4x64xf32> to vector<4x64xbf16>
    %cst_59 = arith.constant dense<0.000000e+00> : vector<64x64xf32>
    %97 = tpu.matmul %93, %90, %cst_59 {dimension_numbers = #tpu.dot_dimension_numbers<[0], [0], [1], [1], [0, 1, 1, 1], [], []>} : vector<4x64xbf16>, vector<4x64xbf16>, vector<64x64xf32> -> vector<64x64xf32>
    %cst_60 = arith.constant dense<0xFF800000> : vector<64xf32>
    %98 = vector.multi_reduction <maximumf>, %97, %cst_60 [0] : vector<64x64xf32> to vector<64xf32>
    %99 = vector.shape_cast %98 : vector<64xf32> to vector<1x64xf32>
    %100 = vector.broadcast %99 : vector<1x64xf32> to vector<64x64xf32>
    %101 = arith.subf %97, %100 : vector<64x64xf32>
    %102 = math.exp %101 : vector<64x64xf32>
    %cst_61 = arith.constant dense<0.000000e+00> : vector<64xf32>
    %103 = vector.multi_reduction <add>, %102, %cst_61 [0] : vector<64x64xf32> to vector<64xf32>
    %104 = vector.shape_cast %103 : vector<64xf32> to vector<1x64xf32>
    %105 = arith.truncf %102 : vector<64x64xf32> to vector<64x64xbf16>
    %cst_62 = arith.constant dense<0.000000e+00> : vector<4x64xf32>
    %106 = tpu.matmul %96, %105, %cst_62 {dimension_numbers = #tpu.dot_dimension_numbers<[1], [0], [0], [1], [0, 0, 1, 1], [], []>} : vector<4x64xbf16>, vector<64x64xbf16>, vector<4x64xf32> -> vector<4x64xf32>
    %107 = tpu.reciprocal %104 {approx = true} : vector<1x64xf32> -> vector<1x64xf32>
    %108 = vector.broadcast %107 : vector<1x64xf32> to vector<4x64xf32>
    %109 = arith.mulf %106, %108 : vector<4x64xf32>
    %c0_63 = arith.constant 0 : index
    %c12_64 = arith.constant 12 : index
    %c0_65 = arith.constant 0 : index
    %110 = vector.load %arg8[%c0_63, %c12_64, %c0_65] : memref<2x32x64xf32, #tpu.memory_space<vmem>>, vector<1x4x64xf32>
    %111 = vector.shape_cast %110 : vector<1x4x64xf32> to vector<4x64xf32>
    %112 = vector.shape_cast %109 : vector<4x64xf32> to vector<1x4x64xf32>
    tpu.vector_store %arg8[%c0_63, %c12_64, %c0_65], %112 {strides = array<i32>} : memref<2x32x64xf32, #tpu.memory_space<vmem>>, vector<1x4x64xf32>,
    %c0_66 = arith.constant 0 : index
    %c16 = arith.constant 16 : index
    %c0_67 = arith.constant 0 : index
    %113 = vector.load %arg7[%c0_66, %c16, %c0_67] : memref<2x96x64xf32, #tpu.memory_space<vmem>>, vector<1x4x64xf32>
    %114 = vector.shape_cast %113 : vector<1x4x64xf32> to vector<4x64xf32>
    %115 = arith.truncf %114 : vector<4x64xf32> to vector<4x64xbf16>
    %c0_68 = arith.constant 0 : index
    %c48 = arith.constant 48 : index
    %c0_69 = arith.constant 0 : index
    %116 = vector.load %arg7[%c0_68, %c48, %c0_69] : memref<2x96x64xf32, #tpu.memory_space<vmem>>, vector<1x4x64xf32>
    %117 = vector.shape_cast %116 : vector<1x4x64xf32> to vector<4x64xf32>
    %118 = arith.truncf %117 : vector<4x64xf32> to vector<4x64xbf16>
    %c0_70 = arith.constant 0 : index
    %c80 = arith.constant 80 : index
    %c0_71 = arith.constant 0 : index
    %119 = vector.load %arg7[%c0_70, %c80, %c0_71] : memref<2x96x64xf32, #tpu.memory_space<vmem>>, vector<1x4x64xf32>
    %120 = vector.shape_cast %119 : vector<1x4x64xf32> to vector<4x64xf32>
    %121 = arith.truncf %120 : vector<4x64xf32> to vector<4x64xbf16>
    %cst_72 = arith.constant dense<0.000000e+00> : vector<64x64xf32>
    %122 = tpu.matmul %118, %115, %cst_72 {dimension_numbers = #tpu.dot_dimension_numbers<[0], [0], [1], [1], [0, 1, 1, 1], [], []>} : vector<4x64xbf16>, vector<4x64xbf16>, vector<64x64xf32> -> vector<64x64xf32>
    %cst_73 = arith.constant dense<0xFF800000> : vector<64xf32>
    %123 = vector.multi_reduction <maximumf>, %122, %cst_73 [0] : vector<64x64xf32> to vector<64xf32>
    %124 = vector.shape_cast %123 : vector<64xf32> to vector<1x64xf32>
    %125 = vector.broadcast %124 : vector<1x64xf32> to vector<64x64xf32>
    %126 = arith.subf %122, %125 : vector<64x64xf32>
    %127 = math.exp %126 : vector<64x64xf32>
    %cst_74 = arith.constant dense<0.000000e+00> : vector<64xf32>
    %128 = vector.multi_reduction <add>, %127, %cst_74 [0] : vector<64x64xf32> to vector<64xf32>
    %129 = vector.shape_cast %128 : vector<64xf32> to vector<1x64xf32>
    %130 = arith.truncf %127 : vector<64x64xf32> to vector<64x64xbf16>
    %cst_75 = arith.constant dense<0.000000e+00> : vector<4x64xf32>
    %131 = tpu.matmul %121, %130, %cst_75 {dimension_numbers = #tpu.dot_dimension_numbers<[1], [0], [0], [1], [0, 0, 1, 1], [], []>} : vector<4x64xbf16>, vector<64x64xbf16>, vector<4x64xf32> -> vector<4x64xf32>
    %132 = tpu.reciprocal %129 {approx = true} : vector<1x64xf32> -> vector<1x64xf32>
    %133 = vector.broadcast %132 : vector<1x64xf32> to vector<4x64xf32>
    %134 = arith.mulf %131, %133 : vector<4x64xf32>
    %c0_76 = arith.constant 0 : index
    %c16_77 = arith.constant 16 : index
    %c0_78 = arith.constant 0 : index
    %135 = vector.load %arg8[%c0_76, %c16_77, %c0_78] : memref<2x32x64xf32, #tpu.memory_space<vmem>>, vector<1x4x64xf32>
    %136 = vector.shape_cast %135 : vector<1x4x64xf32> to vector<4x64xf32>
    %137 = vector.shape_cast %134 : vector<4x64xf32> to vector<1x4x64xf32>
    tpu.vector_store %arg8[%c0_76, %c16_77, %c0_78], %137 {strides = array<i32>} : memref<2x32x64xf32, #tpu.memory_space<vmem>>, vector<1x4x64xf32>,
    %c0_79 = arith.constant 0 : index
    %c20 = arith.constant 20 : index
    %c0_80 = arith.constant 0 : index
    %138 = vector.load %arg7[%c0_79, %c20, %c0_80] : memref<2x96x64xf32, #tpu.memory_space<vmem>>, vector<1x4x64xf32>
    %139 = vector.shape_cast %138 : vector<1x4x64xf32> to vector<4x64xf32>
    %140 = arith.truncf %139 : vector<4x64xf32> to vector<4x64xbf16>
    %c0_81 = arith.constant 0 : index
    %c52 = arith.constant 52 : index
    %c0_82 = arith.constant 0 : index
    %141 = vector.load %arg7[%c0_81, %c52, %c0_82] : memref<2x96x64xf32, #tpu.memory_space<vmem>>, vector<1x4x64xf32>
    %142 = vector.shape_cast %141 : vector<1x4x64xf32> to vector<4x64xf32>
    %143 = arith.truncf %142 : vector<4x64xf32> to vector<4x64xbf16>
    %c0_83 = arith.constant 0 : index
    %c84 = arith.constant 84 : index
    %c0_84 = arith.constant 0 : index
    %144 = vector.load %arg7[%c0_83, %c84, %c0_84] : memref<2x96x64xf32, #tpu.memory_space<vmem>>, vector<1x4x64xf32>
    %145 = vector.shape_cast %144 : vector<1x4x64xf32> to vector<4x64xf32>
    %146 = arith.truncf %145 : vector<4x64xf32> to vector<4x64xbf16>
    %cst_85 = arith.constant dense<0.000000e+00> : vector<64x64xf32>
    %147 = tpu.matmul %143, %140, %cst_85 {dimension_numbers = #tpu.dot_dimension_numbers<[0], [0], [1], [1], [0, 1, 1, 1], [], []>} : vector<4x64xbf16>, vector<4x64xbf16>, vector<64x64xf32> -> vector<64x64xf32>
    %cst_86 = arith.constant dense<0xFF800000> : vector<64xf32>
    %148 = vector.multi_reduction <maximumf>, %147, %cst_86 [0] : vector<64x64xf32> to vector<64xf32>
    %149 = vector.shape_cast %148 : vector<64xf32> to vector<1x64xf32>
    %150 = vector.broadcast %149 : vector<1x64xf32> to vector<64x64xf32>
    %151 = arith.subf %147, %150 : vector<64x64xf32>
    %152 = math.exp %151 : vector<64x64xf32>
    %cst_87 = arith.constant dense<0.000000e+00> : vector<64xf32>
    %153 = vector.multi_reduction <add>, %152, %cst_87 [0] : vector<64x64xf32> to vector<64xf32>
    %154 = vector.shape_cast %153 : vector<64xf32> to vector<1x64xf32>
    %155 = arith.truncf %152 : vector<64x64xf32> to vector<64x64xbf16>
    %cst_88 = arith.constant dense<0.000000e+00> : vector<4x64xf32>
    %156 = tpu.matmul %146, %155, %cst_88 {dimension_numbers = #tpu.dot_dimension_numbers<[1], [0], [0], [1], [0, 0, 1, 1], [], []>} : vector<4x64xbf16>, vector<64x64xbf16>, vector<4x64xf32> -> vector<4x64xf32>
    %157 = tpu.reciprocal %154 {approx = true} : vector<1x64xf32> -> vector<1x64xf32>
    %158 = vector.broadcast %157 : vector<1x64xf32> to vector<4x64xf32>
    %159 = arith.mulf %156, %158 : vector<4x64xf32>
    %c0_89 = arith.constant 0 : index
    %c20_90 = arith.constant 20 : index
    %c0_91 = arith.constant 0 : index
    %160 = vector.load %arg8[%c0_89, %c20_90, %c0_91] : memref<2x32x64xf32, #tpu.memory_space<vmem>>, vector<1x4x64xf32>
    %161 = vector.shape_cast %160 : vector<1x4x64xf32> to vector<4x64xf32>
    %162 = vector.shape_cast %159 : vector<4x64xf32> to vector<1x4x64xf32>
    tpu.vector_store %arg8[%c0_89, %c20_90, %c0_91], %162 {strides = array<i32>} : memref<2x32x64xf32, #tpu.memory_space<vmem>>, vector<1x4x64xf32>,
    %c0_92 = arith.constant 0 : index
    %c24 = arith.constant 24 : index
    %c0_93 = arith.constant 0 : index
    %163 = vector.load %arg7[%c0_92, %c24, %c0_93] : memref<2x96x64xf32, #tpu.memory_space<vmem>>, vector<1x4x64xf32>
    %164 = vector.shape_cast %163 : vector<1x4x64xf32> to vector<4x64xf32>
    %165 = arith.truncf %164 : vector<4x64xf32> to vector<4x64xbf16>
    %c0_94 = arith.constant 0 : index
    %c56 = arith.constant 56 : index
    %c0_95 = arith.constant 0 : index
    %166 = vector.load %arg7[%c0_94, %c56, %c0_95] : memref<2x96x64xf32, #tpu.memory_space<vmem>>, vector<1x4x64xf32>
    %167 = vector.shape_cast %166 : vector<1x4x64xf32> to vector<4x64xf32>
    %168 = arith.truncf %167 : vector<4x64xf32> to vector<4x64xbf16>
    %c0_96 = arith.constant 0 : index
    %c88 = arith.constant 88 : index
    %c0_97 = arith.constant 0 : index
    %169 = vector.load %arg7[%c0_96, %c88, %c0_97] : memref<2x96x64xf32, #tpu.memory_space<vmem>>, vector<1x4x64xf32>
    %170 = vector.shape_cast %169 : vector<1x4x64xf32> to vector<4x64xf32>
    %171 = arith.truncf %170 : vector<4x64xf32> to vector<4x64xbf16>
    %cst_98 = arith.constant dense<0.000000e+00> : vector<64x64xf32>
    %172 = tpu.matmul %168, %165, %cst_98 {dimension_numbers = #tpu.dot_dimension_numbers<[0], [0], [1], [1], [0, 1, 1, 1], [], []>} : vector<4x64xbf16>, vector<4x64xbf16>, vector<64x64xf32> -> vector<64x64xf32>
    %cst_99 = arith.constant dense<0xFF800000> : vector<64xf32>
    %173 = vector.multi_reduction <maximumf>, %172, %cst_99 [0] : vector<64x64xf32> to vector<64xf32>
    %174 = vector.shape_cast %173 : vector<64xf32> to vector<1x64xf32>
    %175 = vector.broadcast %174 : vector<1x64xf32> to vector<64x64xf32>
    %176 = arith.subf %172, %175 : vector<64x64xf32>
    %177 = math.exp %176 : vector<64x64xf32>
    %cst_100 = arith.constant dense<0.000000e+00> : vector<64xf32>
    %178 = vector.multi_reduction <add>, %177, %cst_100 [0] : vector<64x64xf32> to vector<64xf32>
    %179 = vector.shape_cast %178 : vector<64xf32> to vector<1x64xf32>
    %180 = arith.truncf %177 : vector<64x64xf32> to vector<64x64xbf16>
    %cst_101 = arith.constant dense<0.000000e+00> : vector<4x64xf32>
    %181 = tpu.matmul %171, %180, %cst_101 {dimension_numbers = #tpu.dot_dimension_numbers<[1], [0], [0], [1], [0, 0, 1, 1], [], []>} : vector<4x64xbf16>, vector<64x64xbf16>, vector<4x64xf32> -> vector<4x64xf32>
    %182 = tpu.reciprocal %179 {approx = true} : vector<1x64xf32> -> vector<1x64xf32>
    %183 = vector.broadcast %182 : vector<1x64xf32> to vector<4x64xf32>
    %184 = arith.mulf %181, %183 : vector<4x64xf32>
    %c0_102 = arith.constant 0 : index
    %c24_103 = arith.constant 24 : index
    %c0_104 = arith.constant 0 : index
    %185 = vector.load %arg8[%c0_102, %c24_103, %c0_104] : memref<2x32x64xf32, #tpu.memory_space<vmem>>, vector<1x4x64xf32>
    %186 = vector.shape_cast %185 : vector<1x4x64xf32> to vector<4x64xf32>
    %187 = vector.shape_cast %184 : vector<4x64xf32> to vector<1x4x64xf32>
    tpu.vector_store %arg8[%c0_102, %c24_103, %c0_104], %187 {strides = array<i32>} : memref<2x32x64xf32, #tpu.memory_space<vmem>>, vector<1x4x64xf32>,
    %c0_105 = arith.constant 0 : index
    %c28 = arith.constant 28 : index
    %c0_106 = arith.constant 0 : index
    %188 = vector.load %arg7[%c0_105, %c28, %c0_106] : memref<2x96x64xf32, #tpu.memory_space<vmem>>, vector<1x4x64xf32>
    %189 = vector.shape_cast %188 : vector<1x4x64xf32> to vector<4x64xf32>
    %190 = arith.truncf %189 : vector<4x64xf32> to vector<4x64xbf16>
    %c0_107 = arith.constant 0 : index
    %c60 = arith.constant 60 : index
    %c0_108 = arith.constant 0 : index
    %191 = vector.load %arg7[%c0_107, %c60, %c0_108] : memref<2x96x64xf32, #tpu.memory_space<vmem>>, vector<1x4x64xf32>
    %192 = vector.shape_cast %191 : vector<1x4x64xf32> to vector<4x64xf32>
    %193 = arith.truncf %192 : vector<4x64xf32> to vector<4x64xbf16>
    %c0_109 = arith.constant 0 : index
    %c92 = arith.constant 92 : index
    %c0_110 = arith.constant 0 : index
    %194 = vector.load %arg7[%c0_109, %c92, %c0_110] : memref<2x96x64xf32, #tpu.memory_space<vmem>>, vector<1x4x64xf32>
    %195 = vector.shape_cast %194 : vector<1x4x64xf32> to vector<4x64xf32>
    %196 = arith.truncf %195 : vector<4x64xf32> to vector<4x64xbf16>
    %cst_111 = arith.constant dense<0.000000e+00> : vector<64x64xf32>
    %197 = tpu.matmul %193, %190, %cst_111 {dimension_numbers = #tpu.dot_dimension_numbers<[0], [0], [1], [1], [0, 1, 1, 1], [], []>} : vector<4x64xbf16>, vector<4x64xbf16>, vector<64x64xf32> -> vector<64x64xf32>
    %cst_112 = arith.constant dense<0xFF800000> : vector<64xf32>
    %198 = vector.multi_reduction <maximumf>, %197, %cst_112 [0] : vector<64x64xf32> to vector<64xf32>
    %199 = vector.shape_cast %198 : vector<64xf32> to vector<1x64xf32>
    %200 = vector.broadcast %199 : vector<1x64xf32> to vector<64x64xf32>
    %201 = arith.subf %197, %200 : vector<64x64xf32>
    %202 = math.exp %201 : vector<64x64xf32>
    %cst_113 = arith.constant dense<0.000000e+00> : vector<64xf32>
    %203 = vector.multi_reduction <add>, %202, %cst_113 [0] : vector<64x64xf32> to vector<64xf32>
    %204 = vector.shape_cast %203 : vector<64xf32> to vector<1x64xf32>
    %205 = arith.truncf %202 : vector<64x64xf32> to vector<64x64xbf16>
    %cst_114 = arith.constant dense<0.000000e+00> : vector<4x64xf32>
    %206 = tpu.matmul %196, %205, %cst_114 {dimension_numbers = #tpu.dot_dimension_numbers<[1], [0], [0], [1], [0, 0, 1, 1], [], []>} : vector<4x64xbf16>, vector<64x64xbf16>, vector<4x64xf32> -> vector<4x64xf32>
    %207 = tpu.reciprocal %204 {approx = true} : vector<1x64xf32> -> vector<1x64xf32>
    %208 = vector.broadcast %207 : vector<1x64xf32> to vector<4x64xf32>
    %209 = arith.mulf %206, %208 : vector<4x64xf32>
    %c0_115 = arith.constant 0 : index
    %c28_116 = arith.constant 28 : index
    %c0_117 = arith.constant 0 : index
    %210 = vector.load %arg8[%c0_115, %c28_116, %c0_117] : memref<2x32x64xf32, #tpu.memory_space<vmem>>, vector<1x4x64xf32>
    %211 = vector.shape_cast %210 : vector<1x4x64xf32> to vector<4x64xf32>
    %212 = vector.shape_cast %209 : vector<4x64xf32> to vector<1x4x64xf32>
    tpu.vector_store %arg8[%c0_115, %c28_116, %c0_117], %212 {strides = array<i32>} : memref<2x32x64xf32, #tpu.memory_space<vmem>>, vector<1x4x64xf32>,
    %c0_118 = arith.constant 0 : index
    %c0_119 = arith.constant 0 : index
    %c0_120 = arith.constant 0 : index
    %213 = vector.load %arg8[%c0_118, %c0_119, %c0_120] : memref<2x32x64xf32, #tpu.memory_space<vmem>>, vector<1x32x64xf32>
    %214 = vector.shape_cast %213 : vector<1x32x64xf32> to vector<32x64xf32>
    %215 = arith.truncf %214 : vector<32x64xf32> to vector<32x64xbf16>
    %cst_121 = arith.constant dense<0.000000e+00> : vector<32x64xf32>
    %216 = tpu.matmul %2, %215, %cst_121 {dimension_numbers = #tpu.dot_dimension_numbers<[1], [0], [0], [1], [0, 0, 1, 1], [], []>} : vector<32x32xbf16>, vector<32x64xbf16>, vector<32x64xf32> -> vector<32x64xf32>
    %217 = vector.broadcast %3 : vector<32x1xf32> to vector<32x64xf32>
    %218 = arith.addf %216, %217 : vector<32x64xf32>
    %c0_122 = arith.constant 0 : index
    %c0_123 = arith.constant 0 : index
    %c0_124 = arith.constant 0 : index
    %219 = vector.load %arg6[%c0_122, %c0_123, %c0_124] : memref<2x32x64xf32, #tpu.memory_space<vmem>>, vector<1x32x64xf32>
    %220 = vector.shape_cast %219 : vector<1x32x64xf32> to vector<32x64xf32>
    %221 = vector.shape_cast %218 : vector<32x64xf32> to vector<1x32x64xf32>
    tpu.vector_store %arg6[%c0_122, %c0_123, %c0_124], %221 {strides = array<i32>} : memref<2x32x64xf32, #tpu.memory_space<vmem>>, vector<1x32x64xf32>,
    %c1 = arith.constant 1 : index
    %c0_125 = arith.constant 0 : index
    %c0_126 = arith.constant 0 : index
    %222 = vector.load %arg1[%c1, %c0_125, %c0_126] : memref<2x32x64xf32, #tpu.memory_space<vmem>>, vector<1x32x64xf32>
    %223 = vector.shape_cast %222 : vector<1x32x64xf32> to vector<32x64xf32>
    %224 = arith.truncf %223 : vector<32x64xf32> to vector<32x64xbf16>
    %cst_127 = arith.constant dense<0.000000e+00> : vector<96x64xf32>
    %225 = tpu.matmul %0, %224, %cst_127 {dimension_numbers = #tpu.dot_dimension_numbers<[1], [0], [0], [1], [0, 0, 1, 1], [], []>} : vector<96x32xbf16>, vector<32x64xbf16>, vector<96x64xf32> -> vector<96x64xf32>
    %226 = vector.broadcast %1 : vector<96x1xf32> to vector<96x64xf32>
    %227 = arith.addf %225, %226 : vector<96x64xf32>
    %c1_128 = arith.constant 1 : index
    %c0_129 = arith.constant 0 : index
    %c0_130 = arith.constant 0 : index
    %228 = vector.load %arg7[%c1_128, %c0_129, %c0_130] : memref<2x96x64xf32, #tpu.memory_space<vmem>>, vector<1x96x64xf32>
    %229 = vector.shape_cast %228 : vector<1x96x64xf32> to vector<96x64xf32>
    %230 = vector.shape_cast %227 : vector<96x64xf32> to vector<1x96x64xf32>
    tpu.vector_store %arg7[%c1_128, %c0_129, %c0_130], %230 {strides = array<i32>} : memref<2x96x64xf32, #tpu.memory_space<vmem>>, vector<1x96x64xf32>,
    %c1_131 = arith.constant 1 : index
    %c0_132 = arith.constant 0 : index
    %c0_133 = arith.constant 0 : index
    %231 = vector.load %arg7[%c1_131, %c0_132, %c0_133] : memref<2x96x64xf32, #tpu.memory_space<vmem>>, vector<1x4x64xf32>
    %232 = vector.shape_cast %231 : vector<1x4x64xf32> to vector<4x64xf32>
    %233 = arith.truncf %232 : vector<4x64xf32> to vector<4x64xbf16>
    %c1_134 = arith.constant 1 : index
    %c32_135 = arith.constant 32 : index
    %c0_136 = arith.constant 0 : index
    %234 = vector.load %arg7[%c1_134, %c32_135, %c0_136] : memref<2x96x64xf32, #tpu.memory_space<vmem>>, vector<1x4x64xf32>
    %235 = vector.shape_cast %234 : vector<1x4x64xf32> to vector<4x64xf32>
    %236 = arith.truncf %235 : vector<4x64xf32> to vector<4x64xbf16>
    %c1_137 = arith.constant 1 : index
    %c64_138 = arith.constant 64 : index
    %c0_139 = arith.constant 0 : index
    %237 = vector.load %arg7[%c1_137, %c64_138, %c0_139] : memref<2x96x64xf32, #tpu.memory_space<vmem>>, vector<1x4x64xf32>
    %238 = vector.shape_cast %237 : vector<1x4x64xf32> to vector<4x64xf32>
    %239 = arith.truncf %238 : vector<4x64xf32> to vector<4x64xbf16>
    %cst_140 = arith.constant dense<0.000000e+00> : vector<64x64xf32>
    %240 = tpu.matmul %236, %233, %cst_140 {dimension_numbers = #tpu.dot_dimension_numbers<[0], [0], [1], [1], [0, 1, 1, 1], [], []>} : vector<4x64xbf16>, vector<4x64xbf16>, vector<64x64xf32> -> vector<64x64xf32>
    %cst_141 = arith.constant dense<0xFF800000> : vector<64xf32>
    %241 = vector.multi_reduction <maximumf>, %240, %cst_141 [0] : vector<64x64xf32> to vector<64xf32>
    %242 = vector.shape_cast %241 : vector<64xf32> to vector<1x64xf32>
    %243 = vector.broadcast %242 : vector<1x64xf32> to vector<64x64xf32>
    %244 = arith.subf %240, %243 : vector<64x64xf32>
    %245 = math.exp %244 : vector<64x64xf32>
    %cst_142 = arith.constant dense<0.000000e+00> : vector<64xf32>
    %246 = vector.multi_reduction <add>, %245, %cst_142 [0] : vector<64x64xf32> to vector<64xf32>
    %247 = vector.shape_cast %246 : vector<64xf32> to vector<1x64xf32>
    %248 = arith.truncf %245 : vector<64x64xf32> to vector<64x64xbf16>
    %cst_143 = arith.constant dense<0.000000e+00> : vector<4x64xf32>
    %249 = tpu.matmul %239, %248, %cst_143 {dimension_numbers = #tpu.dot_dimension_numbers<[1], [0], [0], [1], [0, 0, 1, 1], [], []>} : vector<4x64xbf16>, vector<64x64xbf16>, vector<4x64xf32> -> vector<4x64xf32>
    %250 = tpu.reciprocal %247 {approx = true} : vector<1x64xf32> -> vector<1x64xf32>
    %251 = vector.broadcast %250 : vector<1x64xf32> to vector<4x64xf32>
    %252 = arith.mulf %249, %251 : vector<4x64xf32>
    %c1_144 = arith.constant 1 : index
    %c0_145 = arith.constant 0 : index
    %c0_146 = arith.constant 0 : index
    %253 = vector.load %arg8[%c1_144, %c0_145, %c0_146] : memref<2x32x64xf32, #tpu.memory_space<vmem>>, vector<1x4x64xf32>
    %254 = vector.shape_cast %253 : vector<1x4x64xf32> to vector<4x64xf32>
    %255 = vector.shape_cast %252 : vector<4x64xf32> to vector<1x4x64xf32>
    tpu.vector_store %arg8[%c1_144, %c0_145, %c0_146], %255 {strides = array<i32>} : memref<2x32x64xf32, #tpu.memory_space<vmem>>, vector<1x4x64xf32>,
    %c1_147 = arith.constant 1 : index
    %c4_148 = arith.constant 4 : index
    %c0_149 = arith.constant 0 : index
    %256 = vector.load %arg7[%c1_147, %c4_148, %c0_149] : memref<2x96x64xf32, #tpu.memory_space<vmem>>, vector<1x4x64xf32>
    %257 = vector.shape_cast %256 : vector<1x4x64xf32> to vector<4x64xf32>
    %258 = arith.truncf %257 : vector<4x64xf32> to vector<4x64xbf16>
    %c1_150 = arith.constant 1 : index
    %c36_151 = arith.constant 36 : index
    %c0_152 = arith.constant 0 : index
    %259 = vector.load %arg7[%c1_150, %c36_151, %c0_152] : memref<2x96x64xf32, #tpu.memory_space<vmem>>, vector<1x4x64xf32>
    %260 = vector.shape_cast %259 : vector<1x4x64xf32> to vector<4x64xf32>
    %261 = arith.truncf %260 : vector<4x64xf32> to vector<4x64xbf16>
    %c1_153 = arith.constant 1 : index
    %c68_154 = arith.constant 68 : index
    %c0_155 = arith.constant 0 : index
    %262 = vector.load %arg7[%c1_153, %c68_154, %c0_155] : memref<2x96x64xf32, #tpu.memory_space<vmem>>, vector<1x4x64xf32>
    %263 = vector.shape_cast %262 : vector<1x4x64xf32> to vector<4x64xf32>
    %264 = arith.truncf %263 : vector<4x64xf32> to vector<4x64xbf16>
    %cst_156 = arith.constant dense<0.000000e+00> : vector<64x64xf32>
    %265 = tpu.matmul %261, %258, %cst_156 {dimension_numbers = #tpu.dot_dimension_numbers<[0], [0], [1], [1], [0, 1, 1, 1], [], []>} : vector<4x64xbf16>, vector<4x64xbf16>, vector<64x64xf32> -> vector<64x64xf32>
    %cst_157 = arith.constant dense<0xFF800000> : vector<64xf32>
    %266 = vector.multi_reduction <maximumf>, %265, %cst_157 [0] : vector<64x64xf32> to vector<64xf32>
    %267 = vector.shape_cast %266 : vector<64xf32> to vector<1x64xf32>
    %268 = vector.broadcast %267 : vector<1x64xf32> to vector<64x64xf32>
    %269 = arith.subf %265, %268 : vector<64x64xf32>
    %270 = math.exp %269 : vector<64x64xf32>
    %cst_158 = arith.constant dense<0.000000e+00> : vector<64xf32>
    %271 = vector.multi_reduction <add>, %270, %cst_158 [0] : vector<64x64xf32> to vector<64xf32>
    %272 = vector.shape_cast %271 : vector<64xf32> to vector<1x64xf32>
    %273 = arith.truncf %270 : vector<64x64xf32> to vector<64x64xbf16>
    %cst_159 = arith.constant dense<0.000000e+00> : vector<4x64xf32>
    %274 = tpu.matmul %264, %273, %cst_159 {dimension_numbers = #tpu.dot_dimension_numbers<[1], [0], [0], [1], [0, 0, 1, 1], [], []>} : vector<4x64xbf16>, vector<64x64xbf16>, vector<4x64xf32> -> vector<4x64xf32>
    %275 = tpu.reciprocal %272 {approx = true} : vector<1x64xf32> -> vector<1x64xf32>
    %276 = vector.broadcast %275 : vector<1x64xf32> to vector<4x64xf32>
    %277 = arith.mulf %274, %276 : vector<4x64xf32>
    %c1_160 = arith.constant 1 : index
    %c4_161 = arith.constant 4 : index
    %c0_162 = arith.constant 0 : index
    %278 = vector.load %arg8[%c1_160, %c4_161, %c0_162] : memref<2x32x64xf32, #tpu.memory_space<vmem>>, vector<1x4x64xf32>
    %279 = vector.shape_cast %278 : vector<1x4x64xf32> to vector<4x64xf32>
    %280 = vector.shape_cast %277 : vector<4x64xf32> to vector<1x4x64xf32>
    tpu.vector_store %arg8[%c1_160, %c4_161, %c0_162], %280 {strides = array<i32>} : memref<2x32x64xf32, #tpu.memory_space<vmem>>, vector<1x4x64xf32>,
    %c1_163 = arith.constant 1 : index
    %c8_164 = arith.constant 8 : index
    %c0_165 = arith.constant 0 : index
    %281 = vector.load %arg7[%c1_163, %c8_164, %c0_165] : memref<2x96x64xf32, #tpu.memory_space<vmem>>, vector<1x4x64xf32>
    %282 = vector.shape_cast %281 : vector<1x4x64xf32> to vector<4x64xf32>
    %283 = arith.truncf %282 : vector<4x64xf32> to vector<4x64xbf16>
    %c1_166 = arith.constant 1 : index
    %c40_167 = arith.constant 40 : index
    %c0_168 = arith.constant 0 : index
    %284 = vector.load %arg7[%c1_166, %c40_167, %c0_168] : memref<2x96x64xf32, #tpu.memory_space<vmem>>, vector<1x4x64xf32>
    %285 = vector.shape_cast %284 : vector<1x4x64xf32> to vector<4x64xf32>
    %286 = arith.truncf %285 : vector<4x64xf32> to vector<4x64xbf16>
    %c1_169 = arith.constant 1 : index
    %c72_170 = arith.constant 72 : index
    %c0_171 = arith.constant 0 : index
    %287 = vector.load %arg7[%c1_169, %c72_170, %c0_171] : memref<2x96x64xf32, #tpu.memory_space<vmem>>, vector<1x4x64xf32>
    %288 = vector.shape_cast %287 : vector<1x4x64xf32> to vector<4x64xf32>
    %289 = arith.truncf %288 : vector<4x64xf32> to vector<4x64xbf16>
    %cst_172 = arith.constant dense<0.000000e+00> : vector<64x64xf32>
    %290 = tpu.matmul %286, %283, %cst_172 {dimension_numbers = #tpu.dot_dimension_numbers<[0], [0], [1], [1], [0, 1, 1, 1], [], []>} : vector<4x64xbf16>, vector<4x64xbf16>, vector<64x64xf32> -> vector<64x64xf32>
    %cst_173 = arith.constant dense<0xFF800000> : vector<64xf32>
    %291 = vector.multi_reduction <maximumf>, %290, %cst_173 [0] : vector<64x64xf32> to vector<64xf32>
    %292 = vector.shape_cast %291 : vector<64xf32> to vector<1x64xf32>
    %293 = vector.broadcast %292 : vector<1x64xf32> to vector<64x64xf32>
    %294 = arith.subf %290, %293 : vector<64x64xf32>
    %295 = math.exp %294 : vector<64x64xf32>
    %cst_174 = arith.constant dense<0.000000e+00> : vector<64xf32>
    %296 = vector.multi_reduction <add>, %295, %cst_174 [0] : vector<64x64xf32> to vector<64xf32>
    %297 = vector.shape_cast %296 : vector<64xf32> to vector<1x64xf32>
    %298 = arith.truncf %295 : vector<64x64xf32> to vector<64x64xbf16>
    %cst_175 = arith.constant dense<0.000000e+00> : vector<4x64xf32>
    %299 = tpu.matmul %289, %298, %cst_175 {dimension_numbers = #tpu.dot_dimension_numbers<[1], [0], [0], [1], [0, 0, 1, 1], [], []>} : vector<4x64xbf16>, vector<64x64xbf16>, vector<4x64xf32> -> vector<4x64xf32>
    %300 = tpu.reciprocal %297 {approx = true} : vector<1x64xf32> -> vector<1x64xf32>
    %301 = vector.broadcast %300 : vector<1x64xf32> to vector<4x64xf32>
    %302 = arith.mulf %299, %301 : vector<4x64xf32>
    %c1_176 = arith.constant 1 : index
    %c8_177 = arith.constant 8 : index
    %c0_178 = arith.constant 0 : index
    %303 = vector.load %arg8[%c1_176, %c8_177, %c0_178] : memref<2x32x64xf32, #tpu.memory_space<vmem>>, vector<1x4x64xf32>
    %304 = vector.shape_cast %303 : vector<1x4x64xf32> to vector<4x64xf32>
    %305 = vector.shape_cast %302 : vector<4x64xf32> to vector<1x4x64xf32>
    tpu.vector_store %arg8[%c1_176, %c8_177, %c0_178], %305 {strides = array<i32>} : memref<2x32x64xf32, #tpu.memory_space<vmem>>, vector<1x4x64xf32>,
    %c1_179 = arith.constant 1 : index
    %c12_180 = arith.constant 12 : index
    %c0_181 = arith.constant 0 : index
    %306 = vector.load %arg7[%c1_179, %c12_180, %c0_181] : memref<2x96x64xf32, #tpu.memory_space<vmem>>, vector<1x4x64xf32>
    %307 = vector.shape_cast %306 : vector<1x4x64xf32> to vector<4x64xf32>
    %308 = arith.truncf %307 : vector<4x64xf32> to vector<4x64xbf16>
    %c1_182 = arith.constant 1 : index
    %c44_183 = arith.constant 44 : index
    %c0_184 = arith.constant 0 : index
    %309 = vector.load %arg7[%c1_182, %c44_183, %c0_184] : memref<2x96x64xf32, #tpu.memory_space<vmem>>, vector<1x4x64xf32>
    %310 = vector.shape_cast %309 : vector<1x4x64xf32> to vector<4x64xf32>
    %311 = arith.truncf %310 : vector<4x64xf32> to vector<4x64xbf16>
    %c1_185 = arith.constant 1 : index
    %c76_186 = arith.constant 76 : index
    %c0_187 = arith.constant 0 : index
    %312 = vector.load %arg7[%c1_185, %c76_186, %c0_187] : memref<2x96x64xf32, #tpu.memory_space<vmem>>, vector<1x4x64xf32>
    %313 = vector.shape_cast %312 : vector<1x4x64xf32> to vector<4x64xf32>
    %314 = arith.truncf %313 : vector<4x64xf32> to vector<4x64xbf16>
    %cst_188 = arith.constant dense<0.000000e+00> : vector<64x64xf32>
    %315 = tpu.matmul %311, %308, %cst_188 {dimension_numbers = #tpu.dot_dimension_numbers<[0], [0], [1], [1], [0, 1, 1, 1], [], []>} : vector<4x64xbf16>, vector<4x64xbf16>, vector<64x64xf32> -> vector<64x64xf32>
    %cst_189 = arith.constant dense<0xFF800000> : vector<64xf32>
    %316 = vector.multi_reduction <maximumf>, %315, %cst_189 [0] : vector<64x64xf32> to vector<64xf32>
    %317 = vector.shape_cast %316 : vector<64xf32> to vector<1x64xf32>
    %318 = vector.broadcast %317 : vector<1x64xf32> to vector<64x64xf32>
    %319 = arith.subf %315, %318 : vector<64x64xf32>
    %320 = math.exp %319 : vector<64x64xf32>
    %cst_190 = arith.constant dense<0.000000e+00> : vector<64xf32>
    %321 = vector.multi_reduction <add>, %320, %cst_190 [0] : vector<64x64xf32> to vector<64xf32>
    %322 = vector.shape_cast %321 : vector<64xf32> to vector<1x64xf32>
    %323 = arith.truncf %320 : vector<64x64xf32> to vector<64x64xbf16>
    %cst_191 = arith.constant dense<0.000000e+00> : vector<4x64xf32>
    %324 = tpu.matmul %314, %323, %cst_191 {dimension_numbers = #tpu.dot_dimension_numbers<[1], [0], [0], [1], [0, 0, 1, 1], [], []>} : vector<4x64xbf16>, vector<64x64xbf16>, vector<4x64xf32> -> vector<4x64xf32>
    %325 = tpu.reciprocal %322 {approx = true} : vector<1x64xf32> -> vector<1x64xf32>
    %326 = vector.broadcast %325 : vector<1x64xf32> to vector<4x64xf32>
    %327 = arith.mulf %324, %326 : vector<4x64xf32>
    %c1_192 = arith.constant 1 : index
    %c12_193 = arith.constant 12 : index
    %c0_194 = arith.constant 0 : index
    %328 = vector.load %arg8[%c1_192, %c12_193, %c0_194] : memref<2x32x64xf32, #tpu.memory_space<vmem>>, vector<1x4x64xf32>
    %329 = vector.shape_cast %328 : vector<1x4x64xf32> to vector<4x64xf32>
    %330 = vector.shape_cast %327 : vector<4x64xf32> to vector<1x4x64xf32>
    tpu.vector_store %arg8[%c1_192, %c12_193, %c0_194], %330 {strides = array<i32>} : memref<2x32x64xf32, #tpu.memory_space<vmem>>, vector<1x4x64xf32>,
    %c1_195 = arith.constant 1 : index
    %c16_196 = arith.constant 16 : index
    %c0_197 = arith.constant 0 : index
    %331 = vector.load %arg7[%c1_195, %c16_196, %c0_197] : memref<2x96x64xf32, #tpu.memory_space<vmem>>, vector<1x4x64xf32>
    %332 = vector.shape_cast %331 : vector<1x4x64xf32> to vector<4x64xf32>
    %333 = arith.truncf %332 : vector<4x64xf32> to vector<4x64xbf16>
    %c1_198 = arith.constant 1 : index
    %c48_199 = arith.constant 48 : index
    %c0_200 = arith.constant 0 : index
    %334 = vector.load %arg7[%c1_198, %c48_199, %c0_200] : memref<2x96x64xf32, #tpu.memory_space<vmem>>, vector<1x4x64xf32>
    %335 = vector.shape_cast %334 : vector<1x4x64xf32> to vector<4x64xf32>
    %336 = arith.truncf %335 : vector<4x64xf32> to vector<4x64xbf16>
    %c1_201 = arith.constant 1 : index
    %c80_202 = arith.constant 80 : index
    %c0_203 = arith.constant 0 : index
    %337 = vector.load %arg7[%c1_201, %c80_202, %c0_203] : memref<2x96x64xf32, #tpu.memory_space<vmem>>, vector<1x4x64xf32>
    %338 = vector.shape_cast %337 : vector<1x4x64xf32> to vector<4x64xf32>
    %339 = arith.truncf %338 : vector<4x64xf32> to vector<4x64xbf16>
    %cst_204 = arith.constant dense<0.000000e+00> : vector<64x64xf32>
    %340 = tpu.matmul %336, %333, %cst_204 {dimension_numbers = #tpu.dot_dimension_numbers<[0], [0], [1], [1], [0, 1, 1, 1], [], []>} : vector<4x64xbf16>, vector<4x64xbf16>, vector<64x64xf32> -> vector<64x64xf32>
    %cst_205 = arith.constant dense<0xFF800000> : vector<64xf32>
    %341 = vector.multi_reduction <maximumf>, %340, %cst_205 [0] : vector<64x64xf32> to vector<64xf32>
    %342 = vector.shape_cast %341 : vector<64xf32> to vector<1x64xf32>
    %343 = vector.broadcast %342 : vector<1x64xf32> to vector<64x64xf32>
    %344 = arith.subf %340, %343 : vector<64x64xf32>
    %345 = math.exp %344 : vector<64x64xf32>
    %cst_206 = arith.constant dense<0.000000e+00> : vector<64xf32>
    %346 = vector.multi_reduction <add>, %345, %cst_206 [0] : vector<64x64xf32> to vector<64xf32>
    %347 = vector.shape_cast %346 : vector<64xf32> to vector<1x64xf32>
    %348 = arith.truncf %345 : vector<64x64xf32> to vector<64x64xbf16>
    %cst_207 = arith.constant dense<0.000000e+00> : vector<4x64xf32>
    %349 = tpu.matmul %339, %348, %cst_207 {dimension_numbers = #tpu.dot_dimension_numbers<[1], [0], [0], [1], [0, 0, 1, 1], [], []>} : vector<4x64xbf16>, vector<64x64xbf16>, vector<4x64xf32> -> vector<4x64xf32>
    %350 = tpu.reciprocal %347 {approx = true} : vector<1x64xf32> -> vector<1x64xf32>
    %351 = vector.broadcast %350 : vector<1x64xf32> to vector<4x64xf32>
    %352 = arith.mulf %349, %351 : vector<4x64xf32>
    %c1_208 = arith.constant 1 : index
    %c16_209 = arith.constant 16 : index
    %c0_210 = arith.constant 0 : index
    %353 = vector.load %arg8[%c1_208, %c16_209, %c0_210] : memref<2x32x64xf32, #tpu.memory_space<vmem>>, vector<1x4x64xf32>
    %354 = vector.shape_cast %353 : vector<1x4x64xf32> to vector<4x64xf32>
    %355 = vector.shape_cast %352 : vector<4x64xf32> to vector<1x4x64xf32>
    tpu.vector_store %arg8[%c1_208, %c16_209, %c0_210], %355 {strides = array<i32>} : memref<2x32x64xf32, #tpu.memory_space<vmem>>, vector<1x4x64xf32>,
    %c1_211 = arith.constant 1 : index
    %c20_212 = arith.constant 20 : index
    %c0_213 = arith.constant 0 : index
    %356 = vector.load %arg7[%c1_211, %c20_212, %c0_213] : memref<2x96x64xf32, #tpu.memory_space<vmem>>, vector<1x4x64xf32>
    %357 = vector.shape_cast %356 : vector<1x4x64xf32> to vector<4x64xf32>
    %358 = arith.truncf %357 : vector<4x64xf32> to vector<4x64xbf16>
    %c1_214 = arith.constant 1 : index
    %c52_215 = arith.constant 52 : index
    %c0_216 = arith.constant 0 : index
    %359 = vector.load %arg7[%c1_214, %c52_215, %c0_216] : memref<2x96x64xf32, #tpu.memory_space<vmem>>, vector<1x4x64xf32>
    %360 = vector.shape_cast %359 : vector<1x4x64xf32> to vector<4x64xf32>
    %361 = arith.truncf %360 : vector<4x64xf32> to vector<4x64xbf16>
    %c1_217 = arith.constant 1 : index
    %c84_218 = arith.constant 84 : index
    %c0_219 = arith.constant 0 : index
    %362 = vector.load %arg7[%c1_217, %c84_218, %c0_219] : memref<2x96x64xf32, #tpu.memory_space<vmem>>, vector<1x4x64xf32>
    %363 = vector.shape_cast %362 : vector<1x4x64xf32> to vector<4x64xf32>
    %364 = arith.truncf %363 : vector<4x64xf32> to vector<4x64xbf16>
    %cst_220 = arith.constant dense<0.000000e+00> : vector<64x64xf32>
    %365 = tpu.matmul %361, %358, %cst_220 {dimension_numbers = #tpu.dot_dimension_numbers<[0], [0], [1], [1], [0, 1, 1, 1], [], []>} : vector<4x64xbf16>, vector<4x64xbf16>, vector<64x64xf32> -> vector<64x64xf32>
    %cst_221 = arith.constant dense<0xFF800000> : vector<64xf32>
    %366 = vector.multi_reduction <maximumf>, %365, %cst_221 [0] : vector<64x64xf32> to vector<64xf32>
    %367 = vector.shape_cast %366 : vector<64xf32> to vector<1x64xf32>
    %368 = vector.broadcast %367 : vector<1x64xf32> to vector<64x64xf32>
    %369 = arith.subf %365, %368 : vector<64x64xf32>
    %370 = math.exp %369 : vector<64x64xf32>
    %cst_222 = arith.constant dense<0.000000e+00> : vector<64xf32>
    %371 = vector.multi_reduction <add>, %370, %cst_222 [0] : vector<64x64xf32> to vector<64xf32>
    %372 = vector.shape_cast %371 : vector<64xf32> to vector<1x64xf32>
    %373 = arith.truncf %370 : vector<64x64xf32> to vector<64x64xbf16>
    %cst_223 = arith.constant dense<0.000000e+00> : vector<4x64xf32>
    %374 = tpu.matmul %364, %373, %cst_223 {dimension_numbers = #tpu.dot_dimension_numbers<[1], [0], [0], [1], [0, 0, 1, 1], [], []>} : vector<4x64xbf16>, vector<64x64xbf16>, vector<4x64xf32> -> vector<4x64xf32>
    %375 = tpu.reciprocal %372 {approx = true} : vector<1x64xf32> -> vector<1x64xf32>
    %376 = vector.broadcast %375 : vector<1x64xf32> to vector<4x64xf32>
    %377 = arith.mulf %374, %376 : vector<4x64xf32>
    %c1_224 = arith.constant 1 : index
    %c20_225 = arith.constant 20 : index
    %c0_226 = arith.constant 0 : index
    %378 = vector.load %arg8[%c1_224, %c20_225, %c0_226] : memref<2x32x64xf32, #tpu.memory_space<vmem>>, vector<1x4x64xf32>
    %379 = vector.shape_cast %378 : vector<1x4x64xf32> to vector<4x64xf32>
    %380 = vector.shape_cast %377 : vector<4x64xf32> to vector<1x4x64xf32>
    tpu.vector_store %arg8[%c1_224, %c20_225, %c0_226], %380 {strides = array<i32>} : memref<2x32x64xf32, #tpu.memory_space<vmem>>, vector<1x4x64xf32>,
    %c1_227 = arith.constant 1 : index
    %c24_228 = arith.constant 24 : index
    %c0_229 = arith.constant 0 : index
    %381 = vector.load %arg7[%c1_227, %c24_228, %c0_229] : memref<2x96x64xf32, #tpu.memory_space<vmem>>, vector<1x4x64xf32>
    %382 = vector.shape_cast %381 : vector<1x4x64xf32> to vector<4x64xf32>
    %383 = arith.truncf %382 : vector<4x64xf32> to vector<4x64xbf16>
    %c1_230 = arith.constant 1 : index
    %c56_231 = arith.constant 56 : index
    %c0_232 = arith.constant 0 : index
    %384 = vector.load %arg7[%c1_230, %c56_231, %c0_232] : memref<2x96x64xf32, #tpu.memory_space<vmem>>, vector<1x4x64xf32>
    %385 = vector.shape_cast %384 : vector<1x4x64xf32> to vector<4x64xf32>
    %386 = arith.truncf %385 : vector<4x64xf32> to vector<4x64xbf16>
    %c1_233 = arith.constant 1 : index
    %c88_234 = arith.constant 88 : index
    %c0_235 = arith.constant 0 : index
    %387 = vector.load %arg7[%c1_233, %c88_234, %c0_235] : memref<2x96x64xf32, #tpu.memory_space<vmem>>, vector<1x4x64xf32>
    %388 = vector.shape_cast %387 : vector<1x4x64xf32> to vector<4x64xf32>
    %389 = arith.truncf %388 : vector<4x64xf32> to vector<4x64xbf16>
    %cst_236 = arith.constant dense<0.000000e+00> : vector<64x64xf32>
    %390 = tpu.matmul %386, %383, %cst_236 {dimension_numbers = #tpu.dot_dimension_numbers<[0], [0], [1], [1], [0, 1, 1, 1], [], []>} : vector<4x64xbf16>, vector<4x64xbf16>, vector<64x64xf32> -> vector<64x64xf32>
    %cst_237 = arith.constant dense<0xFF800000> : vector<64xf32>
    %391 = vector.multi_reduction <maximumf>, %390, %cst_237 [0] : vector<64x64xf32> to vector<64xf32>
    %392 = vector.shape_cast %391 : vector<64xf32> to vector<1x64xf32>
    %393 = vector.broadcast %392 : vector<1x64xf32> to vector<64x64xf32>
    %394 = arith.subf %390, %393 : vector<64x64xf32>
    %395 = math.exp %394 : vector<64x64xf32>
    %cst_238 = arith.constant dense<0.000000e+00> : vector<64xf32>
    %396 = vector.multi_reduction <add>, %395, %cst_238 [0] : vector<64x64xf32> to vector<64xf32>
    %397 = vector.shape_cast %396 : vector<64xf32> to vector<1x64xf32>
    %398 = arith.truncf %395 : vector<64x64xf32> to vector<64x64xbf16>
    %cst_239 = arith.constant dense<0.000000e+00> : vector<4x64xf32>
    %399 = tpu.matmul %389, %398, %cst_239 {dimension_numbers = #tpu.dot_dimension_numbers<[1], [0], [0], [1], [0, 0, 1, 1], [], []>} : vector<4x64xbf16>, vector<64x64xbf16>, vector<4x64xf32> -> vector<4x64xf32>
    %400 = tpu.reciprocal %397 {approx = true} : vector<1x64xf32> -> vector<1x64xf32>
    %401 = vector.broadcast %400 : vector<1x64xf32> to vector<4x64xf32>
    %402 = arith.mulf %399, %401 : vector<4x64xf32>
    %c1_240 = arith.constant 1 : index
    %c24_241 = arith.constant 24 : index
    %c0_242 = arith.constant 0 : index
    %403 = vector.load %arg8[%c1_240, %c24_241, %c0_242] : memref<2x32x64xf32, #tpu.memory_space<vmem>>, vector<1x4x64xf32>
    %404 = vector.shape_cast %403 : vector<1x4x64xf32> to vector<4x64xf32>
    %405 = vector.shape_cast %402 : vector<4x64xf32> to vector<1x4x64xf32>
    tpu.vector_store %arg8[%c1_240, %c24_241, %c0_242], %405 {strides = array<i32>} : memref<2x32x64xf32, #tpu.memory_space<vmem>>, vector<1x4x64xf32>,
    %c1_243 = arith.constant 1 : index
    %c28_244 = arith.constant 28 : index
    %c0_245 = arith.constant 0 : index
    %406 = vector.load %arg7[%c1_243, %c28_244, %c0_245] : memref<2x96x64xf32, #tpu.memory_space<vmem>>, vector<1x4x64xf32>
    %407 = vector.shape_cast %406 : vector<1x4x64xf32> to vector<4x64xf32>
    %408 = arith.truncf %407 : vector<4x64xf32> to vector<4x64xbf16>
    %c1_246 = arith.constant 1 : index
    %c60_247 = arith.constant 60 : index
    %c0_248 = arith.constant 0 : index
    %409 = vector.load %arg7[%c1_246, %c60_247, %c0_248] : memref<2x96x64xf32, #tpu.memory_space<vmem>>, vector<1x4x64xf32>
    %410 = vector.shape_cast %409 : vector<1x4x64xf32> to vector<4x64xf32>
    %411 = arith.truncf %410 : vector<4x64xf32> to vector<4x64xbf16>
    %c1_249 = arith.constant 1 : index
    %c92_250 = arith.constant 92 : index
    %c0_251 = arith.constant 0 : index
    %412 = vector.load %arg7[%c1_249, %c92_250, %c0_251] : memref<2x96x64xf32, #tpu.memory_space<vmem>>, vector<1x4x64xf32>
    %413 = vector.shape_cast %412 : vector<1x4x64xf32> to vector<4x64xf32>
    %414 = arith.truncf %413 : vector<4x64xf32> to vector<4x64xbf16>
    %cst_252 = arith.constant dense<0.000000e+00> : vector<64x64xf32>
    %415 = tpu.matmul %411, %408, %cst_252 {dimension_numbers = #tpu.dot_dimension_numbers<[0], [0], [1], [1], [0, 1, 1, 1], [], []>} : vector<4x64xbf16>, vector<4x64xbf16>, vector<64x64xf32> -> vector<64x64xf32>
    %cst_253 = arith.constant dense<0xFF800000> : vector<64xf32>
    %416 = vector.multi_reduction <maximumf>, %415, %cst_253 [0] : vector<64x64xf32> to vector<64xf32>
    %417 = vector.shape_cast %416 : vector<64xf32> to vector<1x64xf32>
    %418 = vector.broadcast %417 : vector<1x64xf32> to vector<64x64xf32>
    %419 = arith.subf %415, %418 : vector<64x64xf32>
    %420 = math.exp %419 : vector<64x64xf32>
    %cst_254 = arith.constant dense<0.000000e+00> : vector<64xf32>
    %421 = vector.multi_reduction <add>, %420, %cst_254 [0] : vector<64x64xf32> to vector<64xf32>
    %422 = vector.shape_cast %421 : vector<64xf32> to vector<1x64xf32>
    %423 = arith.truncf %420 : vector<64x64xf32> to vector<64x64xbf16>
    %cst_255 = arith.constant dense<0.000000e+00> : vector<4x64xf32>
    %424 = tpu.matmul %414, %423, %cst_255 {dimension_numbers = #tpu.dot_dimension_numbers<[1], [0], [0], [1], [0, 0, 1, 1], [], []>} : vector<4x64xbf16>, vector<64x64xbf16>, vector<4x64xf32> -> vector<4x64xf32>
    %425 = tpu.reciprocal %422 {approx = true} : vector<1x64xf32> -> vector<1x64xf32>
    %426 = vector.broadcast %425 : vector<1x64xf32> to vector<4x64xf32>
    %427 = arith.mulf %424, %426 : vector<4x64xf32>
    %c1_256 = arith.constant 1 : index
    %c28_257 = arith.constant 28 : index
    %c0_258 = arith.constant 0 : index
    %428 = vector.load %arg8[%c1_256, %c28_257, %c0_258] : memref<2x32x64xf32, #tpu.memory_space<vmem>>, vector<1x4x64xf32>
    %429 = vector.shape_cast %428 : vector<1x4x64xf32> to vector<4x64xf32>
    %430 = vector.shape_cast %427 : vector<4x64xf32> to vector<1x4x64xf32>
    tpu.vector_store %arg8[%c1_256, %c28_257, %c0_258], %430 {strides = array<i32>} : memref<2x32x64xf32, #tpu.memory_space<vmem>>, vector<1x4x64xf32>,
    %c1_259 = arith.constant 1 : index
    %c0_260 = arith.constant 0 : index
    %c0_261 = arith.constant 0 : index
    %431 = vector.load %arg8[%c1_259, %c0_260, %c0_261] : memref<2x32x64xf32, #tpu.memory_space<vmem>>, vector<1x32x64xf32>
    %432 = vector.shape_cast %431 : vector<1x32x64xf32> to vector<32x64xf32>
    %433 = arith.truncf %432 : vector<32x64xf32> to vector<32x64xbf16>
    %cst_262 = arith.constant dense<0.000000e+00> : vector<32x64xf32>
    %434 = tpu.matmul %2, %433, %cst_262 {dimension_numbers = #tpu.dot_dimension_numbers<[1], [0], [0], [1], [0, 0, 1, 1], [], []>} : vector<32x32xbf16>, vector<32x64xbf16>, vector<32x64xf32> -> vector<32x64xf32>
    %435 = vector.broadcast %3 : vector<32x1xf32> to vector<32x64xf32>
    %436 = arith.addf %434, %435 : vector<32x64xf32>
    %c1_263 = arith.constant 1 : index
    %c0_264 = arith.constant 0 : index
    %c0_265 = arith.constant 0 : index
    %437 = vector.load %arg6[%c1_263, %c0_264, %c0_265] : memref<2x32x64xf32, #tpu.memory_space<vmem>>, vector<1x32x64xf32>
    %438 = vector.shape_cast %437 : vector<1x32x64xf32> to vector<32x64xf32>
    %439 = vector.shape_cast %436 : vector<32x64xf32> to vector<1x32x64xf32>
    tpu.vector_store %arg6[%c1_263, %c0_264, %c0_265], %439 {strides = array<i32>} : memref<2x32x64xf32, #tpu.memory_space<vmem>>, vector<1x32x64xf32>,
    return
  }
  func.func @transform_0(%arg0: i32) -> (i32, i32, i32) {
    %c0_i32 = arith.constant 0 : i32
    %c0_i32_0 = arith.constant 0 : i32
    %c0_i32_1 = arith.constant 0 : i32
    %c0_i32_2 = arith.constant 0 : i32
    return %c0_i32, %c0_i32_0, %c0_i32_1 : i32, i32, i32
  }
  func.func @transform_1(%arg0: i32) -> (i32, i32) {
    %c0_i32 = arith.constant 0 : i32
    %c0_i32_0 = arith.constant 0 : i32
    %c0_i32_1 = arith.constant 0 : i32
    return %c0_i32, %c0_i32_0 : i32, i32
  }
  func.func @transform_2(%arg0: i32) -> (i32, i32) {
    %c0_i32 = arith.constant 0 : i32
    %c0_i32_0 = arith.constant 0 : i32
    %c0_i32_1 = arith.constant 0 : i32
    return %c0_i32, %c0_i32_0 : i32, i32
  }
  func.func @transform_3(%arg0: i32) -> (i32, i32) {
    %c0_i32 = arith.constant 0 : i32
    %c0_i32_0 = arith.constant 0 : i32
    %c0_i32_1 = arith.constant 0 : i32
    return %c0_i32, %c0_i32_0 : i32, i32
  }
  func.func @transform_4(%arg0: i32) -> (i32, i32) {
    %c0_i32 = arith.constant 0 : i32
    %c0_i32_0 = arith.constant 0 : i32
    %c0_i32_1 = arith.constant 0 : i32
    return %c0_i32, %c0_i32_0 : i32, i32
  }
  func.func @transform_5(%arg0: i32) -> (i32, i32, i32) {
    %c0_i32 = arith.constant 0 : i32
    %c0_i32_0 = arith.constant 0 : i32
    %c0_i32_1 = arith.constant 0 : i32
    %c0_i32_2 = arith.constant 0 : i32
    return %c0_i32, %c0_i32_0, %c0_i32_1 : i32, i32, i32
  }
}

</mosaic_0001>

<llo_original>
// kernel: multi_head_self_attention.1
$region0: #{multi_head_self_attention.1}
  #allocation0 [shape = 'u32[]', space=smem, size = 0x4, offset = 0x4, fixed_abs, tag = 'smem constant byte address 0x4 - core index']
  #allocation1 [shape = 'u32[72,128]{1,0:T(1,128)}', space=vmem, size = 0x9000, scoped, tag = 'internal scratch']
  #allocation2 [shape = 'f32[2,96,64]{2,1,0:T(8,128)}', space=vmem, size = 0x18000, scoped, tag = 'scratch operand']
  #allocation3 [shape = 'f32[2,32,64]{2,1,0:T(8,128)}', space=vmem, size = 0x8000, scoped, tag = 'scratch operand']
  %s0 = inlined_call_operand.vmem [shape: f32[2,32,64], index: 0, kind: input, shape index: {}]
  %s1 = inlined_call_operand.vmem [shape: bf16[96,32], index: 1, kind: input, shape index: {}]
  %s2 = inlined_call_operand.vmem [shape: f32[96,1], index: 2, kind: input, shape index: {}]
  %s3 = inlined_call_operand.vmem [shape: bf16[32,32], index: 3, kind: input, shape index: {}]
  %s4 = inlined_call_operand.vmem [shape: f32[32,1], index: 4, kind: input, shape index: {}]
  %s5 = inlined_call_operand.vmem [shape: f32[2,32,64], index: 5, kind: output, shape index: {}]
  %s6 = sld [smem:[#allocation0]]
  $region30: #{multi_head_self_attention.1} parent=0
    _
  %s8 = ssub.s32 1, %s6
  %s9 = scalar_select 0, %s8, %s6
  // Predicated region
  $region2: #{multi_head_self_attention.1} parent=0 // pred_check
    _
  $region3: #{multi_head_self_attention.1} parent=0 // pred_check_branch
    %11 = sbr.rel (0) target = $region5
  $region4: #{multi_head_self_attention.1} parent=0 // pred_region
    _
  $region5: #{multi_head_self_attention.1} parent=0 // pred_fallthru
    _
  // Predicated region
  $region6: #{multi_head_self_attention.1} parent=0 // pred_check
    _
  $region7: #{multi_head_self_attention.1} parent=0 // pred_check_branch
    %13 = sbr.rel (0) target = $region9
  $region8: #{multi_head_self_attention.1} parent=0 // pred_region
    _
  $region9: #{multi_head_self_attention.1} parent=0 // pred_fallthru
    _
  // Predicated region
  $region10: #{multi_head_self_attention.1} parent=0 // pred_check
    _
  $region11: #{multi_head_self_attention.1} parent=0 // pred_check_branch
    %15 = sbr.rel (0) target = $region13
  $region12: #{multi_head_self_attention.1} parent=0 // pred_region
    _
  $region13: #{multi_head_self_attention.1} parent=0 // pred_fallthru
    _
  // Predicated region
  $region14: #{multi_head_self_attention.1} parent=0 // pred_check
    _
  $region15: #{multi_head_self_attention.1} parent=0 // pred_check_branch
    %17 = sbr.rel (0) target = $region17
  $region16: #{multi_head_self_attention.1} parent=0 // pred_region
    _
  $region17: #{multi_head_self_attention.1} parent=0 // pred_fallthru
    _
  // Predicated region
  $region18: #{multi_head_self_attention.1} parent=0 // pred_check
    _
  $region19: #{multi_head_self_attention.1} parent=0 // pred_check_branch
    %19 = sbr.rel (0) target = $region21
  $region20: #{multi_head_self_attention.1} parent=0 // pred_region
    _
  $region21: #{multi_head_self_attention.1} parent=0 // pred_fallthru
    _
  %v21 = vld [vmem:[%s1] sm:$0xf]
  %v22 = vld [vmem:[%s1 + $0x4] sm:$0xf]
  %v23 = vld [vmem:[%s1 + $0x8] sm:$0xf]
  %v24 = vld [vmem:[%s1 + $0xc] sm:$0xf]
  %v25 = vld [vmem:[%s1 + $0x10] sm:$0xf]
  %v26 = vld [vmem:[%s1 + $0x14] sm:$0xf]
  %v27 = vld [vmem:[%s1 + $0x18] sm:$0xf]
  %v28 = vld [vmem:[%s1 + $0x1c] sm:$0xf]
  %v29 = vld [vmem:[%s1 + $0x20] sm:$0xf]
  %v30 = vld [vmem:[%s1 + $0x24] sm:$0xf]
  %v31 = vld [vmem:[%s1 + $0x28] sm:$0xf]
  %v32 = vld [vmem:[%s1 + $0x2c] sm:$0xf]
  %v33 = vld [vmem:[%s2] sm:$0xff]
  %v34 = vld [vmem:[%s2 + $0x8] sm:$0xff]
  %v35 = vld [vmem:[%s2 + $0x10] sm:$0xff]
  %v36 = vld [vmem:[%s2 + $0x18] sm:$0xff]
  %v37 = vld [vmem:[%s2 + $0x20] sm:$0xff]
  %v38 = vld [vmem:[%s2 + $0x28] sm:$0xff]
  %v39 = vld [vmem:[%s2 + $0x30] sm:$0xff]
  %v40 = vld [vmem:[%s2 + $0x38] sm:$0xff]
  %v41 = vld [vmem:[%s2 + $0x40] sm:$0xff]
  %v42 = vld [vmem:[%s2 + $0x48] sm:$0xff]
  %v43 = vld [vmem:[%s2 + $0x50] sm:$0xff]
  %v44 = vld [vmem:[%s2 + $0x58] sm:$0xff]
  %v45 = vld [vmem:[%s3] sm:$0xf]
  %v46 = vld [vmem:[%s3 + $0x4] sm:$0xf]
  %v47 = vld [vmem:[%s3 + $0x8] sm:$0xf]
  %v48 = vld [vmem:[%s3 + $0xc] sm:$0xf]
  %v49 = vld [vmem:[%s4] sm:$0xff]
  %v50 = vld [vmem:[%s4 + $0x8] sm:$0xff]
  %v51 = vld [vmem:[%s4 + $0x10] sm:$0xff]
  %v52 = vld [vmem:[%s4 + $0x18] sm:$0xff]
  %v53 = vld [vmem:[%s0] sm:$0xff]
  %v54 = vld [vmem:[%s0 + $0x8] sm:$0xff]
  %v55 = vld [vmem:[%s0 + $0x10] sm:$0xff]
  %v56 = vld [vmem:[%s0 + $0x18] sm:$0xff]
  %v57 = vpack.c.bf16 %v54, %v53
  %v58 = vpack.c.bf16 %v56, %v55
  %60 = vset.pattern.permute.xlu0 0
  %61 = vperm.xlu0 %60, %v33
  %v62 = vpop.permute.xlu0 %61
  %65 = vset.pattern.permute.xlu0 0
  %66 = vperm.xlu0 %65, %v34
  %v67 = vpop.permute.xlu0 %66
  %70 = vset.pattern.permute.xlu0 0
  %71 = vperm.xlu0 %70, %v35
  %v72 = vpop.permute.xlu0 %71
  %75 = vset.pattern.permute.xlu0 0
  %76 = vperm.xlu0 %75, %v36
  %v77 = vpop.permute.xlu0 %76
  %80 = vset.pattern.permute.xlu0 0
  %81 = vperm.xlu0 %80, %v37
  %v82 = vpop.permute.xlu0 %81
  %85 = vset.pattern.permute.xlu0 0
  %86 = vperm.xlu0 %85, %v38
  %v87 = vpop.permute.xlu0 %86
  %90 = vset.pattern.permute.xlu0 0
  %91 = vperm.xlu0 %90, %v39
  %v92 = vpop.permute.xlu0 %91
  %95 = vset.pattern.permute.xlu0 0
  %96 = vperm.xlu0 %95, %v40
  %v97 = vpop.permute.xlu0 %96
  %100 = vset.pattern.permute.xlu0 0
  %101 = vperm.xlu0 %100, %v41
  %v102 = vpop.permute.xlu0 %101
  %105 = vset.pattern.permute.xlu0 0
  %106 = vperm.xlu0 %105, %v42
  %v107 = vpop.permute.xlu0 %106
  %110 = vset.pattern.permute.xlu0 0
  %111 = vperm.xlu0 %110, %v43
  %v112 = vpop.permute.xlu0 %111
  %115 = vset.pattern.permute.xlu0 0
  %116 = vperm.xlu0 %115, %v44
  %v117 = vpop.permute.xlu0 %116
  %v131 = vunpack.c.l.b16 %v21
  %v132 = vunpack.c.l.b16 %v22
  %v133 = vunpack.c.l.b16 %v23
  %v134 = vunpack.c.l.b16 %v24
  %v135 = vunpack.c.l.b16 %v25
  %v136 = vunpack.c.l.b16 %v26
  %v137 = vunpack.c.l.b16 %v27
  %v138 = vunpack.c.l.b16 %v28
  %v139 = vunpack.c.l.b16 %v29
  %v140 = vunpack.c.l.b16 %v30
  %v141 = vunpack.c.l.b16 %v31
  %v142 = vunpack.c.l.b16 %v32
  %v143 = vpack.c.b16 %v132, %v131
  %v144 = vpack.c.b16 %v134, %v133
  %v145 = vpack.c.b16 %v136, %v135
  %v146 = vpack.c.b16 %v138, %v137
  %v147 = vpack.c.b16 %v140, %v139
  %v148 = vpack.c.b16 %v142, %v141
  %vm149 = vcmask 261120
  %v151 = vsel %vm149, %v143, 0
  %v154 = vsel %vm149, %v144, 0
  %v157 = vsel %vm149, %v145, 0
  %v160 = vsel %vm149, %v146, 0
  %v163 = vsel %vm149, %v147, 0
  %v166 = vsel %vm149, %v148, 0
  %168 = vmatpush.bf16.msra.mxu0 0
  %169 = vmatpush.bf16.msra.mxu0 0
  %170 = vmatpush.bf16.msra.mxu0 0
  %171 = vmatpush.bf16.msra.mxu0 0
  %172 = vmatpush.bf16.msra.mxu0 0
  %173 = vmatpush.bf16.msra.mxu0 0
  %174 = vmatpush.bf16.msra.mxu0 %v58
  %175 = vmatpush.bf16.msra.mxu0 %v57
  %176 = vmatmul.bf16.gmra.mxu0 %v151
  %v177 = vpop.f32.mrf.mxu0
  %v178 = vadd.f32 %v62, %v177
  %v179 = vpop.f32.mrf.mxu0
  %v180 = vadd.f32 %v67, %v179
  %181 = vmatmul.bf16.gmra.mxu0 %v154
  %v182 = vpop.f32.mrf.mxu0
  %v183 = vadd.f32 %v72, %v182
  %v184 = vpop.f32.mrf.mxu0
  %v185 = vadd.f32 %v77, %v184
  %186 = vmatmul.bf16.gmra.mxu0 %v157
  %v187 = vpop.f32.mrf.mxu0
  %v188 = vadd.f32 %v82, %v187
  %v189 = vpop.f32.mrf.mxu0
  %v190 = vadd.f32 %v87, %v189
  %191 = vmatmul.bf16.gmra.mxu0 %v160
  %v192 = vpop.f32.mrf.mxu0
  %v193 = vadd.f32 %v92, %v192
  %v194 = vpop.f32.mrf.mxu0
  %v195 = vadd.f32 %v97, %v194
  %196 = vmatmul.bf16.gmra.mxu0 %v163
  %v197 = vpop.f32.mrf.mxu0
  %v198 = vadd.f32 %v102, %v197
  %v199 = vpop.f32.mrf.mxu0
  %v200 = vadd.f32 %v107, %v199
  %201 = vmatmul.bf16.gmra.mxu0 %v166
  %v202 = vpop.f32.mrf.mxu0
  %v203 = vadd.f32 %v112, %v202
  %v204 = vpop.f32.mrf.mxu0
  %v205 = vadd.f32 %v117, %v204
  %206 = vdwg.mxu0
  %vm207 = vcmask 523264
  %208 = vst.msk [vmem:[#allocation2] sm:$0xff] %vm207, %v178
  %209 = vst.msk [vmem:[#allocation2 + $0x8] sm:$0xff] %vm207, %v180
  %210 = vst.msk [vmem:[#allocation2 + $0x10] sm:$0xff] %vm207, %v183
  %211 = vst.msk [vmem:[#allocation2 + $0x18] sm:$0xff] %vm207, %v185
  %212 = vst.msk [vmem:[#allocation2 + $0x20] sm:$0xff] %vm207, %v188
  %213 = vst.msk [vmem:[#allocation2 + $0x28] sm:$0xff] %vm207, %v190
  %214 = vst.msk [vmem:[#allocation2 + $0x30] sm:$0xff] %vm207, %v193
  %215 = vst.msk [vmem:[#allocation2 + $0x38] sm:$0xff] %vm207, %v195
  %216 = vst.msk [vmem:[#allocation2 + $0x40] sm:$0xff] %vm207, %v198
  %217 = vst.msk [vmem:[#allocation2 + $0x48] sm:$0xff] %vm207, %v200
  %218 = vst.msk [vmem:[#allocation2 + $0x50] sm:$0xff] %vm207, %v203
  %219 = vst.msk [vmem:[#allocation2 + $0x58] sm:$0xff] %vm207, %v205
  %v220 = vld [vmem:[#allocation2] sm:$0xf]
  %v221 = vpack.c.bf16 %v220, %v220
  %v222 = vld [vmem:[#allocation2 + $0x20] sm:$0xf]
  %v223 = vpack.c.bf16 %v222, %v222
  %v224 = vld [vmem:[#allocation2 + $0x40] sm:$0xf]
  %v225 = vpack.c.bf16 %v224, %v224
  %226 = vxpose.xlu0.c.b16.start [1/8] %v223, 128
  %227 = vxpose.xlu0.c.b16.cont [2/8] 0, 128
  %228 = vxpose.xlu0.c.b16.cont [3/8] 0, 128
  %229 = vxpose.xlu0.c.b16.cont [4/8] 0, 128
  %230 = vxpose.xlu0.c.b16.cont [5/8] 0, 128
  %231 = vxpose.xlu0.c.b16.cont [6/8] 0, 128
  %232 = vxpose.xlu0.c.b16.cont [7/8] 0, 128
  %233 = vxpose.xlu0.c.b16.end [8/8] 0, 128
  %v234 = vpop.trf.xlu0
  %v235 = vpop.trf.xlu0
  %v236 = vpop.trf.xlu0
  %v237 = vpop.trf.xlu0
  %v238 = vpop.trf.xlu0
  %v239 = vpop.trf.xlu0
  %v240 = vpop.trf.xlu0
  %v241 = vpop.trf.xlu0
  %vm242 = vcmask 31744
  %v244 = vsel %vm242, %v234, 0
  %v247 = vsel %vm242, %v235, 0
  %v250 = vsel %vm242, %v236, 0
  %v253 = vsel %vm242, %v237, 0
  %vm255 = vcmask 1041408
  %v257 = vsel %vm255, %v221, 0
  %259 = vmatpush.bf16.msra.mxu0 0
  %260 = vmatpush.bf16.msra.mxu0 0
  %261 = vmatpush.bf16.msra.mxu0 0
  %262 = vmatpush.bf16.msra.mxu0 0
  %263 = vmatpush.bf16.msra.mxu0 0
  %264 = vmatpush.bf16.msra.mxu0 0
  %265 = vmatpush.bf16.msra.mxu0 0
  %266 = vmatpush.bf16.msra.mxu0 %v257
  %267 = vmatmul.bf16.gmra.mxu0 %v244
  %v268 = vpop.f32.mrf.mxu0
  %v269 = vadd.f32 0.0, %v268
  %v270 = vpop.f32.mrf.mxu0
  %v271 = vadd.f32 0.0, %v270
  %272 = vmatmul.bf16.gmra.mxu0 %v247
  %v273 = vpop.f32.mrf.mxu0
  %v274 = vadd.f32 0.0, %v273
  %v275 = vpop.f32.mrf.mxu0
  %v276 = vadd.f32 0.0, %v275
  %277 = vmatmul.bf16.gmra.mxu0 %v250
  %v278 = vpop.f32.mrf.mxu0
  %v279 = vadd.f32 0.0, %v278
  %v280 = vpop.f32.mrf.mxu0
  %v281 = vadd.f32 0.0, %v280
  %282 = vmatmul.bf16.gmra.mxu0 %v253
  %v283 = vpop.f32.mrf.mxu0
  %v284 = vadd.f32 0.0, %v283
  %v285 = vpop.f32.mrf.mxu0
  %v286 = vadd.f32 0.0, %v285
  %287 = vdwg.mxu0
  %v288 = vsel %vm207, %v269, -inf
  %v289 = vsel %vm207, %v271, -inf
  %v290 = vsel %vm207, %v274, -inf
  %v291 = vsel %vm207, %v276, -inf
  %v292 = vsel %vm207, %v279, -inf
  %v293 = vmax.f32 %v288, %v292
  %v294 = vsel %vm207, %v281, -inf
  %v295 = vmax.f32 %v289, %v294
  %v296 = vsel %vm207, %v284, -inf
  %v297 = vmax.f32 %v290, %v296
  %v298 = vsel %vm207, %v286, -inf
  %v299 = vmax.f32 %v291, %v298
  %v300 = vmax.f32 %v293, %v295
  %v301 = vmax.f32 %v297, %v299
  %v302 = vmax.f32 %v300, %v301
  %v303 = vrot.slane %v302, 4
  %v304 = vmax.f32 %v302, %v303
  %v305 = vrot.slane %v304, 2
  %v306 = vmax.f32 %v304, %v305
  %v307 = vrot.slane %v306, 1
  %v308 = vmax.f32 %v306, %v307
  %v309 = vsub.f32 %v269, %v308
  %v310 = vsub.f32 %v271, %v308
  %v311 = vsub.f32 %v274, %v308
  %v312 = vsub.f32 %v276, %v308
  %v313 = vsub.f32 %v279, %v308
  %v314 = vsub.f32 %v281, %v308
  %v315 = vsub.f32 %v284, %v308
  %v316 = vsub.f32 %v286, %v308
  %v317 = vmul.f32 %v309, 1.442695
  %v318 = vpow.pop %v317
  %v319 = vmul.f32 %v310, 1.442695
  %v320 = vpow.pop %v319
  %v321 = vmul.f32 %v311, 1.442695
  %v322 = vpow.pop %v321
  %v323 = vmul.f32 %v312, 1.442695
  %v324 = vpow.pop %v323
  %v325 = vmul.f32 %v313, 1.442695
  %v326 = vpow.pop %v325
  %v327 = vmul.f32 %v314, 1.442695
  %v328 = vpow.pop %v327
  %v329 = vmul.f32 %v315, 1.442695
  %v330 = vpow.pop %v329
  %v331 = vmul.f32 %v316, 1.442695
  %v332 = vpow.pop %v331
  %v333 = vsel %vm207, %v318, 0.0
  %v334 = vsel %vm207, %v320, 0.0
  %v335 = vadd.f32 %v333, %v334
  %v336 = vsel %vm207, %v322, 0.0
  %v337 = vadd.f32 %v335, %v336
  %v338 = vsel %vm207, %v324, 0.0
  %v339 = vadd.f32 %v337, %v338
  %v340 = vsel %vm207, %v326, 0.0
  %v341 = vadd.f32 %v339, %v340
  %v342 = vsel %vm207, %v328, 0.0
  %v343 = vadd.f32 %v341, %v342
  %v344 = vsel %vm207, %v330, 0.0
  %v345 = vadd.f32 %v343, %v344
  %v346 = vsel %vm207, %v332, 0.0
  %v347 = vadd.f32 %v345, %v346
  %v348 = vrot.slane %v347, 4
  %v349 = vadd.f32 %v347, %v348
  %v350 = vrot.slane %v349, 2
  %v351 = vadd.f32 %v349, %v350
  %v352 = vrot.slane %v351, 1
  %v353 = vadd.f32 %v351, %v352
  %v354 = vpack.c.bf16 %v320, %v318
  %v355 = vpack.c.bf16 %v324, %v322
  %v356 = vpack.c.bf16 %v328, %v326
  %v357 = vpack.c.bf16 %v332, %v330
  %v359 = vsel %vm207, %v225, 0
  %361 = vmatpush.bf16.msra.mxu0 0
  %362 = vmatpush.bf16.msra.mxu0 0
  %363 = vmatpush.bf16.msra.mxu0 0
  %364 = vmatpush.bf16.msra.mxu0 0
  %365 = vmatpush.bf16.msra.mxu0 %v357
  %366 = vmatpush.bf16.msra.mxu0 %v356
  %367 = vmatpush.bf16.msra.mxu0 %v355
  %368 = vmatpush.bf16.msra.mxu0 %v354
  %369 = vmatmul.bf16.gmra.mxu0 %v359
  %v370 = vpop.f32.mrf.mxu0
  %v371 = vadd.f32 0.0, %v370
  %v372 = vpop.f32.mrf.mxu0
  %373 = vdwg.mxu0
  %v374 = vrcp.pop %v353
  %v375 = vmul.f32 %v371, %v374
  %vm376 = vcmask 519168
  %377 = vst.msk [vmem:[#allocation3] sm:$0xf] %vm376, %v375
  %v378 = vld [vmem:[#allocation2 + $0x4] sm:$0xf]
  %v379 = vpack.c.bf16 %v378, %v378
  %v380 = vld [vmem:[#allocation2 + $0x24] sm:$0xf]
  %v381 = vpack.c.bf16 %v380, %v380
  %v382 = vld [vmem:[#allocation2 + $0x44] sm:$0xf]
  %v383 = vpack.c.bf16 %v382, %v382
  %384 = vxpose.xlu0.c.b16.start [1/8] %v381, 128
  %385 = vxpose.xlu0.c.b16.cont [2/8] 0, 128
  %386 = vxpose.xlu0.c.b16.cont [3/8] 0, 128
  %387 = vxpose.xlu0.c.b16.cont [4/8] 0, 128
  %388 = vxpose.xlu0.c.b16.cont [5/8] 0, 128
  %389 = vxpose.xlu0.c.b16.cont [6/8] 0, 128
  %390 = vxpose.xlu0.c.b16.cont [7/8] 0, 128
  %391 = vxpose.xlu0.c.b16.end [8/8] 0, 128
  %v392 = vpop.trf.xlu0
  %v393 = vpop.trf.xlu0
  %v394 = vpop.trf.xlu0
  %v395 = vpop.trf.xlu0
  %v396 = vpop.trf.xlu0
  %v397 = vpop.trf.xlu0
  %v398 = vpop.trf.xlu0
  %v399 = vpop.trf.xlu0
  %v401 = vsel %vm242, %v392, 0
  %v404 = vsel %vm242, %v393, 0
  %v407 = vsel %vm242, %v394, 0
  %v410 = vsel %vm242, %v395, 0
  %v413 = vsel %vm255, %v379, 0
  %415 = vmatpush.bf16.msra.mxu0 0
  %416 = vmatpush.bf16.msra.mxu0 0
  %417 = vmatpush.bf16.msra.mxu0 0
  %418 = vmatpush.bf16.msra.mxu0 0
  %419 = vmatpush.bf16.msra.mxu0 0
  %420 = vmatpush.bf16.msra.mxu0 0
  %421 = vmatpush.bf16.msra.mxu0 0
  %422 = vmatpush.bf16.msra.mxu0 %v413
  %423 = vmatmul.bf16.gmra.mxu0 %v401
  %v424 = vpop.f32.mrf.mxu0
  %v425 = vadd.f32 0.0, %v424
  %v426 = vpop.f32.mrf.mxu0
  %v427 = vadd.f32 0.0, %v426
  %428 = vmatmul.bf16.gmra.mxu0 %v404
  %v429 = vpop.f32.mrf.mxu0
  %v430 = vadd.f32 0.0, %v429
  %v431 = vpop.f32.mrf.mxu0
  %v432 = vadd.f32 0.0, %v431
  %433 = vmatmul.bf16.gmra.mxu0 %v407
  %v434 = vpop.f32.mrf.mxu0
  %v435 = vadd.f32 0.0, %v434
  %v436 = vpop.f32.mrf.mxu0
  %v437 = vadd.f32 0.0, %v436
  %438 = vmatmul.bf16.gmra.mxu0 %v410
  %v439 = vpop.f32.mrf.mxu0
  %v440 = vadd.f32 0.0, %v439
  %v441 = vpop.f32.mrf.mxu0
  %v442 = vadd.f32 0.0, %v441
  %443 = vdwg.mxu0
  %v444 = vsel %vm207, %v425, -inf
  %v445 = vsel %vm207, %v427, -inf
  %v446 = vsel %vm207, %v430, -inf
  %v447 = vsel %vm207, %v432, -inf
  %v448 = vsel %vm207, %v435, -inf
  %v449 = vmax.f32 %v444, %v448
  %v450 = vsel %vm207, %v437, -inf
  %v451 = vmax.f32 %v445, %v450
  %v452 = vsel %vm207, %v440, -inf
  %v453 = vmax.f32 %v446, %v452
  %v454 = vsel %vm207, %v442, -inf
  %v455 = vmax.f32 %v447, %v454
  %v456 = vmax.f32 %v449, %v451
  %v457 = vmax.f32 %v453, %v455
  %v458 = vmax.f32 %v456, %v457
  %v459 = vrot.slane %v458, 4
  %v460 = vmax.f32 %v458, %v459
  %v461 = vrot.slane %v460, 2
  %v462 = vmax.f32 %v460, %v461
  %v463 = vrot.slane %v462, 1
  %v464 = vmax.f32 %v462, %v463
  %v465 = vsub.f32 %v425, %v464
  %v466 = vsub.f32 %v427, %v464
  %v467 = vsub.f32 %v430, %v464
  %v468 = vsub.f32 %v432, %v464
  %v469 = vsub.f32 %v435, %v464
  %v470 = vsub.f32 %v437, %v464
  %v471 = vsub.f32 %v440, %v464
  %v472 = vsub.f32 %v442, %v464
  %v473 = vmul.f32 %v465, 1.442695
  %v474 = vpow.pop %v473
  %v475 = vmul.f32 %v466, 1.442695
  %v476 = vpow.pop %v475
  %v477 = vmul.f32 %v467, 1.442695
  %v478 = vpow.pop %v477
  %v479 = vmul.f32 %v468, 1.442695
  %v480 = vpow.pop %v479
  %v481 = vmul.f32 %v469, 1.442695
  %v482 = vpow.pop %v481
  %v483 = vmul.f32 %v470, 1.442695
  %v484 = vpow.pop %v483
  %v485 = vmul.f32 %v471, 1.442695
  %v486 = vpow.pop %v485
  %v487 = vmul.f32 %v472, 1.442695
  %v488 = vpow.pop %v487
  %v489 = vsel %vm207, %v474, 0.0
  %v490 = vsel %vm207, %v476, 0.0
  %v491 = vadd.f32 %v489, %v490
  %v492 = vsel %vm207, %v478, 0.0
  %v493 = vadd.f32 %v491, %v492
  %v494 = vsel %vm207, %v480, 0.0
  %v495 = vadd.f32 %v493, %v494
  %v496 = vsel %vm207, %v482, 0.0
  %v497 = vadd.f32 %v495, %v496
  %v498 = vsel %vm207, %v484, 0.0
  %v499 = vadd.f32 %v497, %v498
  %v500 = vsel %vm207, %v486, 0.0
  %v501 = vadd.f32 %v499, %v500
  %v502 = vsel %vm207, %v488, 0.0
  %v503 = vadd.f32 %v501, %v502
  %v504 = vrot.slane %v503, 4
  %v505 = vadd.f32 %v503, %v504
  %v506 = vrot.slane %v505, 2
  %v507 = vadd.f32 %v505, %v506
  %v508 = vrot.slane %v507, 1
  %v509 = vadd.f32 %v507, %v508
  %v510 = vpack.c.bf16 %v476, %v474
  %v511 = vpack.c.bf16 %v480, %v478
  %v512 = vpack.c.bf16 %v484, %v482
  %v513 = vpack.c.bf16 %v488, %v486
  %v515 = vsel %vm207, %v383, 0
  %517 = vmatpush.bf16.msra.mxu0 0
  %518 = vmatpush.bf16.msra.mxu0 0
  %519 = vmatpush.bf16.msra.mxu0 0
  %520 = vmatpush.bf16.msra.mxu0 0
  %521 = vmatpush.bf16.msra.mxu0 %v513
  %522 = vmatpush.bf16.msra.mxu0 %v512
  %523 = vmatpush.bf16.msra.mxu0 %v511
  %524 = vmatpush.bf16.msra.mxu0 %v510
  %525 = vmatmul.bf16.gmra.mxu0 %v515
  %v526 = vpop.f32.mrf.mxu0
  %v527 = vadd.f32 0.0, %v526
  %v528 = vpop.f32.mrf.mxu0
  %529 = vdwg.mxu0
  %v530 = vrcp.pop %v509
  %v531 = vmul.f32 %v527, %v530
  %532 = vst.msk [vmem:[#allocation3 + $0x4] sm:$0xf] %vm376, %v531
  %v533 = vld [vmem:[#allocation2 + $0x8] sm:$0xf]
  %v534 = vpack.c.bf16 %v533, %v533
  %v535 = vld [vmem:[#allocation2 + $0x28] sm:$0xf]
  %v536 = vpack.c.bf16 %v535, %v535
  %v537 = vld [vmem:[#allocation2 + $0x48] sm:$0xf]
  %v538 = vpack.c.bf16 %v537, %v537
  %539 = vxpose.xlu0.c.b16.start [1/8] %v536, 128
  %540 = vxpose.xlu0.c.b16.cont [2/8] 0, 128
  %541 = vxpose.xlu0.c.b16.cont [3/8] 0, 128
  %542 = vxpose.xlu0.c.b16.cont [4/8] 0, 128
  %543 = vxpose.xlu0.c.b16.cont [5/8] 0, 128
  %544 = vxpose.xlu0.c.b16.cont [6/8] 0, 128
  %545 = vxpose.xlu0.c.b16.cont [7/8] 0, 128
  %546 = vxpose.xlu0.c.b16.end [8/8] 0, 128
  %v547 = vpop.trf.xlu0
  %v548 = vpop.trf.xlu0
  %v549 = vpop.trf.xlu0
  %v550 = vpop.trf.xlu0
  %v551 = vpop.trf.xlu0
  %v552 = vpop.trf.xlu0
  %v553 = vpop.trf.xlu0
  %v554 = vpop.trf.xlu0
  %v556 = vsel %vm242, %v547, 0
  %v559 = vsel %vm242, %v548, 0
  %v562 = vsel %vm242, %v549, 0
  %v565 = vsel %vm242, %v550, 0
  %v568 = vsel %vm255, %v534, 0
  %570 = vmatpush.bf16.msra.mxu0 0
  %571 = vmatpush.bf16.msra.mxu0 0
  %572 = vmatpush.bf16.msra.mxu0 0
  %573 = vmatpush.bf16.msra.mxu0 0
  %574 = vmatpush.bf16.msra.mxu0 0
  %575 = vmatpush.bf16.msra.mxu0 0
  %576 = vmatpush.bf16.msra.mxu0 0
  %577 = vmatpush.bf16.msra.mxu0 %v568
  %578 = vmatmul.bf16.gmra.mxu0 %v556
  %v579 = vpop.f32.mrf.mxu0
  %v580 = vadd.f32 0.0, %v579
  %v581 = vpop.f32.mrf.mxu0
  %v582 = vadd.f32 0.0, %v581
  %583 = vmatmul.bf16.gmra.mxu0 %v559
  %v584 = vpop.f32.mrf.mxu0
  %v585 = vadd.f32 0.0, %v584
  %v586 = vpop.f32.mrf.mxu0
  %v587 = vadd.f32 0.0, %v586
  %588 = vmatmul.bf16.gmra.mxu0 %v562
  %v589 = vpop.f32.mrf.mxu0
  %v590 = vadd.f32 0.0, %v589
  %v591 = vpop.f32.mrf.mxu0
  %v592 = vadd.f32 0.0, %v591
  %593 = vmatmul.bf16.gmra.mxu0 %v565
  %v594 = vpop.f32.mrf.mxu0
  %v595 = vadd.f32 0.0, %v594
  %v596 = vpop.f32.mrf.mxu0
  %v597 = vadd.f32 0.0, %v596
  %598 = vdwg.mxu0
  %v599 = vsel %vm207, %v580, -inf
  %v600 = vsel %vm207, %v582, -inf
  %v601 = vsel %vm207, %v585, -inf
  %v602 = vsel %vm207, %v587, -inf
  %v603 = vsel %vm207, %v590, -inf
  %v604 = vmax.f32 %v599, %v603
  %v605 = vsel %vm207, %v592, -inf
  %v606 = vmax.f32 %v600, %v605
  %v607 = vsel %vm207, %v595, -inf
  %v608 = vmax.f32 %v601, %v607
  %v609 = vsel %vm207, %v597, -inf
  %v610 = vmax.f32 %v602, %v609
  %v611 = vmax.f32 %v604, %v606
  %v612 = vmax.f32 %v608, %v610
  %v613 = vmax.f32 %v611, %v612
  %v614 = vrot.slane %v613, 4
  %v615 = vmax.f32 %v613, %v614
  %v616 = vrot.slane %v615, 2
  %v617 = vmax.f32 %v615, %v616
  %v618 = vrot.slane %v617, 1
  %v619 = vmax.f32 %v617, %v618
  %v620 = vsub.f32 %v580, %v619
  %v621 = vsub.f32 %v582, %v619
  %v622 = vsub.f32 %v585, %v619
  %v623 = vsub.f32 %v587, %v619
  %v624 = vsub.f32 %v590, %v619
  %v625 = vsub.f32 %v592, %v619
  %v626 = vsub.f32 %v595, %v619
  %v627 = vsub.f32 %v597, %v619
  %v628 = vmul.f32 %v620, 1.442695
  %v629 = vpow.pop %v628
  %v630 = vmul.f32 %v621, 1.442695
  %v631 = vpow.pop %v630
  %v632 = vmul.f32 %v622, 1.442695
  %v633 = vpow.pop %v632
  %v634 = vmul.f32 %v623, 1.442695
  %v635 = vpow.pop %v634
  %v636 = vmul.f32 %v624, 1.442695
  %v637 = vpow.pop %v636
  %v638 = vmul.f32 %v625, 1.442695
  %v639 = vpow.pop %v638
  %v640 = vmul.f32 %v626, 1.442695
  %v641 = vpow.pop %v640
  %v642 = vmul.f32 %v627, 1.442695
  %v643 = vpow.pop %v642
  %v644 = vsel %vm207, %v629, 0.0
  %v645 = vsel %vm207, %v631, 0.0
  %v646 = vadd.f32 %v644, %v645
  %v647 = vsel %vm207, %v633, 0.0
  %v648 = vadd.f32 %v646, %v647
  %v649 = vsel %vm207, %v635, 0.0
  %v650 = vadd.f32 %v648, %v649
  %v651 = vsel %vm207, %v637, 0.0
  %v652 = vadd.f32 %v650, %v651
  %v653 = vsel %vm207, %v639, 0.0
  %v654 = vadd.f32 %v652, %v653
  %v655 = vsel %vm207, %v641, 0.0
  %v656 = vadd.f32 %v654, %v655
  %v657 = vsel %vm207, %v643, 0.0
  %v658 = vadd.f32 %v656, %v657
  %v659 = vrot.slane %v658, 4
  %v660 = vadd.f32 %v658, %v659
  %v661 = vrot.slane %v660, 2
  %v662 = vadd.f32 %v660, %v661
  %v663 = vrot.slane %v662, 1
  %v664 = vadd.f32 %v662, %v663
  %v665 = vpack.c.bf16 %v631, %v629
  %v666 = vpack.c.bf16 %v635, %v633
  %v667 = vpack.c.bf16 %v639, %v637
  %v668 = vpack.c.bf16 %v643, %v641
  %v670 = vsel %vm207, %v538, 0
  %672 = vmatpush.bf16.msra.mxu0 0
  %673 = vmatpush.bf16.msra.mxu0 0
  %674 = vmatpush.bf16.msra.mxu0 0
  %675 = vmatpush.bf16.msra.mxu0 0
  %676 = vmatpush.bf16.msra.mxu0 %v668
  %677 = vmatpush.bf16.msra.mxu0 %v667
  %678 = vmatpush.bf16.msra.mxu0 %v666
  %679 = vmatpush.bf16.msra.mxu0 %v665
  %680 = vmatmul.bf16.gmra.mxu0 %v670
  %v681 = vpop.f32.mrf.mxu0
  %v682 = vadd.f32 0.0, %v681
  %v683 = vpop.f32.mrf.mxu0
  %684 = vdwg.mxu0
  %v685 = vrcp.pop %v664
  %v686 = vmul.f32 %v682, %v685
  %687 = vst.msk [vmem:[#allocation3 + $0x8] sm:$0xf] %vm376, %v686
  %v688 = vld [vmem:[#allocation2 + $0xc] sm:$0xf]
  %v689 = vpack.c.bf16 %v688, %v688
  %v690 = vld [vmem:[#allocation2 + $0x2c] sm:$0xf]
  %v691 = vpack.c.bf16 %v690, %v690
  %v692 = vld [vmem:[#allocation2 + $0x4c] sm:$0xf]
  %v693 = vpack.c.bf16 %v692, %v692
  %694 = vxpose.xlu0.c.b16.start [1/8] %v691, 128
  %695 = vxpose.xlu0.c.b16.cont [2/8] 0, 128
  %696 = vxpose.xlu0.c.b16.cont [3/8] 0, 128
  %697 = vxpose.xlu0.c.b16.cont [4/8] 0, 128
  %698 = vxpose.xlu0.c.b16.cont [5/8] 0, 128
  %699 = vxpose.xlu0.c.b16.cont [6/8] 0, 128
  %700 = vxpose.xlu0.c.b16.cont [7/8] 0, 128
  %701 = vxpose.xlu0.c.b16.end [8/8] 0, 128
  %v702 = vpop.trf.xlu0
  %v703 = vpop.trf.xlu0
  %v704 = vpop.trf.xlu0
  %v705 = vpop.trf.xlu0
  %v706 = vpop.trf.xlu0
  %v707 = vpop.trf.xlu0
  %v708 = vpop.trf.xlu0
  %v709 = vpop.trf.xlu0
  %v711 = vsel %vm242, %v702, 0
  %v714 = vsel %vm242, %v703, 0
  %v717 = vsel %vm242, %v704, 0
  %v720 = vsel %vm242, %v705, 0
  %v723 = vsel %vm255, %v689, 0
  %725 = vmatpush.bf16.msra.mxu0 0
  %726 = vmatpush.bf16.msra.mxu0 0
  %727 = vmatpush.bf16.msra.mxu0 0
  %728 = vmatpush.bf16.msra.mxu0 0
  %729 = vmatpush.bf16.msra.mxu0 0
  %730 = vmatpush.bf16.msra.mxu0 0
  %731 = vmatpush.bf16.msra.mxu0 0
  %732 = vmatpush.bf16.msra.mxu0 %v723
  %733 = vmatmul.bf16.gmra.mxu0 %v711
  %v734 = vpop.f32.mrf.mxu0
  %v735 = vadd.f32 0.0, %v734
  %v736 = vpop.f32.mrf.mxu0
  %v737 = vadd.f32 0.0, %v736
  %738 = vmatmul.bf16.gmra.mxu0 %v714
  %v739 = vpop.f32.mrf.mxu0
  %v740 = vadd.f32 0.0, %v739
  %v741 = vpop.f32.mrf.mxu0
  %v742 = vadd.f32 0.0, %v741
  %743 = vmatmul.bf16.gmra.mxu0 %v717
  %v744 = vpop.f32.mrf.mxu0
  %v745 = vadd.f32 0.0, %v744
  %v746 = vpop.f32.mrf.mxu0
  %v747 = vadd.f32 0.0, %v746
  %748 = vmatmul.bf16.gmra.mxu0 %v720
  %v749 = vpop.f32.mrf.mxu0
  %v750 = vadd.f32 0.0, %v749
  %v751 = vpop.f32.mrf.mxu0
  %v752 = vadd.f32 0.0, %v751
  %753 = vdwg.mxu0
  %v754 = vsel %vm207, %v735, -inf
  %v755 = vsel %vm207, %v737, -inf
  %v756 = vsel %vm207, %v740, -inf
  %v757 = vsel %vm207, %v742, -inf
  %v758 = vsel %vm207, %v745, -inf
  %v759 = vmax.f32 %v754, %v758
  %v760 = vsel %vm207, %v747, -inf
  %v761 = vmax.f32 %v755, %v760
  %v762 = vsel %vm207, %v750, -inf
  %v763 = vmax.f32 %v756, %v762
  %v764 = vsel %vm207, %v752, -inf
  %v765 = vmax.f32 %v757, %v764
  %v766 = vmax.f32 %v759, %v761
  %v767 = vmax.f32 %v763, %v765
  %v768 = vmax.f32 %v766, %v767
  %v769 = vrot.slane %v768, 4
  %v770 = vmax.f32 %v768, %v769
  %v771 = vrot.slane %v770, 2
  %v772 = vmax.f32 %v770, %v771
  %v773 = vrot.slane %v772, 1
  %v774 = vmax.f32 %v772, %v773
  %v775 = vsub.f32 %v735, %v774
  %v776 = vsub.f32 %v737, %v774
  %v777 = vsub.f32 %v740, %v774
  %v778 = vsub.f32 %v742, %v774
  %v779 = vsub.f32 %v745, %v774
  %v780 = vsub.f32 %v747, %v774
  %v781 = vsub.f32 %v750, %v774
  %v782 = vsub.f32 %v752, %v774
  %v783 = vmul.f32 %v775, 1.442695
  %v784 = vpow.pop %v783
  %v785 = vmul.f32 %v776, 1.442695
  %v786 = vpow.pop %v785
  %v787 = vmul.f32 %v777, 1.442695
  %v788 = vpow.pop %v787
  %v789 = vmul.f32 %v778, 1.442695
  %v790 = vpow.pop %v789
  %v791 = vmul.f32 %v779, 1.442695
  %v792 = vpow.pop %v791
  %v793 = vmul.f32 %v780, 1.442695
  %v794 = vpow.pop %v793
  %v795 = vmul.f32 %v781, 1.442695
  %v796 = vpow.pop %v795
  %v797 = vmul.f32 %v782, 1.442695
  %v798 = vpow.pop %v797
  %v799 = vsel %vm207, %v784, 0.0
  %v800 = vsel %vm207, %v786, 0.0
  %v801 = vadd.f32 %v799, %v800
  %v802 = vsel %vm207, %v788, 0.0
  %v803 = vadd.f32 %v801, %v802
  %v804 = vsel %vm207, %v790, 0.0
  %v805 = vadd.f32 %v803, %v804
  %v806 = vsel %vm207, %v792, 0.0
  %v807 = vadd.f32 %v805, %v806
  %v808 = vsel %vm207, %v794, 0.0
  %v809 = vadd.f32 %v807, %v808
  %v810 = vsel %vm207, %v796, 0.0
  %v811 = vadd.f32 %v809, %v810
  %v812 = vsel %vm207, %v798, 0.0
  %v813 = vadd.f32 %v811, %v812
  %v814 = vrot.slane %v813, 4
  %v815 = vadd.f32 %v813, %v814
  %v816 = vrot.slane %v815, 2
  %v817 = vadd.f32 %v815, %v816
  %v818 = vrot.slane %v817, 1
  %v819 = vadd.f32 %v817, %v818
  %v820 = vpack.c.bf16 %v786, %v784
  %v821 = vpack.c.bf16 %v790, %v788
  %v822 = vpack.c.bf16 %v794, %v792
  %v823 = vpack.c.bf16 %v798, %v796
  %v825 = vsel %vm207, %v693, 0
  %827 = vmatpush.bf16.msra.mxu0 0
  %828 = vmatpush.bf16.msra.mxu0 0
  %829 = vmatpush.bf16.msra.mxu0 0
  %830 = vmatpush.bf16.msra.mxu0 0
  %831 = vmatpush.bf16.msra.mxu0 %v823
  %832 = vmatpush.bf16.msra.mxu0 %v822
  %833 = vmatpush.bf16.msra.mxu0 %v821
  %834 = vmatpush.bf16.msra.mxu0 %v820
  %835 = vmatmul.bf16.gmra.mxu0 %v825
  %v836 = vpop.f32.mrf.mxu0
  %v837 = vadd.f32 0.0, %v836
  %v838 = vpop.f32.mrf.mxu0
  %839 = vdwg.mxu0
  %v840 = vrcp.pop %v819
  %v841 = vmul.f32 %v837, %v840
  %842 = vst.msk [vmem:[#allocation3 + $0xc] sm:$0xf] %vm376, %v841
  %v843 = vld [vmem:[#allocation2 + $0x10] sm:$0xf]
  %v844 = vpack.c.bf16 %v843, %v843
  %v845 = vld [vmem:[#allocation2 + $0x30] sm:$0xf]
  %v846 = vpack.c.bf16 %v845, %v845
  %v847 = vld [vmem:[#allocation2 + $0x50] sm:$0xf]
  %v848 = vpack.c.bf16 %v847, %v847
  %849 = vxpose.xlu0.c.b16.start [1/8] %v846, 128
  %850 = vxpose.xlu0.c.b16.cont [2/8] 0, 128
  %851 = vxpose.xlu0.c.b16.cont [3/8] 0, 128
  %852 = vxpose.xlu0.c.b16.cont [4/8] 0, 128
  %853 = vxpose.xlu0.c.b16.cont [5/8] 0, 128
  %854 = vxpose.xlu0.c.b16.cont [6/8] 0, 128
  %855 = vxpose.xlu0.c.b16.cont [7/8] 0, 128
  %856 = vxpose.xlu0.c.b16.end [8/8] 0, 128
  %v857 = vpop.trf.xlu0
  %v858 = vpop.trf.xlu0
  %v859 = vpop.trf.xlu0
  %v860 = vpop.trf.xlu0
  %v861 = vpop.trf.xlu0
  %v862 = vpop.trf.xlu0
  %v863 = vpop.trf.xlu0
  %v864 = vpop.trf.xlu0
  %v866 = vsel %vm242, %v857, 0
  %v869 = vsel %vm242, %v858, 0
  %v872 = vsel %vm242, %v859, 0
  %v875 = vsel %vm242, %v860, 0
  %v878 = vsel %vm255, %v844, 0
  %880 = vmatpush.bf16.msra.mxu0 0
  %881 = vmatpush.bf16.msra.mxu0 0
  %882 = vmatpush.bf16.msra.mxu0 0
  %883 = vmatpush.bf16.msra.mxu0 0
  %884 = vmatpush.bf16.msra.mxu0 0
  %885 = vmatpush.bf16.msra.mxu0 0
  %886 = vmatpush.bf16.msra.mxu0 0
  %887 = vmatpush.bf16.msra.mxu0 %v878
  %888 = vmatmul.bf16.gmra.mxu0 %v866
  %v889 = vpop.f32.mrf.mxu0
  %v890 = vadd.f32 0.0, %v889
  %v891 = vpop.f32.mrf.mxu0
  %v892 = vadd.f32 0.0, %v891
  %893 = vmatmul.bf16.gmra.mxu0 %v869
  %v894 = vpop.f32.mrf.mxu0
  %v895 = vadd.f32 0.0, %v894
  %v896 = vpop.f32.mrf.mxu0
  %v897 = vadd.f32 0.0, %v896
  %898 = vmatmul.bf16.gmra.mxu0 %v872
  %v899 = vpop.f32.mrf.mxu0
  %v900 = vadd.f32 0.0, %v899
  %v901 = vpop.f32.mrf.mxu0
  %v902 = vadd.f32 0.0, %v901
  %903 = vmatmul.bf16.gmra.mxu0 %v875
  %v904 = vpop.f32.mrf.mxu0
  %v905 = vadd.f32 0.0, %v904
  %v906 = vpop.f32.mrf.mxu0
  %v907 = vadd.f32 0.0, %v906
  %908 = vdwg.mxu0
  %v909 = vsel %vm207, %v890, -inf
  %v910 = vsel %vm207, %v892, -inf
  %v911 = vsel %vm207, %v895, -inf
  %v912 = vsel %vm207, %v897, -inf
  %v913 = vsel %vm207, %v900, -inf
  %v914 = vmax.f32 %v909, %v913
  %v915 = vsel %vm207, %v902, -inf
  %v916 = vmax.f32 %v910, %v915
  %v917 = vsel %vm207, %v905, -inf
  %v918 = vmax.f32 %v911, %v917
  %v919 = vsel %vm207, %v907, -inf
  %v920 = vmax.f32 %v912, %v919
  %v921 = vmax.f32 %v914, %v916
  %v922 = vmax.f32 %v918, %v920
  %v923 = vmax.f32 %v921, %v922
  %v924 = vrot.slane %v923, 4
  %v925 = vmax.f32 %v923, %v924
  %v926 = vrot.slane %v925, 2
  %v927 = vmax.f32 %v925, %v926
  %v928 = vrot.slane %v927, 1
  %v929 = vmax.f32 %v927, %v928
  %v930 = vsub.f32 %v890, %v929
  %v931 = vsub.f32 %v892, %v929
  %v932 = vsub.f32 %v895, %v929
  %v933 = vsub.f32 %v897, %v929
  %v934 = vsub.f32 %v900, %v929
  %v935 = vsub.f32 %v902, %v929
  %v936 = vsub.f32 %v905, %v929
  %v937 = vsub.f32 %v907, %v929
  %v938 = vmul.f32 %v930, 1.442695
  %v939 = vpow.pop %v938
  %v940 = vmul.f32 %v931, 1.442695
  %v941 = vpow.pop %v940
  %v942 = vmul.f32 %v932, 1.442695
  %v943 = vpow.pop %v942
  %v944 = vmul.f32 %v933, 1.442695
  %v945 = vpow.pop %v944
  %v946 = vmul.f32 %v934, 1.442695
  %v947 = vpow.pop %v946
  %v948 = vmul.f32 %v935, 1.442695
  %v949 = vpow.pop %v948
  %v950 = vmul.f32 %v936, 1.442695
  %v951 = vpow.pop %v950
  %v952 = vmul.f32 %v937, 1.442695
  %v953 = vpow.pop %v952
  %v954 = vsel %vm207, %v939, 0.0
  %v955 = vsel %vm207, %v941, 0.0
  %v956 = vadd.f32 %v954, %v955
  %v957 = vsel %vm207, %v943, 0.0
  %v958 = vadd.f32 %v956, %v957
  %v959 = vsel %vm207, %v945, 0.0
  %v960 = vadd.f32 %v958, %v959
  %v961 = vsel %vm207, %v947, 0.0
  %v962 = vadd.f32 %v960, %v961
  %v963 = vsel %vm207, %v949, 0.0
  %v964 = vadd.f32 %v962, %v963
  %v965 = vsel %vm207, %v951, 0.0
  %v966 = vadd.f32 %v964, %v965
  %v967 = vsel %vm207, %v953, 0.0
  %v968 = vadd.f32 %v966, %v967
  %v969 = vrot.slane %v968, 4
  %v970 = vadd.f32 %v968, %v969
  %v971 = vrot.slane %v970, 2
  %v972 = vadd.f32 %v970, %v971
  %v973 = vrot.slane %v972, 1
  %v974 = vadd.f32 %v972, %v973
  %v975 = vpack.c.bf16 %v941, %v939
  %v976 = vpack.c.bf16 %v945, %v943
  %v977 = vpack.c.bf16 %v949, %v947
  %v978 = vpack.c.bf16 %v953, %v951
  %v980 = vsel %vm207, %v848, 0
  %982 = vmatpush.bf16.msra.mxu0 0
  %983 = vmatpush.bf16.msra.mxu0 0
  %984 = vmatpush.bf16.msra.mxu0 0
  %985 = vmatpush.bf16.msra.mxu0 0
  %986 = vmatpush.bf16.msra.mxu0 %v978
  %987 = vmatpush.bf16.msra.mxu0 %v977
  %988 = vmatpush.bf16.msra.mxu0 %v976
  %989 = vmatpush.bf16.msra.mxu0 %v975
  %990 = vmatmul.bf16.gmra.mxu0 %v980
  %v991 = vpop.f32.mrf.mxu0
  %v992 = vadd.f32 0.0, %v991
  %v993 = vpop.f32.mrf.mxu0
  %994 = vdwg.mxu0
  %v995 = vrcp.pop %v974
  %v996 = vmul.f32 %v992, %v995
  %997 = vst.msk [vmem:[#allocation3 + $0x10] sm:$0xf] %vm376, %v996
  %v998 = vld [vmem:[#allocation2 + $0x14] sm:$0xf]
  %v999 = vpack.c.bf16 %v998, %v998
  %v1000 = vld [vmem:[#allocation2 + $0x34] sm:$0xf]
  %v1001 = vpack.c.bf16 %v1000, %v1000
  %v1002 = vld [vmem:[#allocation2 + $0x54] sm:$0xf]
  %v1003 = vpack.c.bf16 %v1002, %v1002
  %1004 = vxpose.xlu0.c.b16.start [1/8] %v1001, 128
  %1005 = vxpose.xlu0.c.b16.cont [2/8] 0, 128
  %1006 = vxpose.xlu0.c.b16.cont [3/8] 0, 128
  %1007 = vxpose.xlu0.c.b16.cont [4/8] 0, 128
  %1008 = vxpose.xlu0.c.b16.cont [5/8] 0, 128
  %1009 = vxpose.xlu0.c.b16.cont [6/8] 0, 128
  %1010 = vxpose.xlu0.c.b16.cont [7/8] 0, 128
  %1011 = vxpose.xlu0.c.b16.end [8/8] 0, 128
  %v1012 = vpop.trf.xlu0
  %v1013 = vpop.trf.xlu0
  %v1014 = vpop.trf.xlu0
  %v1015 = vpop.trf.xlu0
  %v1016 = vpop.trf.xlu0
  %v1017 = vpop.trf.xlu0
  %v1018 = vpop.trf.xlu0
  %v1019 = vpop.trf.xlu0
  %v1021 = vsel %vm242, %v1012, 0
  %v1024 = vsel %vm242, %v1013, 0
  %v1027 = vsel %vm242, %v1014, 0
  %v1030 = vsel %vm242, %v1015, 0
  %v1033 = vsel %vm255, %v999, 0
  %1035 = vmatpush.bf16.msra.mxu0 0
  %1036 = vmatpush.bf16.msra.mxu0 0
  %1037 = vmatpush.bf16.msra.mxu0 0
  %1038 = vmatpush.bf16.msra.mxu0 0
  %1039 = vmatpush.bf16.msra.mxu0 0
  %1040 = vmatpush.bf16.msra.mxu0 0
  %1041 = vmatpush.bf16.msra.mxu0 0
  %1042 = vmatpush.bf16.msra.mxu0 %v1033
  %1043 = vmatmul.bf16.gmra.mxu0 %v1021
  %v1044 = vpop.f32.mrf.mxu0
  %v1045 = vadd.f32 0.0, %v1044
  %v1046 = vpop.f32.mrf.mxu0
  %v1047 = vadd.f32 0.0, %v1046
  %1048 = vmatmul.bf16.gmra.mxu0 %v1024
  %v1049 = vpop.f32.mrf.mxu0
  %v1050 = vadd.f32 0.0, %v1049
  %v1051 = vpop.f32.mrf.mxu0
  %v1052 = vadd.f32 0.0, %v1051
  %1053 = vmatmul.bf16.gmra.mxu0 %v1027
  %v1054 = vpop.f32.mrf.mxu0
  %v1055 = vadd.f32 0.0, %v1054
  %v1056 = vpop.f32.mrf.mxu0
  %v1057 = vadd.f32 0.0, %v1056
  %1058 = vmatmul.bf16.gmra.mxu0 %v1030
  %v1059 = vpop.f32.mrf.mxu0
  %v1060 = vadd.f32 0.0, %v1059
  %v1061 = vpop.f32.mrf.mxu0
  %v1062 = vadd.f32 0.0, %v1061
  %1063 = vdwg.mxu0
  %v1064 = vsel %vm207, %v1045, -inf
  %v1065 = vsel %vm207, %v1047, -inf
  %v1066 = vsel %vm207, %v1050, -inf
  %v1067 = vsel %vm207, %v1052, -inf
  %v1068 = vsel %vm207, %v1055, -inf
  %v1069 = vmax.f32 %v1064, %v1068
  %v1070 = vsel %vm207, %v1057, -inf
  %v1071 = vmax.f32 %v1065, %v1070
  %v1072 = vsel %vm207, %v1060, -inf
  %v1073 = vmax.f32 %v1066, %v1072
  %v1074 = vsel %vm207, %v1062, -inf
  %v1075 = vmax.f32 %v1067, %v1074
  %v1076 = vmax.f32 %v1069, %v1071
  %v1077 = vmax.f32 %v1073, %v1075
  %v1078 = vmax.f32 %v1076, %v1077
  %v1079 = vrot.slane %v1078, 4
  %v1080 = vmax.f32 %v1078, %v1079
  %v1081 = vrot.slane %v1080, 2
  %v1082 = vmax.f32 %v1080, %v1081
  %v1083 = vrot.slane %v1082, 1
  %v1084 = vmax.f32 %v1082, %v1083
  %v1085 = vsub.f32 %v1045, %v1084
  %v1086 = vsub.f32 %v1047, %v1084
  %v1087 = vsub.f32 %v1050, %v1084
  %v1088 = vsub.f32 %v1052, %v1084
  %v1089 = vsub.f32 %v1055, %v1084
  %v1090 = vsub.f32 %v1057, %v1084
  %v1091 = vsub.f32 %v1060, %v1084
  %v1092 = vsub.f32 %v1062, %v1084
  %v1093 = vmul.f32 %v1085, 1.442695
  %v1094 = vpow.pop %v1093
  %v1095 = vmul.f32 %v1086, 1.442695
  %v1096 = vpow.pop %v1095
  %v1097 = vmul.f32 %v1087, 1.442695
  %v1098 = vpow.pop %v1097
  %v1099 = vmul.f32 %v1088, 1.442695
  %v1100 = vpow.pop %v1099
  %v1101 = vmul.f32 %v1089, 1.442695
  %v1102 = vpow.pop %v1101
  %v1103 = vmul.f32 %v1090, 1.442695
  %v1104 = vpow.pop %v1103
  %v1105 = vmul.f32 %v1091, 1.442695
  %v1106 = vpow.pop %v1105
  %v1107 = vmul.f32 %v1092, 1.442695
  %v1108 = vpow.pop %v1107
  %v1109 = vsel %vm207, %v1094, 0.0
  %v1110 = vsel %vm207, %v1096, 0.0
  %v1111 = vadd.f32 %v1109, %v1110
  %v1112 = vsel %vm207, %v1098, 0.0
  %v1113 = vadd.f32 %v1111, %v1112
  %v1114 = vsel %vm207, %v1100, 0.0
  %v1115 = vadd.f32 %v1113, %v1114
  %v1116 = vsel %vm207, %v1102, 0.0
  %v1117 = vadd.f32 %v1115, %v1116
  %v1118 = vsel %vm207, %v1104, 0.0
  %v1119 = vadd.f32 %v1117, %v1118
  %v1120 = vsel %vm207, %v1106, 0.0
  %v1121 = vadd.f32 %v1119, %v1120
  %v1122 = vsel %vm207, %v1108, 0.0
  %v1123 = vadd.f32 %v1121, %v1122
  %v1124 = vrot.slane %v1123, 4
  %v1125 = vadd.f32 %v1123, %v1124
  %v1126 = vrot.slane %v1125, 2
  %v1127 = vadd.f32 %v1125, %v1126
  %v1128 = vrot.slane %v1127, 1
  %v1129 = vadd.f32 %v1127, %v1128
  %v1130 = vpack.c.bf16 %v1096, %v1094
  %v1131 = vpack.c.bf16 %v1100, %v1098
  %v1132 = vpack.c.bf16 %v1104, %v1102
  %v1133 = vpack.c.bf16 %v1108, %v1106
  %v1135 = vsel %vm207, %v1003, 0
  %1137 = vmatpush.bf16.msra.mxu0 0
  %1138 = vmatpush.bf16.msra.mxu0 0
  %1139 = vmatpush.bf16.msra.mxu0 0
  %1140 = vmatpush.bf16.msra.mxu0 0
  %1141 = vmatpush.bf16.msra.mxu0 %v1133
  %1142 = vmatpush.bf16.msra.mxu0 %v1132
  %1143 = vmatpush.bf16.msra.mxu0 %v1131
  %1144 = vmatpush.bf16.msra.mxu0 %v1130
  %1145 = vmatmul.bf16.gmra.mxu0 %v1135
  %v1146 = vpop.f32.mrf.mxu0
  %v1147 = vadd.f32 0.0, %v1146
  %v1148 = vpop.f32.mrf.mxu0
  %1149 = vdwg.mxu0
  %v1150 = vrcp.pop %v1129
  %v1151 = vmul.f32 %v1147, %v1150
  %1152 = vst.msk [vmem:[#allocation3 + $0x14] sm:$0xf] %vm376, %v1151
  %v1153 = vld [vmem:[#allocation2 + $0x18] sm:$0xf]
  %v1154 = vpack.c.bf16 %v1153, %v1153
  %v1155 = vld [vmem:[#allocation2 + $0x38] sm:$0xf]
  %v1156 = vpack.c.bf16 %v1155, %v1155
  %v1157 = vld [vmem:[#allocation2 + $0x58] sm:$0xf]
  %v1158 = vpack.c.bf16 %v1157, %v1157
  %1159 = vxpose.xlu0.c.b16.start [1/8] %v1156, 128
  %1160 = vxpose.xlu0.c.b16.cont [2/8] 0, 128
  %1161 = vxpose.xlu0.c.b16.cont [3/8] 0, 128
  %1162 = vxpose.xlu0.c.b16.cont [4/8] 0, 128
  %1163 = vxpose.xlu0.c.b16.cont [5/8] 0, 128
  %1164 = vxpose.xlu0.c.b16.cont [6/8] 0, 128
  %1165 = vxpose.xlu0.c.b16.cont [7/8] 0, 128
  %1166 = vxpose.xlu0.c.b16.end [8/8] 0, 128
  %v1167 = vpop.trf.xlu0
  %v1168 = vpop.trf.xlu0
  %v1169 = vpop.trf.xlu0
  %v1170 = vpop.trf.xlu0
  %v1171 = vpop.trf.xlu0
  %v1172 = vpop.trf.xlu0
  %v1173 = vpop.trf.xlu0
  %v1174 = vpop.trf.xlu0
  %v1176 = vsel %vm242, %v1167, 0
  %v1179 = vsel %vm242, %v1168, 0
  %v1182 = vsel %vm242, %v1169, 0
  %v1185 = vsel %vm242, %v1170, 0
  %v1188 = vsel %vm255, %v1154, 0
  %1190 = vmatpush.bf16.msra.mxu0 0
  %1191 = vmatpush.bf16.msra.mxu0 0
  %1192 = vmatpush.bf16.msra.mxu0 0
  %1193 = vmatpush.bf16.msra.mxu0 0
  %1194 = vmatpush.bf16.msra.mxu0 0
  %1195 = vmatpush.bf16.msra.mxu0 0
  %1196 = vmatpush.bf16.msra.mxu0 0
  %1197 = vmatpush.bf16.msra.mxu0 %v1188
  %1198 = vmatmul.bf16.gmra.mxu0 %v1176
  %v1199 = vpop.f32.mrf.mxu0
  %v1200 = vadd.f32 0.0, %v1199
  %v1201 = vpop.f32.mrf.mxu0
  %v1202 = vadd.f32 0.0, %v1201
  %1203 = vmatmul.bf16.gmra.mxu0 %v1179
  %v1204 = vpop.f32.mrf.mxu0
  %v1205 = vadd.f32 0.0, %v1204
  %v1206 = vpop.f32.mrf.mxu0
  %v1207 = vadd.f32 0.0, %v1206
  %1208 = vmatmul.bf16.gmra.mxu0 %v1182
  %v1209 = vpop.f32.mrf.mxu0
  %v1210 = vadd.f32 0.0, %v1209
  %v1211 = vpop.f32.mrf.mxu0
  %v1212 = vadd.f32 0.0, %v1211
  %1213 = vmatmul.bf16.gmra.mxu0 %v1185
  %v1214 = vpop.f32.mrf.mxu0
  %v1215 = vadd.f32 0.0, %v1214
  %v1216 = vpop.f32.mrf.mxu0
  %v1217 = vadd.f32 0.0, %v1216
  %1218 = vdwg.mxu0
  %v1219 = vsel %vm207, %v1200, -inf
  %v1220 = vsel %vm207, %v1202, -inf
  %v1221 = vsel %vm207, %v1205, -inf
  %v1222 = vsel %vm207, %v1207, -inf
  %v1223 = vsel %vm207, %v1210, -inf
  %v1224 = vmax.f32 %v1219, %v1223
  %v1225 = vsel %vm207, %v1212, -inf
  %v1226 = vmax.f32 %v1220, %v1225
  %v1227 = vsel %vm207, %v1215, -inf
  %v1228 = vmax.f32 %v1221, %v1227
  %v1229 = vsel %vm207, %v1217, -inf
  %v1230 = vmax.f32 %v1222, %v1229
  %v1231 = vmax.f32 %v1224, %v1226
  %v1232 = vmax.f32 %v1228, %v1230
  %v1233 = vmax.f32 %v1231, %v1232
  %v1234 = vrot.slane %v1233, 4
  %v1235 = vmax.f32 %v1233, %v1234
  %v1236 = vrot.slane %v1235, 2
  %v1237 = vmax.f32 %v1235, %v1236
  %v1238 = vrot.slane %v1237, 1
  %v1239 = vmax.f32 %v1237, %v1238
  %v1240 = vsub.f32 %v1200, %v1239
  %v1241 = vsub.f32 %v1202, %v1239
  %v1242 = vsub.f32 %v1205, %v1239
  %v1243 = vsub.f32 %v1207, %v1239
  %v1244 = vsub.f32 %v1210, %v1239
  %v1245 = vsub.f32 %v1212, %v1239
  %v1246 = vsub.f32 %v1215, %v1239
  %v1247 = vsub.f32 %v1217, %v1239
  %v1248 = vmul.f32 %v1240, 1.442695
  %v1249 = vpow.pop %v1248
  %v1250 = vmul.f32 %v1241, 1.442695
  %v1251 = vpow.pop %v1250
  %v1252 = vmul.f32 %v1242, 1.442695
  %v1253 = vpow.pop %v1252
  %v1254 = vmul.f32 %v1243, 1.442695
  %v1255 = vpow.pop %v1254
  %v1256 = vmul.f32 %v1244, 1.442695
  %v1257 = vpow.pop %v1256
  %v1258 = vmul.f32 %v1245, 1.442695
  %v1259 = vpow.pop %v1258
  %v1260 = vmul.f32 %v1246, 1.442695
  %v1261 = vpow.pop %v1260
  %v1262 = vmul.f32 %v1247, 1.442695
  %v1263 = vpow.pop %v1262
  %v1264 = vsel %vm207, %v1249, 0.0
  %v1265 = vsel %vm207, %v1251, 0.0
  %v1266 = vadd.f32 %v1264, %v1265
  %v1267 = vsel %vm207, %v1253, 0.0
  %v1268 = vadd.f32 %v1266, %v1267
  %v1269 = vsel %vm207, %v1255, 0.0
  %v1270 = vadd.f32 %v1268, %v1269
  %v1271 = vsel %vm207, %v1257, 0.0
  %v1272 = vadd.f32 %v1270, %v1271
  %v1273 = vsel %vm207, %v1259, 0.0
  %v1274 = vadd.f32 %v1272, %v1273
  %v1275 = vsel %vm207, %v1261, 0.0
  %v1276 = vadd.f32 %v1274, %v1275
  %v1277 = vsel %vm207, %v1263, 0.0
  %v1278 = vadd.f32 %v1276, %v1277
  %v1279 = vrot.slane %v1278, 4
  %v1280 = vadd.f32 %v1278, %v1279
  %v1281 = vrot.slane %v1280, 2
  %v1282 = vadd.f32 %v1280, %v1281
  %v1283 = vrot.slane %v1282, 1
  %v1284 = vadd.f32 %v1282, %v1283
  %v1285 = vpack.c.bf16 %v1251, %v1249
  %v1286 = vpack.c.bf16 %v1255, %v1253
  %v1287 = vpack.c.bf16 %v1259, %v1257
  %v1288 = vpack.c.bf16 %v1263, %v1261
  %v1290 = vsel %vm207, %v1158, 0
  %1292 = vmatpush.bf16.msra.mxu0 0
  %1293 = vmatpush.bf16.msra.mxu0 0
  %1294 = vmatpush.bf16.msra.mxu0 0
  %1295 = vmatpush.bf16.msra.mxu0 0
  %1296 = vmatpush.bf16.msra.mxu0 %v1288
  %1297 = vmatpush.bf16.msra.mxu0 %v1287
  %1298 = vmatpush.bf16.msra.mxu0 %v1286
  %1299 = vmatpush.bf16.msra.mxu0 %v1285
  %1300 = vmatmul.bf16.gmra.mxu0 %v1290
  %v1301 = vpop.f32.mrf.mxu0
  %v1302 = vadd.f32 0.0, %v1301
  %v1303 = vpop.f32.mrf.mxu0
  %1304 = vdwg.mxu0
  %v1305 = vrcp.pop %v1284
  %v1306 = vmul.f32 %v1302, %v1305
  %1307 = vst.msk [vmem:[#allocation3 + $0x18] sm:$0xf] %vm376, %v1306
  %v1308 = vld [vmem:[#allocation2 + $0x1c] sm:$0xf]
  %v1309 = vpack.c.bf16 %v1308, %v1308
  %v1310 = vld [vmem:[#allocation2 + $0x3c] sm:$0xf]
  %v1311 = vpack.c.bf16 %v1310, %v1310
  %v1312 = vld [vmem:[#allocation2 + $0x5c] sm:$0xf]
  %v1313 = vpack.c.bf16 %v1312, %v1312
  %1314 = vxpose.xlu0.c.b16.start [1/8] %v1311, 128
  %1315 = vxpose.xlu0.c.b16.cont [2/8] 0, 128
  %1316 = vxpose.xlu0.c.b16.cont [3/8] 0, 128
  %1317 = vxpose.xlu0.c.b16.cont [4/8] 0, 128
  %1318 = vxpose.xlu0.c.b16.cont [5/8] 0, 128
  %1319 = vxpose.xlu0.c.b16.cont [6/8] 0, 128
  %1320 = vxpose.xlu0.c.b16.cont [7/8] 0, 128
  %1321 = vxpose.xlu0.c.b16.end [8/8] 0, 128
  %v1322 = vpop.trf.xlu0
  %v1323 = vpop.trf.xlu0
  %v1324 = vpop.trf.xlu0
  %v1325 = vpop.trf.xlu0
  %v1326 = vpop.trf.xlu0
  %v1327 = vpop.trf.xlu0
  %v1328 = vpop.trf.xlu0
  %v1329 = vpop.trf.xlu0
  %v1331 = vsel %vm242, %v1322, 0
  %v1334 = vsel %vm242, %v1323, 0
  %v1337 = vsel %vm242, %v1324, 0
  %v1340 = vsel %vm242, %v1325, 0
  %v1343 = vsel %vm255, %v1309, 0
  %1345 = vmatpush.bf16.msra.mxu0 0
  %1346 = vmatpush.bf16.msra.mxu0 0
  %1347 = vmatpush.bf16.msra.mxu0 0
  %1348 = vmatpush.bf16.msra.mxu0 0
  %1349 = vmatpush.bf16.msra.mxu0 0
  %1350 = vmatpush.bf16.msra.mxu0 0
  %1351 = vmatpush.bf16.msra.mxu0 0
  %1352 = vmatpush.bf16.msra.mxu0 %v1343
  %1353 = vmatmul.bf16.gmra.mxu0 %v1331
  %v1354 = vpop.f32.mrf.mxu0
  %v1355 = vadd.f32 0.0, %v1354
  %v1356 = vpop.f32.mrf.mxu0
  %v1357 = vadd.f32 0.0, %v1356
  %1358 = vmatmul.bf16.gmra.mxu0 %v1334
  %v1359 = vpop.f32.mrf.mxu0
  %v1360 = vadd.f32 0.0, %v1359
  %v1361 = vpop.f32.mrf.mxu0
  %v1362 = vadd.f32 0.0, %v1361
  %1363 = vmatmul.bf16.gmra.mxu0 %v1337
  %v1364 = vpop.f32.mrf.mxu0
  %v1365 = vadd.f32 0.0, %v1364
  %v1366 = vpop.f32.mrf.mxu0
  %v1367 = vadd.f32 0.0, %v1366
  %1368 = vmatmul.bf16.gmra.mxu0 %v1340
  %v1369 = vpop.f32.mrf.mxu0
  %v1370 = vadd.f32 0.0, %v1369
  %v1371 = vpop.f32.mrf.mxu0
  %v1372 = vadd.f32 0.0, %v1371
  %1373 = vdwg.mxu0
  %v1374 = vsel %vm207, %v1355, -inf
  %v1375 = vsel %vm207, %v1357, -inf
  %v1376 = vsel %vm207, %v1360, -inf
  %v1377 = vsel %vm207, %v1362, -inf
  %v1378 = vsel %vm207, %v1365, -inf
  %v1379 = vmax.f32 %v1374, %v1378
  %v1380 = vsel %vm207, %v1367, -inf
  %v1381 = vmax.f32 %v1375, %v1380
  %v1382 = vsel %vm207, %v1370, -inf
  %v1383 = vmax.f32 %v1376, %v1382
  %v1384 = vsel %vm207, %v1372, -inf
  %v1385 = vmax.f32 %v1377, %v1384
  %v1386 = vmax.f32 %v1379, %v1381
  %v1387 = vmax.f32 %v1383, %v1385
  %v1388 = vmax.f32 %v1386, %v1387
  %v1389 = vrot.slane %v1388, 4
  %v1390 = vmax.f32 %v1388, %v1389
  %v1391 = vrot.slane %v1390, 2
  %v1392 = vmax.f32 %v1390, %v1391
  %v1393 = vrot.slane %v1392, 1
  %v1394 = vmax.f32 %v1392, %v1393
  %v1395 = vsub.f32 %v1355, %v1394
  %v1396 = vsub.f32 %v1357, %v1394
  %v1397 = vsub.f32 %v1360, %v1394
  %v1398 = vsub.f32 %v1362, %v1394
  %v1399 = vsub.f32 %v1365, %v1394
  %v1400 = vsub.f32 %v1367, %v1394
  %v1401 = vsub.f32 %v1370, %v1394
  %v1402 = vsub.f32 %v1372, %v1394
  %v1403 = vmul.f32 %v1395, 1.442695
  %v1404 = vpow.pop %v1403
  %v1405 = vmul.f32 %v1396, 1.442695
  %v1406 = vpow.pop %v1405
  %v1407 = vmul.f32 %v1397, 1.442695
  %v1408 = vpow.pop %v1407
  %v1409 = vmul.f32 %v1398, 1.442695
  %v1410 = vpow.pop %v1409
  %v1411 = vmul.f32 %v1399, 1.442695
  %v1412 = vpow.pop %v1411
  %v1413 = vmul.f32 %v1400, 1.442695
  %v1414 = vpow.pop %v1413
  %v1415 = vmul.f32 %v1401, 1.442695
  %v1416 = vpow.pop %v1415
  %v1417 = vmul.f32 %v1402, 1.442695
  %v1418 = vpow.pop %v1417
  %v1419 = vsel %vm207, %v1404, 0.0
  %v1420 = vsel %vm207, %v1406, 0.0
  %v1421 = vadd.f32 %v1419, %v1420
  %v1422 = vsel %vm207, %v1408, 0.0
  %v1423 = vadd.f32 %v1421, %v1422
  %v1424 = vsel %vm207, %v1410, 0.0
  %v1425 = vadd.f32 %v1423, %v1424
  %v1426 = vsel %vm207, %v1412, 0.0
  %v1427 = vadd.f32 %v1425, %v1426
  %v1428 = vsel %vm207, %v1414, 0.0
  %v1429 = vadd.f32 %v1427, %v1428
  %v1430 = vsel %vm207, %v1416, 0.0
  %v1431 = vadd.f32 %v1429, %v1430
  %v1432 = vsel %vm207, %v1418, 0.0
  %v1433 = vadd.f32 %v1431, %v1432
  %v1434 = vrot.slane %v1433, 4
  %v1435 = vadd.f32 %v1433, %v1434
  %v1436 = vrot.slane %v1435, 2
  %v1437 = vadd.f32 %v1435, %v1436
  %v1438 = vrot.slane %v1437, 1
  %v1439 = vadd.f32 %v1437, %v1438
  %v1440 = vpack.c.bf16 %v1406, %v1404
  %v1441 = vpack.c.bf16 %v1410, %v1408
  %v1442 = vpack.c.bf16 %v1414, %v1412
  %v1443 = vpack.c.bf16 %v1418, %v1416
  %v1445 = vsel %vm207, %v1313, 0
  %1447 = vmatpush.bf16.msra.mxu0 0
  %1448 = vmatpush.bf16.msra.mxu0 0
  %1449 = vmatpush.bf16.msra.mxu0 0
  %1450 = vmatpush.bf16.msra.mxu0 0
  %1451 = vmatpush.bf16.msra.mxu0 %v1443
  %1452 = vmatpush.bf16.msra.mxu0 %v1442
  %1453 = vmatpush.bf16.msra.mxu0 %v1441
  %1454 = vmatpush.bf16.msra.mxu0 %v1440
  %1455 = vmatmul.bf16.gmra.mxu0 %v1445
  %v1456 = vpop.f32.mrf.mxu0
  %v1457 = vadd.f32 0.0, %v1456
  %v1458 = vpop.f32.mrf.mxu0
  %1459 = vdwg.mxu0
  %v1460 = vrcp.pop %v1439
  %v1461 = vmul.f32 %v1457, %v1460
  %1462 = vst.msk [vmem:[#allocation3 + $0x1c] sm:$0xf] %vm376, %v1461
  %v1463 = vld [vmem:[#allocation3] sm:$0xff]
  %v1464 = vld [vmem:[#allocation3 + $0x8] sm:$0xff]
  %v1465 = vld [vmem:[#allocation3 + $0x10] sm:$0xff]
  %v1466 = vld [vmem:[#allocation3 + $0x18] sm:$0xff]
  %v1467 = vpack.c.bf16 %v1464, %v1463
  %v1468 = vpack.c.bf16 %v1466, %v1465
  %1470 = vset.pattern.permute.xlu0 0
  %1471 = vperm.xlu0 %1470, %v49
  %v1472 = vpop.permute.xlu0 %1471
  %1475 = vset.pattern.permute.xlu0 0
  %1476 = vperm.xlu0 %1475, %v50
  %v1477 = vpop.permute.xlu0 %1476
  %1480 = vset.pattern.permute.xlu0 0
  %1481 = vperm.xlu0 %1480, %v51
  %v1482 = vpop.permute.xlu0 %1481
  %1485 = vset.pattern.permute.xlu0 0
  %1486 = vperm.xlu0 %1485, %v52
  %v1487 = vpop.permute.xlu0 %1486
  %v1493 = vunpack.c.l.b16 %v45
  %v1494 = vunpack.c.l.b16 %v46
  %v1495 = vunpack.c.l.b16 %v47
  %v1496 = vunpack.c.l.b16 %v48
  %v1497 = vpack.c.b16 %v1494, %v1493
  %v1498 = vpack.c.b16 %v1496, %v1495
  %v1500 = vsel %vm149, %v1497, 0
  %v1503 = vsel %vm149, %v1498, 0
  %1505 = vmatpush.bf16.msra.mxu0 0
  %1506 = vmatpush.bf16.msra.mxu0 0
  %1507 = vmatpush.bf16.msra.mxu0 0
  %1508 = vmatpush.bf16.msra.mxu0 0
  %1509 = vmatpush.bf16.msra.mxu0 0
  %1510 = vmatpush.bf16.msra.mxu0 0
  %1511 = vmatpush.bf16.msra.mxu0 %v1468
  %1512 = vmatpush.bf16.msra.mxu0 %v1467
  %1513 = vmatmul.bf16.gmra.mxu0 %v1500
  %v1514 = vpop.f32.mrf.mxu0
  %v1515 = vadd.f32 %v1472, %v1514
  %v1516 = vpop.f32.mrf.mxu0
  %v1517 = vadd.f32 %v1477, %v1516
  %1518 = vmatmul.bf16.gmra.mxu0 %v1503
  %v1519 = vpop.f32.mrf.mxu0
  %v1520 = vadd.f32 %v1482, %v1519
  %v1521 = vpop.f32.mrf.mxu0
  %v1522 = vadd.f32 %v1487, %v1521
  %1523 = vdwg.mxu0
  %1524 = vst.msk [vmem:[%s5] sm:$0xff] %vm207, %v1515
  %1525 = vst.msk [vmem:[%s5 + $0x8] sm:$0xff] %vm207, %v1517
  %1526 = vst.msk [vmem:[%s5 + $0x10] sm:$0xff] %vm207, %v1520
  %1527 = vst.msk [vmem:[%s5 + $0x18] sm:$0xff] %vm207, %v1522
  %s1528 = scalar_lea.vmem %s0, 32
  %v1529 = vld [vmem:[%s1528] sm:$0xff]
  %v1530 = vld [vmem:[%s1528 + $0x8] sm:$0xff]
  %v1531 = vld [vmem:[%s1528 + $0x10] sm:$0xff]
  %v1532 = vld [vmem:[%s1528 + $0x18] sm:$0xff]
  %v1533 = vpack.c.bf16 %v1530, %v1529
  %v1534 = vpack.c.bf16 %v1532, %v1531
  %1535 = vmatpush.bf16.msra.mxu0 0
  %1536 = vmatpush.bf16.msra.mxu0 0
  %1537 = vmatpush.bf16.msra.mxu0 0
  %1538 = vmatpush.bf16.msra.mxu0 0
  %1539 = vmatpush.bf16.msra.mxu0 0
  %1540 = vmatpush.bf16.msra.mxu0 0
  %1541 = vmatpush.bf16.msra.mxu0 %v1534
  %1542 = vmatpush.bf16.msra.mxu0 %v1533
  %1543 = vmatmul.bf16.gmra.mxu0 %v151
  %v1544 = vpop.f32.mrf.mxu0
  %v1545 = vadd.f32 %v62, %v1544
  %v1546 = vpop.f32.mrf.mxu0
  %v1547 = vadd.f32 %v67, %v1546
  %1548 = vmatmul.bf16.gmra.mxu0 %v154
  %v1549 = vpop.f32.mrf.mxu0
  %v1550 = vadd.f32 %v72, %v1549
  %v1551 = vpop.f32.mrf.mxu0
  %v1552 = vadd.f32 %v77, %v1551
  %1553 = vmatmul.bf16.gmra.mxu0 %v157
  %v1554 = vpop.f32.mrf.mxu0
  %v1555 = vadd.f32 %v82, %v1554
  %v1556 = vpop.f32.mrf.mxu0
  %v1557 = vadd.f32 %v87, %v1556
  %1558 = vmatmul.bf16.gmra.mxu0 %v160
  %v1559 = vpop.f32.mrf.mxu0
  %v1560 = vadd.f32 %v92, %v1559
  %v1561 = vpop.f32.mrf.mxu0
  %v1562 = vadd.f32 %v97, %v1561
  %1563 = vmatmul.bf16.gmra.mxu0 %v163
  %v1564 = vpop.f32.mrf.mxu0
  %v1565 = vadd.f32 %v102, %v1564
  %v1566 = vpop.f32.mrf.mxu0
  %v1567 = vadd.f32 %v107, %v1566
  %1568 = vmatmul.bf16.gmra.mxu0 %v166
  %v1569 = vpop.f32.mrf.mxu0
  %v1570 = vadd.f32 %v112, %v1569
  %v1571 = vpop.f32.mrf.mxu0
  %v1572 = vadd.f32 %v117, %v1571
  %1573 = vdwg.mxu0
  %s1574 = scalar_lea.vmem [#allocation2], 96
  %1575 = vst.msk [vmem:[%s1574] sm:$0xff] %vm207, %v1545
  %1576 = vst.msk [vmem:[%s1574 + $0x8] sm:$0xff] %vm207, %v1547
  %1577 = vst.msk [vmem:[%s1574 + $0x10] sm:$0xff] %vm207, %v1550
  %1578 = vst.msk [vmem:[%s1574 + $0x18] sm:$0xff] %vm207, %v1552
  %1579 = vst.msk [vmem:[%s1574 + $0x20] sm:$0xff] %vm207, %v1555
  %1580 = vst.msk [vmem:[%s1574 + $0x28] sm:$0xff] %vm207, %v1557
  %1581 = vst.msk [vmem:[%s1574 + $0x30] sm:$0xff] %vm207, %v1560
  %1582 = vst.msk [vmem:[%s1574 + $0x38] sm:$0xff] %vm207, %v1562
  %1583 = vst.msk [vmem:[%s1574 + $0x40] sm:$0xff] %vm207, %v1565
  %1584 = vst.msk [vmem:[%s1574 + $0x48] sm:$0xff] %vm207, %v1567
  %1585 = vst.msk [vmem:[%s1574 + $0x50] sm:$0xff] %vm207, %v1570
  %1586 = vst.msk [vmem:[%s1574 + $0x58] sm:$0xff] %vm207, %v1572
  %v1587 = vld [vmem:[%s1574] sm:$0xf]
  %v1588 = vpack.c.bf16 %v1587, %v1587
  %v1589 = vld [vmem:[%s1574 + $0x20] sm:$0xf]
  %v1590 = vpack.c.bf16 %v1589, %v1589
  %v1591 = vld [vmem:[%s1574 + $0x40] sm:$0xf]
  %v1592 = vpack.c.bf16 %v1591, %v1591
  %1593 = vxpose.xlu0.c.b16.start [1/8] %v1590, 128
  %1594 = vxpose.xlu0.c.b16.cont [2/8] 0, 128
  %1595 = vxpose.xlu0.c.b16.cont [3/8] 0, 128
  %1596 = vxpose.xlu0.c.b16.cont [4/8] 0, 128
  %1597 = vxpose.xlu0.c.b16.cont [5/8] 0, 128
  %1598 = vxpose.xlu0.c.b16.cont [6/8] 0, 128
  %1599 = vxpose.xlu0.c.b16.cont [7/8] 0, 128
  %1600 = vxpose.xlu0.c.b16.end [8/8] 0, 128
  %v1601 = vpop.trf.xlu0
  %v1602 = vpop.trf.xlu0
  %v1603 = vpop.trf.xlu0
  %v1604 = vpop.trf.xlu0
  %v1605 = vpop.trf.xlu0
  %v1606 = vpop.trf.xlu0
  %v1607 = vpop.trf.xlu0
  %v1608 = vpop.trf.xlu0
  %v1610 = vsel %vm242, %v1601, 0
  %v1613 = vsel %vm242, %v1602, 0
  %v1616 = vsel %vm242, %v1603, 0
  %v1619 = vsel %vm242, %v1604, 0
  %v1622 = vsel %vm255, %v1588, 0
  %1624 = vmatpush.bf16.msra.mxu0 0
  %1625 = vmatpush.bf16.msra.mxu0 0
  %1626 = vmatpush.bf16.msra.mxu0 0
  %1627 = vmatpush.bf16.msra.mxu0 0
  %1628 = vmatpush.bf16.msra.mxu0 0
  %1629 = vmatpush.bf16.msra.mxu0 0
  %1630 = vmatpush.bf16.msra.mxu0 0
  %1631 = vmatpush.bf16.msra.mxu0 %v1622
  %1632 = vmatmul.bf16.gmra.mxu0 %v1610
  %v1633 = vpop.f32.mrf.mxu0
  %v1634 = vadd.f32 0.0, %v1633
  %v1635 = vpop.f32.mrf.mxu0
  %v1636 = vadd.f32 0.0, %v1635
  %1637 = vmatmul.bf16.gmra.mxu0 %v1613
  %v1638 = vpop.f32.mrf.mxu0
  %v1639 = vadd.f32 0.0, %v1638
  %v1640 = vpop.f32.mrf.mxu0
  %v1641 = vadd.f32 0.0, %v1640
  %1642 = vmatmul.bf16.gmra.mxu0 %v1616
  %v1643 = vpop.f32.mrf.mxu0
  %v1644 = vadd.f32 0.0, %v1643
  %v1645 = vpop.f32.mrf.mxu0
  %v1646 = vadd.f32 0.0, %v1645
  %1647 = vmatmul.bf16.gmra.mxu0 %v1619
  %v1648 = vpop.f32.mrf.mxu0
  %v1649 = vadd.f32 0.0, %v1648
  %v1650 = vpop.f32.mrf.mxu0
  %v1651 = vadd.f32 0.0, %v1650
  %1652 = vdwg.mxu0
  %v1653 = vsel %vm207, %v1634, -inf
  %v1654 = vsel %vm207, %v1636, -inf
  %v1655 = vsel %vm207, %v1639, -inf
  %v1656 = vsel %vm207, %v1641, -inf
  %v1657 = vsel %vm207, %v1644, -inf
  %v1658 = vmax.f32 %v1653, %v1657
  %v1659 = vsel %vm207, %v1646, -inf
  %v1660 = vmax.f32 %v1654, %v1659
  %v1661 = vsel %vm207, %v1649, -inf
  %v1662 = vmax.f32 %v1655, %v1661
  %v1663 = vsel %vm207, %v1651, -inf
  %v1664 = vmax.f32 %v1656, %v1663
  %v1665 = vmax.f32 %v1658, %v1660
  %v1666 = vmax.f32 %v1662, %v1664
  %v1667 = vmax.f32 %v1665, %v1666
  %v1668 = vrot.slane %v1667, 4
  %v1669 = vmax.f32 %v1667, %v1668
  %v1670 = vrot.slane %v1669, 2
  %v1671 = vmax.f32 %v1669, %v1670
  %v1672 = vrot.slane %v1671, 1
  %v1673 = vmax.f32 %v1671, %v1672
  %v1674 = vsub.f32 %v1634, %v1673
  %v1675 = vsub.f32 %v1636, %v1673
  %v1676 = vsub.f32 %v1639, %v1673
  %v1677 = vsub.f32 %v1641, %v1673
  %v1678 = vsub.f32 %v1644, %v1673
  %v1679 = vsub.f32 %v1646, %v1673
  %v1680 = vsub.f32 %v1649, %v1673
  %v1681 = vsub.f32 %v1651, %v1673
  %v1682 = vmul.f32 %v1674, 1.442695
  %v1683 = vpow.pop %v1682
  %v1684 = vmul.f32 %v1675, 1.442695
  %v1685 = vpow.pop %v1684
  %v1686 = vmul.f32 %v1676, 1.442695
  %v1687 = vpow.pop %v1686
  %v1688 = vmul.f32 %v1677, 1.442695
  %v1689 = vpow.pop %v1688
  %v1690 = vmul.f32 %v1678, 1.442695
  %v1691 = vpow.pop %v1690
  %v1692 = vmul.f32 %v1679, 1.442695
  %v1693 = vpow.pop %v1692
  %v1694 = vmul.f32 %v1680, 1.442695
  %v1695 = vpow.pop %v1694
  %v1696 = vmul.f32 %v1681, 1.442695
  %v1697 = vpow.pop %v1696
  %v1698 = vsel %vm207, %v1683, 0.0
  %v1699 = vsel %vm207, %v1685, 0.0
  %v1700 = vadd.f32 %v1698, %v1699
  %v1701 = vsel %vm207, %v1687, 0.0
  %v1702 = vadd.f32 %v1700, %v1701
  %v1703 = vsel %vm207, %v1689, 0.0
  %v1704 = vadd.f32 %v1702, %v1703
  %v1705 = vsel %vm207, %v1691, 0.0
  %v1706 = vadd.f32 %v1704, %v1705
  %v1707 = vsel %vm207, %v1693, 0.0
  %v1708 = vadd.f32 %v1706, %v1707
  %v1709 = vsel %vm207, %v1695, 0.0
  %v1710 = vadd.f32 %v1708, %v1709
  %v1711 = vsel %vm207, %v1697, 0.0
  %v1712 = vadd.f32 %v1710, %v1711
  %v1713 = vrot.slane %v1712, 4
  %v1714 = vadd.f32 %v1712, %v1713
  %v1715 = vrot.slane %v1714, 2
  %v1716 = vadd.f32 %v1714, %v1715
  %v1717 = vrot.slane %v1716, 1
  %v1718 = vadd.f32 %v1716, %v1717
  %v1719 = vpack.c.bf16 %v1685, %v1683
  %v1720 = vpack.c.bf16 %v1689, %v1687
  %v1721 = vpack.c.bf16 %v1693, %v1691
  %v1722 = vpack.c.bf16 %v1697, %v1695
  %v1724 = vsel %vm207, %v1592, 0
  %1726 = vmatpush.bf16.msra.mxu0 0
  %1727 = vmatpush.bf16.msra.mxu0 0
  %1728 = vmatpush.bf16.msra.mxu0 0
  %1729 = vmatpush.bf16.msra.mxu0 0
  %1730 = vmatpush.bf16.msra.mxu0 %v1722
  %1731 = vmatpush.bf16.msra.mxu0 %v1721
  %1732 = vmatpush.bf16.msra.mxu0 %v1720
  %1733 = vmatpush.bf16.msra.mxu0 %v1719
  %1734 = vmatmul.bf16.gmra.mxu0 %v1724
  %v1735 = vpop.f32.mrf.mxu0
  %v1736 = vadd.f32 0.0, %v1735
  %v1737 = vpop.f32.mrf.mxu0
  %1738 = vdwg.mxu0
  %v1739 = vrcp.pop %v1718
  %v1740 = vmul.f32 %v1736, %v1739
  %s1741 = scalar_lea.vmem [#allocation3], 32
  %1742 = vst.msk [vmem:[%s1741] sm:$0xf] %vm376, %v1740
  %v1743 = vld [vmem:[%s1574 + $0x4] sm:$0xf]
  %v1744 = vpack.c.bf16 %v1743, %v1743
  %v1745 = vld [vmem:[%s1574 + $0x24] sm:$0xf]
  %v1746 = vpack.c.bf16 %v1745, %v1745
  %v1747 = vld [vmem:[%s1574 + $0x44] sm:$0xf]
  %v1748 = vpack.c.bf16 %v1747, %v1747
  %1749 = vxpose.xlu0.c.b16.start [1/8] %v1746, 128
  %1750 = vxpose.xlu0.c.b16.cont [2/8] 0, 128
  %1751 = vxpose.xlu0.c.b16.cont [3/8] 0, 128
  %1752 = vxpose.xlu0.c.b16.cont [4/8] 0, 128
  %1753 = vxpose.xlu0.c.b16.cont [5/8] 0, 128
  %1754 = vxpose.xlu0.c.b16.cont [6/8] 0, 128
  %1755 = vxpose.xlu0.c.b16.cont [7/8] 0, 128
  %1756 = vxpose.xlu0.c.b16.end [8/8] 0, 128
  %v1757 = vpop.trf.xlu0
  %v1758 = vpop.trf.xlu0
  %v1759 = vpop.trf.xlu0
  %v1760 = vpop.trf.xlu0
  %v1761 = vpop.trf.xlu0
  %v1762 = vpop.trf.xlu0
  %v1763 = vpop.trf.xlu0
  %v1764 = vpop.trf.xlu0
  %v1766 = vsel %vm242, %v1757, 0
  %v1769 = vsel %vm242, %v1758, 0
  %v1772 = vsel %vm242, %v1759, 0
  %v1775 = vsel %vm242, %v1760, 0
  %v1778 = vsel %vm255, %v1744, 0
  %1780 = vmatpush.bf16.msra.mxu0 0
  %1781 = vmatpush.bf16.msra.mxu0 0
  %1782 = vmatpush.bf16.msra.mxu0 0
  %1783 = vmatpush.bf16.msra.mxu0 0
  %1784 = vmatpush.bf16.msra.mxu0 0
  %1785 = vmatpush.bf16.msra.mxu0 0
  %1786 = vmatpush.bf16.msra.mxu0 0
  %1787 = vmatpush.bf16.msra.mxu0 %v1778
  %1788 = vmatmul.bf16.gmra.mxu0 %v1766
  %v1789 = vpop.f32.mrf.mxu0
  %v1790 = vadd.f32 0.0, %v1789
  %v1791 = vpop.f32.mrf.mxu0
  %v1792 = vadd.f32 0.0, %v1791
  %1793 = vmatmul.bf16.gmra.mxu0 %v1769
  %v1794 = vpop.f32.mrf.mxu0
  %v1795 = vadd.f32 0.0, %v1794
  %v1796 = vpop.f32.mrf.mxu0
  %v1797 = vadd.f32 0.0, %v1796
  %1798 = vmatmul.bf16.gmra.mxu0 %v1772
  %v1799 = vpop.f32.mrf.mxu0
  %v1800 = vadd.f32 0.0, %v1799
  %v1801 = vpop.f32.mrf.mxu0
  %v1802 = vadd.f32 0.0, %v1801
  %1803 = vmatmul.bf16.gmra.mxu0 %v1775
  %v1804 = vpop.f32.mrf.mxu0
  %v1805 = vadd.f32 0.0, %v1804
  %v1806 = vpop.f32.mrf.mxu0
  %v1807 = vadd.f32 0.0, %v1806
  %1808 = vdwg.mxu0
  %v1809 = vsel %vm207, %v1790, -inf
  %v1810 = vsel %vm207, %v1792, -inf
  %v1811 = vsel %vm207, %v1795, -inf
  %v1812 = vsel %vm207, %v1797, -inf
  %v1813 = vsel %vm207, %v1800, -inf
  %v1814 = vmax.f32 %v1809, %v1813
  %v1815 = vsel %vm207, %v1802, -inf
  %v1816 = vmax.f32 %v1810, %v1815
  %v1817 = vsel %vm207, %v1805, -inf
  %v1818 = vmax.f32 %v1811, %v1817
  %v1819 = vsel %vm207, %v1807, -inf
  %v1820 = vmax.f32 %v1812, %v1819
  %v1821 = vmax.f32 %v1814, %v1816
  %v1822 = vmax.f32 %v1818, %v1820
  %v1823 = vmax.f32 %v1821, %v1822
  %v1824 = vrot.slane %v1823, 4
  %v1825 = vmax.f32 %v1823, %v1824
  %v1826 = vrot.slane %v1825, 2
  %v1827 = vmax.f32 %v1825, %v1826
  %v1828 = vrot.slane %v1827, 1
  %v1829 = vmax.f32 %v1827, %v1828
  %v1830 = vsub.f32 %v1790, %v1829
  %v1831 = vsub.f32 %v1792, %v1829
  %v1832 = vsub.f32 %v1795, %v1829
  %v1833 = vsub.f32 %v1797, %v1829
  %v1834 = vsub.f32 %v1800, %v1829
  %v1835 = vsub.f32 %v1802, %v1829
  %v1836 = vsub.f32 %v1805, %v1829
  %v1837 = vsub.f32 %v1807, %v1829
  %v1838 = vmul.f32 %v1830, 1.442695
  %v1839 = vpow.pop %v1838
  %v1840 = vmul.f32 %v1831, 1.442695
  %v1841 = vpow.pop %v1840
  %v1842 = vmul.f32 %v1832, 1.442695
  %v1843 = vpow.pop %v1842
  %v1844 = vmul.f32 %v1833, 1.442695
  %v1845 = vpow.pop %v1844
  %v1846 = vmul.f32 %v1834, 1.442695
  %v1847 = vpow.pop %v1846
  %v1848 = vmul.f32 %v1835, 1.442695
  %v1849 = vpow.pop %v1848
  %v1850 = vmul.f32 %v1836, 1.442695
  %v1851 = vpow.pop %v1850
  %v1852 = vmul.f32 %v1837, 1.442695
  %v1853 = vpow.pop %v1852
  %v1854 = vsel %vm207, %v1839, 0.0
  %v1855 = vsel %vm207, %v1841, 0.0
  %v1856 = vadd.f32 %v1854, %v1855
  %v1857 = vsel %vm207, %v1843, 0.0
  %v1858 = vadd.f32 %v1856, %v1857
  %v1859 = vsel %vm207, %v1845, 0.0
  %v1860 = vadd.f32 %v1858, %v1859
  %v1861 = vsel %vm207, %v1847, 0.0
  %v1862 = vadd.f32 %v1860, %v1861
  %v1863 = vsel %vm207, %v1849, 0.0
  %v1864 = vadd.f32 %v1862, %v1863
  %v1865 = vsel %vm207, %v1851, 0.0
  %v1866 = vadd.f32 %v1864, %v1865
  %v1867 = vsel %vm207, %v1853, 0.0
  %v1868 = vadd.f32 %v1866, %v1867
  %v1869 = vrot.slane %v1868, 4
  %v1870 = vadd.f32 %v1868, %v1869
  %v1871 = vrot.slane %v1870, 2
  %v1872 = vadd.f32 %v1870, %v1871
  %v1873 = vrot.slane %v1872, 1
  %v1874 = vadd.f32 %v1872, %v1873
  %v1875 = vpack.c.bf16 %v1841, %v1839
  %v1876 = vpack.c.bf16 %v1845, %v1843
  %v1877 = vpack.c.bf16 %v1849, %v1847
  %v1878 = vpack.c.bf16 %v1853, %v1851
  %v1880 = vsel %vm207, %v1748, 0
  %1882 = vmatpush.bf16.msra.mxu0 0
  %1883 = vmatpush.bf16.msra.mxu0 0
  %1884 = vmatpush.bf16.msra.mxu0 0
  %1885 = vmatpush.bf16.msra.mxu0 0
  %1886 = vmatpush.bf16.msra.mxu0 %v1878
  %1887 = vmatpush.bf16.msra.mxu0 %v1877
  %1888 = vmatpush.bf16.msra.mxu0 %v1876
  %1889 = vmatpush.bf16.msra.mxu0 %v1875
  %1890 = vmatmul.bf16.gmra.mxu0 %v1880
  %v1891 = vpop.f32.mrf.mxu0
  %v1892 = vadd.f32 0.0, %v1891
  %v1893 = vpop.f32.mrf.mxu0
  %1894 = vdwg.mxu0
  %v1895 = vrcp.pop %v1874
  %v1896 = vmul.f32 %v1892, %v1895
  %1897 = vst.msk [vmem:[%s1741 + $0x4] sm:$0xf] %vm376, %v1896
  %v1898 = vld [vmem:[%s1574 + $0x8] sm:$0xf]
  %v1899 = vpack.c.bf16 %v1898, %v1898
  %v1900 = vld [vmem:[%s1574 + $0x28] sm:$0xf]
  %v1901 = vpack.c.bf16 %v1900, %v1900
  %v1902 = vld [vmem:[%s1574 + $0x48] sm:$0xf]
  %v1903 = vpack.c.bf16 %v1902, %v1902
  %1904 = vxpose.xlu0.c.b16.start [1/8] %v1901, 128
  %1905 = vxpose.xlu0.c.b16.cont [2/8] 0, 128
  %1906 = vxpose.xlu0.c.b16.cont [3/8] 0, 128
  %1907 = vxpose.xlu0.c.b16.cont [4/8] 0, 128
  %1908 = vxpose.xlu0.c.b16.cont [5/8] 0, 128
  %1909 = vxpose.xlu0.c.b16.cont [6/8] 0, 128
  %1910 = vxpose.xlu0.c.b16.cont [7/8] 0, 128
  %1911 = vxpose.xlu0.c.b16.end [8/8] 0, 128
  %v1912 = vpop.trf.xlu0
  %v1913 = vpop.trf.xlu0
  %v1914 = vpop.trf.xlu0
  %v1915 = vpop.trf.xlu0
  %v1916 = vpop.trf.xlu0
  %v1917 = vpop.trf.xlu0
  %v1918 = vpop.trf.xlu0
  %v1919 = vpop.trf.xlu0
  %v1921 = vsel %vm242, %v1912, 0
  %v1924 = vsel %vm242, %v1913, 0
  %v1927 = vsel %vm242, %v1914, 0
  %v1930 = vsel %vm242, %v1915, 0
  %v1933 = vsel %vm255, %v1899, 0
  %1935 = vmatpush.bf16.msra.mxu0 0
  %1936 = vmatpush.bf16.msra.mxu0 0
  %1937 = vmatpush.bf16.msra.mxu0 0
  %1938 = vmatpush.bf16.msra.mxu0 0
  %1939 = vmatpush.bf16.msra.mxu0 0
  %1940 = vmatpush.bf16.msra.mxu0 0
  %1941 = vmatpush.bf16.msra.mxu0 0
  %1942 = vmatpush.bf16.msra.mxu0 %v1933
  %1943 = vmatmul.bf16.gmra.mxu0 %v1921
  %v1944 = vpop.f32.mrf.mxu0
  %v1945 = vadd.f32 0.0, %v1944
  %v1946 = vpop.f32.mrf.mxu0
  %v1947 = vadd.f32 0.0, %v1946
  %1948 = vmatmul.bf16.gmra.mxu0 %v1924
  %v1949 = vpop.f32.mrf.mxu0
  %v1950 = vadd.f32 0.0, %v1949
  %v1951 = vpop.f32.mrf.mxu0
  %v1952 = vadd.f32 0.0, %v1951
  %1953 = vmatmul.bf16.gmra.mxu0 %v1927
  %v1954 = vpop.f32.mrf.mxu0
  %v1955 = vadd.f32 0.0, %v1954
  %v1956 = vpop.f32.mrf.mxu0
  %v1957 = vadd.f32 0.0, %v1956
  %1958 = vmatmul.bf16.gmra.mxu0 %v1930
  %v1959 = vpop.f32.mrf.mxu0
  %v1960 = vadd.f32 0.0, %v1959
  %v1961 = vpop.f32.mrf.mxu0
  %v1962 = vadd.f32 0.0, %v1961
  %1963 = vdwg.mxu0
  %v1964 = vsel %vm207, %v1945, -inf
  %v1965 = vsel %vm207, %v1947, -inf
  %v1966 = vsel %vm207, %v1950, -inf
  %v1967 = vsel %vm207, %v1952, -inf
  %v1968 = vsel %vm207, %v1955, -inf
  %v1969 = vmax.f32 %v1964, %v1968
  %v1970 = vsel %vm207, %v1957, -inf
  %v1971 = vmax.f32 %v1965, %v1970
  %v1972 = vsel %vm207, %v1960, -inf
  %v1973 = vmax.f32 %v1966, %v1972
  %v1974 = vsel %vm207, %v1962, -inf
  %v1975 = vmax.f32 %v1967, %v1974
  %v1976 = vmax.f32 %v1969, %v1971
  %v1977 = vmax.f32 %v1973, %v1975
  %v1978 = vmax.f32 %v1976, %v1977
  %v1979 = vrot.slane %v1978, 4
  %v1980 = vmax.f32 %v1978, %v1979
  %v1981 = vrot.slane %v1980, 2
  %v1982 = vmax.f32 %v1980, %v1981
  %v1983 = vrot.slane %v1982, 1
  %v1984 = vmax.f32 %v1982, %v1983
  %v1985 = vsub.f32 %v1945, %v1984
  %v1986 = vsub.f32 %v1947, %v1984
  %v1987 = vsub.f32 %v1950, %v1984
  %v1988 = vsub.f32 %v1952, %v1984
  %v1989 = vsub.f32 %v1955, %v1984
  %v1990 = vsub.f32 %v1957, %v1984
  %v1991 = vsub.f32 %v1960, %v1984
  %v1992 = vsub.f32 %v1962, %v1984
  %v1993 = vmul.f32 %v1985, 1.442695
  %v1994 = vpow.pop %v1993
  %v1995 = vmul.f32 %v1986, 1.442695
  %v1996 = vpow.pop %v1995
  %v1997 = vmul.f32 %v1987, 1.442695
  %v1998 = vpow.pop %v1997
  %v1999 = vmul.f32 %v1988, 1.442695
  %v2000 = vpow.pop %v1999
  %v2001 = vmul.f32 %v1989, 1.442695
  %v2002 = vpow.pop %v2001
  %v2003 = vmul.f32 %v1990, 1.442695
  %v2004 = vpow.pop %v2003
  %v2005 = vmul.f32 %v1991, 1.442695
  %v2006 = vpow.pop %v2005
  %v2007 = vmul.f32 %v1992, 1.442695
  %v2008 = vpow.pop %v2007
  %v2009 = vsel %vm207, %v1994, 0.0
  %v2010 = vsel %vm207, %v1996, 0.0
  %v2011 = vadd.f32 %v2009, %v2010
  %v2012 = vsel %vm207, %v1998, 0.0
  %v2013 = vadd.f32 %v2011, %v2012
  %v2014 = vsel %vm207, %v2000, 0.0
  %v2015 = vadd.f32 %v2013, %v2014
  %v2016 = vsel %vm207, %v2002, 0.0
  %v2017 = vadd.f32 %v2015, %v2016
  %v2018 = vsel %vm207, %v2004, 0.0
  %v2019 = vadd.f32 %v2017, %v2018
  %v2020 = vsel %vm207, %v2006, 0.0
  %v2021 = vadd.f32 %v2019, %v2020
  %v2022 = vsel %vm207, %v2008, 0.0
  %v2023 = vadd.f32 %v2021, %v2022
  %v2024 = vrot.slane %v2023, 4
  %v2025 = vadd.f32 %v2023, %v2024
  %v2026 = vrot.slane %v2025, 2
  %v2027 = vadd.f32 %v2025, %v2026
  %v2028 = vrot.slane %v2027, 1
  %v2029 = vadd.f32 %v2027, %v2028
  %v2030 = vpack.c.bf16 %v1996, %v1994
  %v2031 = vpack.c.bf16 %v2000, %v1998
  %v2032 = vpack.c.bf16 %v2004, %v2002
  %v2033 = vpack.c.bf16 %v2008, %v2006
  %v2035 = vsel %vm207, %v1903, 0
  %2037 = vmatpush.bf16.msra.mxu0 0
  %2038 = vmatpush.bf16.msra.mxu0 0
  %2039 = vmatpush.bf16.msra.mxu0 0
  %2040 = vmatpush.bf16.msra.mxu0 0
  %2041 = vmatpush.bf16.msra.mxu0 %v2033
  %2042 = vmatpush.bf16.msra.mxu0 %v2032
  %2043 = vmatpush.bf16.msra.mxu0 %v2031
  %2044 = vmatpush.bf16.msra.mxu0 %v2030
  %2045 = vmatmul.bf16.gmra.mxu0 %v2035
  %v2046 = vpop.f32.mrf.mxu0
  %v2047 = vadd.f32 0.0, %v2046
  %v2048 = vpop.f32.mrf.mxu0
  %2049 = vdwg.mxu0
  %v2050 = vrcp.pop %v2029
  %v2051 = vmul.f32 %v2047, %v2050
  %2052 = vst.msk [vmem:[%s1741 + $0x8] sm:$0xf] %vm376, %v2051
  %v2053 = vld [vmem:[%s1574 + $0xc] sm:$0xf]
  %v2054 = vpack.c.bf16 %v2053, %v2053
  %v2055 = vld [vmem:[%s1574 + $0x2c] sm:$0xf]
  %v2056 = vpack.c.bf16 %v2055, %v2055
  %v2057 = vld [vmem:[%s1574 + $0x4c] sm:$0xf]
  %v2058 = vpack.c.bf16 %v2057, %v2057
  %2059 = vxpose.xlu0.c.b16.start [1/8] %v2056, 128
  %2060 = vxpose.xlu0.c.b16.cont [2/8] 0, 128
  %2061 = vxpose.xlu0.c.b16.cont [3/8] 0, 128
  %2062 = vxpose.xlu0.c.b16.cont [4/8] 0, 128
  %2063 = vxpose.xlu0.c.b16.cont [5/8] 0, 128
  %2064 = vxpose.xlu0.c.b16.cont [6/8] 0, 128
  %2065 = vxpose.xlu0.c.b16.cont [7/8] 0, 128
  %2066 = vxpose.xlu0.c.b16.end [8/8] 0, 128
  %v2067 = vpop.trf.xlu0
  %v2068 = vpop.trf.xlu0
  %v2069 = vpop.trf.xlu0
  %v2070 = vpop.trf.xlu0
  %v2071 = vpop.trf.xlu0
  %v2072 = vpop.trf.xlu0
  %v2073 = vpop.trf.xlu0
  %v2074 = vpop.trf.xlu0
  %v2076 = vsel %vm242, %v2067, 0
  %v2079 = vsel %vm242, %v2068, 0
  %v2082 = vsel %vm242, %v2069, 0
  %v2085 = vsel %vm242, %v2070, 0
  %v2088 = vsel %vm255, %v2054, 0
  %2090 = vmatpush.bf16.msra.mxu0 0
  %2091 = vmatpush.bf16.msra.mxu0 0
  %2092 = vmatpush.bf16.msra.mxu0 0
  %2093 = vmatpush.bf16.msra.mxu0 0
  %2094 = vmatpush.bf16.msra.mxu0 0
  %2095 = vmatpush.bf16.msra.mxu0 0
  %2096 = vmatpush.bf16.msra.mxu0 0
  %2097 = vmatpush.bf16.msra.mxu0 %v2088
  %2098 = vmatmul.bf16.gmra.mxu0 %v2076
  %v2099 = vpop.f32.mrf.mxu0
  %v2100 = vadd.f32 0.0, %v2099
  %v2101 = vpop.f32.mrf.mxu0
  %v2102 = vadd.f32 0.0, %v2101
  %2103 = vmatmul.bf16.gmra.mxu0 %v2079
  %v2104 = vpop.f32.mrf.mxu0
  %v2105 = vadd.f32 0.0, %v2104
  %v2106 = vpop.f32.mrf.mxu0
  %v2107 = vadd.f32 0.0, %v2106
  %2108 = vmatmul.bf16.gmra.mxu0 %v2082
  %v2109 = vpop.f32.mrf.mxu0
  %v2110 = vadd.f32 0.0, %v2109
  %v2111 = vpop.f32.mrf.mxu0
  %v2112 = vadd.f32 0.0, %v2111
  %2113 = vmatmul.bf16.gmra.mxu0 %v2085
  %v2114 = vpop.f32.mrf.mxu0
  %v2115 = vadd.f32 0.0, %v2114
  %v2116 = vpop.f32.mrf.mxu0
  %v2117 = vadd.f32 0.0, %v2116
  %2118 = vdwg.mxu0
  %v2119 = vsel %vm207, %v2100, -inf
  %v2120 = vsel %vm207, %v2102, -inf
  %v2121 = vsel %vm207, %v2105, -inf
  %v2122 = vsel %vm207, %v2107, -inf
  %v2123 = vsel %vm207, %v2110, -inf
  %v2124 = vmax.f32 %v2119, %v2123
  %v2125 = vsel %vm207, %v2112, -inf
  %v2126 = vmax.f32 %v2120, %v2125
  %v2127 = vsel %vm207, %v2115, -inf
  %v2128 = vmax.f32 %v2121, %v2127
  %v2129 = vsel %vm207, %v2117, -inf
  %v2130 = vmax.f32 %v2122, %v2129
  %v2131 = vmax.f32 %v2124, %v2126
  %v2132 = vmax.f32 %v2128, %v2130
  %v2133 = vmax.f32 %v2131, %v2132
  %v2134 = vrot.slane %v2133, 4
  %v2135 = vmax.f32 %v2133, %v2134
  %v2136 = vrot.slane %v2135, 2
  %v2137 = vmax.f32 %v2135, %v2136
  %v2138 = vrot.slane %v2137, 1
  %v2139 = vmax.f32 %v2137, %v2138
  %v2140 = vsub.f32 %v2100, %v2139
  %v2141 = vsub.f32 %v2102, %v2139
  %v2142 = vsub.f32 %v2105, %v2139
  %v2143 = vsub.f32 %v2107, %v2139
  %v2144 = vsub.f32 %v2110, %v2139
  %v2145 = vsub.f32 %v2112, %v2139
  %v2146 = vsub.f32 %v2115, %v2139
  %v2147 = vsub.f32 %v2117, %v2139
  %v2148 = vmul.f32 %v2140, 1.442695
  %v2149 = vpow.pop %v2148
  %v2150 = vmul.f32 %v2141, 1.442695
  %v2151 = vpow.pop %v2150
  %v2152 = vmul.f32 %v2142, 1.442695
  %v2153 = vpow.pop %v2152
  %v2154 = vmul.f32 %v2143, 1.442695
  %v2155 = vpow.pop %v2154
  %v2156 = vmul.f32 %v2144, 1.442695
  %v2157 = vpow.pop %v2156
  %v2158 = vmul.f32 %v2145, 1.442695
  %v2159 = vpow.pop %v2158
  %v2160 = vmul.f32 %v2146, 1.442695
  %v2161 = vpow.pop %v2160
  %v2162 = vmul.f32 %v2147, 1.442695
  %v2163 = vpow.pop %v2162
  %v2164 = vsel %vm207, %v2149, 0.0
  %v2165 = vsel %vm207, %v2151, 0.0
  %v2166 = vadd.f32 %v2164, %v2165
  %v2167 = vsel %vm207, %v2153, 0.0
  %v2168 = vadd.f32 %v2166, %v2167
  %v2169 = vsel %vm207, %v2155, 0.0
  %v2170 = vadd.f32 %v2168, %v2169
  %v2171 = vsel %vm207, %v2157, 0.0
  %v2172 = vadd.f32 %v2170, %v2171
  %v2173 = vsel %vm207, %v2159, 0.0
  %v2174 = vadd.f32 %v2172, %v2173
  %v2175 = vsel %vm207, %v2161, 0.0
  %v2176 = vadd.f32 %v2174, %v2175
  %v2177 = vsel %vm207, %v2163, 0.0
  %v2178 = vadd.f32 %v2176, %v2177
  %v2179 = vrot.slane %v2178, 4
  %v2180 = vadd.f32 %v2178, %v2179
  %v2181 = vrot.slane %v2180, 2
  %v2182 = vadd.f32 %v2180, %v2181
  %v2183 = vrot.slane %v2182, 1
  %v2184 = vadd.f32 %v2182, %v2183
  %v2185 = vpack.c.bf16 %v2151, %v2149
  %v2186 = vpack.c.bf16 %v2155, %v2153
  %v2187 = vpack.c.bf16 %v2159, %v2157
  %v2188 = vpack.c.bf16 %v2163, %v2161
  %v2190 = vsel %vm207, %v2058, 0
  %2192 = vmatpush.bf16.msra.mxu0 0
  %2193 = vmatpush.bf16.msra.mxu0 0
  %2194 = vmatpush.bf16.msra.mxu0 0
  %2195 = vmatpush.bf16.msra.mxu0 0
  %2196 = vmatpush.bf16.msra.mxu0 %v2188
  %2197 = vmatpush.bf16.msra.mxu0 %v2187
  %2198 = vmatpush.bf16.msra.mxu0 %v2186
  %2199 = vmatpush.bf16.msra.mxu0 %v2185
  %2200 = vmatmul.bf16.gmra.mxu0 %v2190
  %v2201 = vpop.f32.mrf.mxu0
  %v2202 = vadd.f32 0.0, %v2201
  %v2203 = vpop.f32.mrf.mxu0
  %2204 = vdwg.mxu0
  %v2205 = vrcp.pop %v2184
  %v2206 = vmul.f32 %v2202, %v2205
  %2207 = vst.msk [vmem:[%s1741 + $0xc] sm:$0xf] %vm376, %v2206
  %v2208 = vld [vmem:[%s1574 + $0x10] sm:$0xf]
  %v2209 = vpack.c.bf16 %v2208, %v2208
  %v2210 = vld [vmem:[%s1574 + $0x30] sm:$0xf]
  %v2211 = vpack.c.bf16 %v2210, %v2210
  %v2212 = vld [vmem:[%s1574 + $0x50] sm:$0xf]
  %v2213 = vpack.c.bf16 %v2212, %v2212
  %2214 = vxpose.xlu0.c.b16.start [1/8] %v2211, 128
  %2215 = vxpose.xlu0.c.b16.cont [2/8] 0, 128
  %2216 = vxpose.xlu0.c.b16.cont [3/8] 0, 128
  %2217 = vxpose.xlu0.c.b16.cont [4/8] 0, 128
  %2218 = vxpose.xlu0.c.b16.cont [5/8] 0, 128
  %2219 = vxpose.xlu0.c.b16.cont [6/8] 0, 128
  %2220 = vxpose.xlu0.c.b16.cont [7/8] 0, 128
  %2221 = vxpose.xlu0.c.b16.end [8/8] 0, 128
  %v2222 = vpop.trf.xlu0
  %v2223 = vpop.trf.xlu0
  %v2224 = vpop.trf.xlu0
  %v2225 = vpop.trf.xlu0
  %v2226 = vpop.trf.xlu0
  %v2227 = vpop.trf.xlu0
  %v2228 = vpop.trf.xlu0
  %v2229 = vpop.trf.xlu0
  %v2231 = vsel %vm242, %v2222, 0
  %v2234 = vsel %vm242, %v2223, 0
  %v2237 = vsel %vm242, %v2224, 0
  %v2240 = vsel %vm242, %v2225, 0
  %v2243 = vsel %vm255, %v2209, 0
  %2245 = vmatpush.bf16.msra.mxu0 0
  %2246 = vmatpush.bf16.msra.mxu0 0
  %2247 = vmatpush.bf16.msra.mxu0 0
  %2248 = vmatpush.bf16.msra.mxu0 0
  %2249 = vmatpush.bf16.msra.mxu0 0
  %2250 = vmatpush.bf16.msra.mxu0 0
  %2251 = vmatpush.bf16.msra.mxu0 0
  %2252 = vmatpush.bf16.msra.mxu0 %v2243
  %2253 = vmatmul.bf16.gmra.mxu0 %v2231
  %v2254 = vpop.f32.mrf.mxu0
  %v2255 = vadd.f32 0.0, %v2254
  %v2256 = vpop.f32.mrf.mxu0
  %v2257 = vadd.f32 0.0, %v2256
  %2258 = vmatmul.bf16.gmra.mxu0 %v2234
  %v2259 = vpop.f32.mrf.mxu0
  %v2260 = vadd.f32 0.0, %v2259
  %v2261 = vpop.f32.mrf.mxu0
  %v2262 = vadd.f32 0.0, %v2261
  %2263 = vmatmul.bf16.gmra.mxu0 %v2237
  %v2264 = vpop.f32.mrf.mxu0
  %v2265 = vadd.f32 0.0, %v2264
  %v2266 = vpop.f32.mrf.mxu0
  %v2267 = vadd.f32 0.0, %v2266
  %2268 = vmatmul.bf16.gmra.mxu0 %v2240
  %v2269 = vpop.f32.mrf.mxu0
  %v2270 = vadd.f32 0.0, %v2269
  %v2271 = vpop.f32.mrf.mxu0
  %v2272 = vadd.f32 0.0, %v2271
  %2273 = vdwg.mxu0
  %v2274 = vsel %vm207, %v2255, -inf
  %v2275 = vsel %vm207, %v2257, -inf
  %v2276 = vsel %vm207, %v2260, -inf
  %v2277 = vsel %vm207, %v2262, -inf
  %v2278 = vsel %vm207, %v2265, -inf
  %v2279 = vmax.f32 %v2274, %v2278
  %v2280 = vsel %vm207, %v2267, -inf
  %v2281 = vmax.f32 %v2275, %v2280
  %v2282 = vsel %vm207, %v2270, -inf
  %v2283 = vmax.f32 %v2276, %v2282
  %v2284 = vsel %vm207, %v2272, -inf
  %v2285 = vmax.f32 %v2277, %v2284
  %v2286 = vmax.f32 %v2279, %v2281
  %v2287 = vmax.f32 %v2283, %v2285
  %v2288 = vmax.f32 %v2286, %v2287
  %v2289 = vrot.slane %v2288, 4
  %v2290 = vmax.f32 %v2288, %v2289
  %v2291 = vrot.slane %v2290, 2
  %v2292 = vmax.f32 %v2290, %v2291
  %v2293 = vrot.slane %v2292, 1
  %v2294 = vmax.f32 %v2292, %v2293
  %v2295 = vsub.f32 %v2255, %v2294
  %v2296 = vsub.f32 %v2257, %v2294
  %v2297 = vsub.f32 %v2260, %v2294
  %v2298 = vsub.f32 %v2262, %v2294
  %v2299 = vsub.f32 %v2265, %v2294
  %v2300 = vsub.f32 %v2267, %v2294
  %v2301 = vsub.f32 %v2270, %v2294
  %v2302 = vsub.f32 %v2272, %v2294
  %v2303 = vmul.f32 %v2295, 1.442695
  %v2304 = vpow.pop %v2303
  %v2305 = vmul.f32 %v2296, 1.442695
  %v2306 = vpow.pop %v2305
  %v2307 = vmul.f32 %v2297, 1.442695
  %v2308 = vpow.pop %v2307
  %v2309 = vmul.f32 %v2298, 1.442695
  %v2310 = vpow.pop %v2309
  %v2311 = vmul.f32 %v2299, 1.442695
  %v2312 = vpow.pop %v2311
  %v2313 = vmul.f32 %v2300, 1.442695
  %v2314 = vpow.pop %v2313
  %v2315 = vmul.f32 %v2301, 1.442695
  %v2316 = vpow.pop %v2315
  %v2317 = vmul.f32 %v2302, 1.442695
  %v2318 = vpow.pop %v2317
  %v2319 = vsel %vm207, %v2304, 0.0
  %v2320 = vsel %vm207, %v2306, 0.0
  %v2321 = vadd.f32 %v2319, %v2320
  %v2322 = vsel %vm207, %v2308, 0.0
  %v2323 = vadd.f32 %v2321, %v2322
  %v2324 = vsel %vm207, %v2310, 0.0
  %v2325 = vadd.f32 %v2323, %v2324
  %v2326 = vsel %vm207, %v2312, 0.0
  %v2327 = vadd.f32 %v2325, %v2326
  %v2328 = vsel %vm207, %v2314, 0.0
  %v2329 = vadd.f32 %v2327, %v2328
  %v2330 = vsel %vm207, %v2316, 0.0
  %v2331 = vadd.f32 %v2329, %v2330
  %v2332 = vsel %vm207, %v2318, 0.0
  %v2333 = vadd.f32 %v2331, %v2332
  %v2334 = vrot.slane %v2333, 4
  %v2335 = vadd.f32 %v2333, %v2334
  %v2336 = vrot.slane %v2335, 2
  %v2337 = vadd.f32 %v2335, %v2336
  %v2338 = vrot.slane %v2337, 1
  %v2339 = vadd.f32 %v2337, %v2338
  %v2340 = vpack.c.bf16 %v2306, %v2304
  %v2341 = vpack.c.bf16 %v2310, %v2308
  %v2342 = vpack.c.bf16 %v2314, %v2312
  %v2343 = vpack.c.bf16 %v2318, %v2316
  %v2345 = vsel %vm207, %v2213, 0
  %2347 = vmatpush.bf16.msra.mxu0 0
  %2348 = vmatpush.bf16.msra.mxu0 0
  %2349 = vmatpush.bf16.msra.mxu0 0
  %2350 = vmatpush.bf16.msra.mxu0 0
  %2351 = vmatpush.bf16.msra.mxu0 %v2343
  %2352 = vmatpush.bf16.msra.mxu0 %v2342
  %2353 = vmatpush.bf16.msra.mxu0 %v2341
  %2354 = vmatpush.bf16.msra.mxu0 %v2340
  %2355 = vmatmul.bf16.gmra.mxu0 %v2345
  %v2356 = vpop.f32.mrf.mxu0
  %v2357 = vadd.f32 0.0, %v2356
  %v2358 = vpop.f32.mrf.mxu0
  %2359 = vdwg.mxu0
  %v2360 = vrcp.pop %v2339
  %v2361 = vmul.f32 %v2357, %v2360
  %2362 = vst.msk [vmem:[%s1741 + $0x10] sm:$0xf] %vm376, %v2361
  %v2363 = vld [vmem:[%s1574 + $0x14] sm:$0xf]
  %v2364 = vpack.c.bf16 %v2363, %v2363
  %v2365 = vld [vmem:[%s1574 + $0x34] sm:$0xf]
  %v2366 = vpack.c.bf16 %v2365, %v2365
  %v2367 = vld [vmem:[%s1574 + $0x54] sm:$0xf]
  %v2368 = vpack.c.bf16 %v2367, %v2367
  %2369 = vxpose.xlu0.c.b16.start [1/8] %v2366, 128
  %2370 = vxpose.xlu0.c.b16.cont [2/8] 0, 128
  %2371 = vxpose.xlu0.c.b16.cont [3/8] 0, 128
  %2372 = vxpose.xlu0.c.b16.cont [4/8] 0, 128
  %2373 = vxpose.xlu0.c.b16.cont [5/8] 0, 128
  %2374 = vxpose.xlu0.c.b16.cont [6/8] 0, 128
  %2375 = vxpose.xlu0.c.b16.cont [7/8] 0, 128
  %2376 = vxpose.xlu0.c.b16.end [8/8] 0, 128
  %v2377 = vpop.trf.xlu0
  %v2378 = vpop.trf.xlu0
  %v2379 = vpop.trf.xlu0
  %v2380 = vpop.trf.xlu0
  %v2381 = vpop.trf.xlu0
  %v2382 = vpop.trf.xlu0
  %v2383 = vpop.trf.xlu0
  %v2384 = vpop.trf.xlu0
  %v2386 = vsel %vm242, %v2377, 0
  %v2389 = vsel %vm242, %v2378, 0
  %v2392 = vsel %vm242, %v2379, 0
  %v2395 = vsel %vm242, %v2380, 0
  %v2398 = vsel %vm255, %v2364, 0
  %2400 = vmatpush.bf16.msra.mxu0 0
  %2401 = vmatpush.bf16.msra.mxu0 0
  %2402 = vmatpush.bf16.msra.mxu0 0
  %2403 = vmatpush.bf16.msra.mxu0 0
  %2404 = vmatpush.bf16.msra.mxu0 0
  %2405 = vmatpush.bf16.msra.mxu0 0
  %2406 = vmatpush.bf16.msra.mxu0 0
  %2407 = vmatpush.bf16.msra.mxu0 %v2398
  %2408 = vmatmul.bf16.gmra.mxu0 %v2386
  %v2409 = vpop.f32.mrf.mxu0
  %v2410 = vadd.f32 0.0, %v2409
  %v2411 = vpop.f32.mrf.mxu0
  %v2412 = vadd.f32 0.0, %v2411
  %2413 = vmatmul.bf16.gmra.mxu0 %v2389
  %v2414 = vpop.f32.mrf.mxu0
  %v2415 = vadd.f32 0.0, %v2414
  %v2416 = vpop.f32.mrf.mxu0
  %v2417 = vadd.f32 0.0, %v2416
  %2418 = vmatmul.bf16.gmra.mxu0 %v2392
  %v2419 = vpop.f32.mrf.mxu0
  %v2420 = vadd.f32 0.0, %v2419
  %v2421 = vpop.f32.mrf.mxu0
  %v2422 = vadd.f32 0.0, %v2421
  %2423 = vmatmul.bf16.gmra.mxu0 %v2395
  %v2424 = vpop.f32.mrf.mxu0
  %v2425 = vadd.f32 0.0, %v2424
  %v2426 = vpop.f32.mrf.mxu0
  %v2427 = vadd.f32 0.0, %v2426
  %2428 = vdwg.mxu0
  %v2429 = vsel %vm207, %v2410, -inf
  %v2430 = vsel %vm207, %v2412, -inf
  %v2431 = vsel %vm207, %v2415, -inf
  %v2432 = vsel %vm207, %v2417, -inf
  %v2433 = vsel %vm207, %v2420, -inf
  %v2434 = vmax.f32 %v2429, %v2433
  %v2435 = vsel %vm207, %v2422, -inf
  %v2436 = vmax.f32 %v2430, %v2435
  %v2437 = vsel %vm207, %v2425, -inf
  %v2438 = vmax.f32 %v2431, %v2437
  %v2439 = vsel %vm207, %v2427, -inf
  %v2440 = vmax.f32 %v2432, %v2439
  %v2441 = vmax.f32 %v2434, %v2436
  %v2442 = vmax.f32 %v2438, %v2440
  %v2443 = vmax.f32 %v2441, %v2442
  %v2444 = vrot.slane %v2443, 4
  %v2445 = vmax.f32 %v2443, %v2444
  %v2446 = vrot.slane %v2445, 2
  %v2447 = vmax.f32 %v2445, %v2446
  %v2448 = vrot.slane %v2447, 1
  %v2449 = vmax.f32 %v2447, %v2448
  %v2450 = vsub.f32 %v2410, %v2449
  %v2451 = vsub.f32 %v2412, %v2449
  %v2452 = vsub.f32 %v2415, %v2449
  %v2453 = vsub.f32 %v2417, %v2449
  %v2454 = vsub.f32 %v2420, %v2449
  %v2455 = vsub.f32 %v2422, %v2449
  %v2456 = vsub.f32 %v2425, %v2449
  %v2457 = vsub.f32 %v2427, %v2449
  %v2458 = vmul.f32 %v2450, 1.442695
  %v2459 = vpow.pop %v2458
  %v2460 = vmul.f32 %v2451, 1.442695
  %v2461 = vpow.pop %v2460
  %v2462 = vmul.f32 %v2452, 1.442695
  %v2463 = vpow.pop %v2462
  %v2464 = vmul.f32 %v2453, 1.442695
  %v2465 = vpow.pop %v2464
  %v2466 = vmul.f32 %v2454, 1.442695
  %v2467 = vpow.pop %v2466
  %v2468 = vmul.f32 %v2455, 1.442695
  %v2469 = vpow.pop %v2468
  %v2470 = vmul.f32 %v2456, 1.442695
  %v2471 = vpow.pop %v2470
  %v2472 = vmul.f32 %v2457, 1.442695
  %v2473 = vpow.pop %v2472
  %v2474 = vsel %vm207, %v2459, 0.0
  %v2475 = vsel %vm207, %v2461, 0.0
  %v2476 = vadd.f32 %v2474, %v2475
  %v2477 = vsel %vm207, %v2463, 0.0
  %v2478 = vadd.f32 %v2476, %v2477
  %v2479 = vsel %vm207, %v2465, 0.0
  %v2480 = vadd.f32 %v2478, %v2479
  %v2481 = vsel %vm207, %v2467, 0.0
  %v2482 = vadd.f32 %v2480, %v2481
  %v2483 = vsel %vm207, %v2469, 0.0
  %v2484 = vadd.f32 %v2482, %v2483
  %v2485 = vsel %vm207, %v2471, 0.0
  %v2486 = vadd.f32 %v2484, %v2485
  %v2487 = vsel %vm207, %v2473, 0.0
  %v2488 = vadd.f32 %v2486, %v2487
  %v2489 = vrot.slane %v2488, 4
  %v2490 = vadd.f32 %v2488, %v2489
  %v2491 = vrot.slane %v2490, 2
  %v2492 = vadd.f32 %v2490, %v2491
  %v2493 = vrot.slane %v2492, 1
  %v2494 = vadd.f32 %v2492, %v2493
  %v2495 = vpack.c.bf16 %v2461, %v2459
  %v2496 = vpack.c.bf16 %v2465, %v2463
  %v2497 = vpack.c.bf16 %v2469, %v2467
  %v2498 = vpack.c.bf16 %v2473, %v2471
  %v2500 = vsel %vm207, %v2368, 0
  %2502 = vmatpush.bf16.msra.mxu0 0
  %2503 = vmatpush.bf16.msra.mxu0 0
  %2504 = vmatpush.bf16.msra.mxu0 0
  %2505 = vmatpush.bf16.msra.mxu0 0
  %2506 = vmatpush.bf16.msra.mxu0 %v2498
  %2507 = vmatpush.bf16.msra.mxu0 %v2497
  %2508 = vmatpush.bf16.msra.mxu0 %v2496
  %2509 = vmatpush.bf16.msra.mxu0 %v2495
  %2510 = vmatmul.bf16.gmra.mxu0 %v2500
  %v2511 = vpop.f32.mrf.mxu0
  %v2512 = vadd.f32 0.0, %v2511
  %v2513 = vpop.f32.mrf.mxu0
  %2514 = vdwg.mxu0
  %v2515 = vrcp.pop %v2494
  %v2516 = vmul.f32 %v2512, %v2515
  %2517 = vst.msk [vmem:[%s1741 + $0x14] sm:$0xf] %vm376, %v2516
  %v2518 = vld [vmem:[%s1574 + $0x18] sm:$0xf]
  %v2519 = vpack.c.bf16 %v2518, %v2518
  %v2520 = vld [vmem:[%s1574 + $0x38] sm:$0xf]
  %v2521 = vpack.c.bf16 %v2520, %v2520
  %v2522 = vld [vmem:[%s1574 + $0x58] sm:$0xf]
  %v2523 = vpack.c.bf16 %v2522, %v2522
  %2524 = vxpose.xlu0.c.b16.start [1/8] %v2521, 128
  %2525 = vxpose.xlu0.c.b16.cont [2/8] 0, 128
  %2526 = vxpose.xlu0.c.b16.cont [3/8] 0, 128
  %2527 = vxpose.xlu0.c.b16.cont [4/8] 0, 128
  %2528 = vxpose.xlu0.c.b16.cont [5/8] 0, 128
  %2529 = vxpose.xlu0.c.b16.cont [6/8] 0, 128
  %2530 = vxpose.xlu0.c.b16.cont [7/8] 0, 128
  %2531 = vxpose.xlu0.c.b16.end [8/8] 0, 128
  %v2532 = vpop.trf.xlu0
  %v2533 = vpop.trf.xlu0
  %v2534 = vpop.trf.xlu0
  %v2535 = vpop.trf.xlu0
  %v2536 = vpop.trf.xlu0
  %v2537 = vpop.trf.xlu0
  %v2538 = vpop.trf.xlu0
  %v2539 = vpop.trf.xlu0
  %v2541 = vsel %vm242, %v2532, 0
  %v2544 = vsel %vm242, %v2533, 0
  %v2547 = vsel %vm242, %v2534, 0
  %v2550 = vsel %vm242, %v2535, 0
  %v2553 = vsel %vm255, %v2519, 0
  %2555 = vmatpush.bf16.msra.mxu0 0
  %2556 = vmatpush.bf16.msra.mxu0 0
  %2557 = vmatpush.bf16.msra.mxu0 0
  %2558 = vmatpush.bf16.msra.mxu0 0
  %2559 = vmatpush.bf16.msra.mxu0 0
  %2560 = vmatpush.bf16.msra.mxu0 0
  %2561 = vmatpush.bf16.msra.mxu0 0
  %2562 = vmatpush.bf16.msra.mxu0 %v2553
  %2563 = vmatmul.bf16.gmra.mxu0 %v2541
  %v2564 = vpop.f32.mrf.mxu0
  %v2565 = vadd.f32 0.0, %v2564
  %v2566 = vpop.f32.mrf.mxu0
  %v2567 = vadd.f32 0.0, %v2566
  %2568 = vmatmul.bf16.gmra.mxu0 %v2544
  %v2569 = vpop.f32.mrf.mxu0
  %v2570 = vadd.f32 0.0, %v2569
  %v2571 = vpop.f32.mrf.mxu0
  %v2572 = vadd.f32 0.0, %v2571
  %2573 = vmatmul.bf16.gmra.mxu0 %v2547
  %v2574 = vpop.f32.mrf.mxu0
  %v2575 = vadd.f32 0.0, %v2574
  %v2576 = vpop.f32.mrf.mxu0
  %v2577 = vadd.f32 0.0, %v2576
  %2578 = vmatmul.bf16.gmra.mxu0 %v2550
  %v2579 = vpop.f32.mrf.mxu0
  %v2580 = vadd.f32 0.0, %v2579
  %v2581 = vpop.f32.mrf.mxu0
  %v2582 = vadd.f32 0.0, %v2581
  %2583 = vdwg.mxu0
  %v2584 = vsel %vm207, %v2565, -inf
  %v2585 = vsel %vm207, %v2567, -inf
  %v2586 = vsel %vm207, %v2570, -inf
  %v2587 = vsel %vm207, %v2572, -inf
  %v2588 = vsel %vm207, %v2575, -inf
  %v2589 = vmax.f32 %v2584, %v2588
  %v2590 = vsel %vm207, %v2577, -inf
  %v2591 = vmax.f32 %v2585, %v2590
  %v2592 = vsel %vm207, %v2580, -inf
  %v2593 = vmax.f32 %v2586, %v2592
  %v2594 = vsel %vm207, %v2582, -inf
  %v2595 = vmax.f32 %v2587, %v2594
  %v2596 = vmax.f32 %v2589, %v2591
  %v2597 = vmax.f32 %v2593, %v2595
  %v2598 = vmax.f32 %v2596, %v2597
  %v2599 = vrot.slane %v2598, 4
  %v2600 = vmax.f32 %v2598, %v2599
  %v2601 = vrot.slane %v2600, 2
  %v2602 = vmax.f32 %v2600, %v2601
  %v2603 = vrot.slane %v2602, 1
  %v2604 = vmax.f32 %v2602, %v2603
  %v2605 = vsub.f32 %v2565, %v2604
  %v2606 = vsub.f32 %v2567, %v2604
  %v2607 = vsub.f32 %v2570, %v2604
  %v2608 = vsub.f32 %v2572, %v2604
  %v2609 = vsub.f32 %v2575, %v2604
  %v2610 = vsub.f32 %v2577, %v2604
  %v2611 = vsub.f32 %v2580, %v2604
  %v2612 = vsub.f32 %v2582, %v2604
  %v2613 = vmul.f32 %v2605, 1.442695
  %v2614 = vpow.pop %v2613
  %v2615 = vmul.f32 %v2606, 1.442695
  %v2616 = vpow.pop %v2615
  %v2617 = vmul.f32 %v2607, 1.442695
  %v2618 = vpow.pop %v2617
  %v2619 = vmul.f32 %v2608, 1.442695
  %v2620 = vpow.pop %v2619
  %v2621 = vmul.f32 %v2609, 1.442695
  %v2622 = vpow.pop %v2621
  %v2623 = vmul.f32 %v2610, 1.442695
  %v2624 = vpow.pop %v2623
  %v2625 = vmul.f32 %v2611, 1.442695
  %v2626 = vpow.pop %v2625
  %v2627 = vmul.f32 %v2612, 1.442695
  %v2628 = vpow.pop %v2627
  %v2629 = vsel %vm207, %v2614, 0.0
  %v2630 = vsel %vm207, %v2616, 0.0
  %v2631 = vadd.f32 %v2629, %v2630
  %v2632 = vsel %vm207, %v2618, 0.0
  %v2633 = vadd.f32 %v2631, %v2632
  %v2634 = vsel %vm207, %v2620, 0.0
  %v2635 = vadd.f32 %v2633, %v2634
  %v2636 = vsel %vm207, %v2622, 0.0
  %v2637 = vadd.f32 %v2635, %v2636
  %v2638 = vsel %vm207, %v2624, 0.0
  %v2639 = vadd.f32 %v2637, %v2638
  %v2640 = vsel %vm207, %v2626, 0.0
  %v2641 = vadd.f32 %v2639, %v2640
  %v2642 = vsel %vm207, %v2628, 0.0
  %v2643 = vadd.f32 %v2641, %v2642
  %v2644 = vrot.slane %v2643, 4
  %v2645 = vadd.f32 %v2643, %v2644
  %v2646 = vrot.slane %v2645, 2
  %v2647 = vadd.f32 %v2645, %v2646
  %v2648 = vrot.slane %v2647, 1
  %v2649 = vadd.f32 %v2647, %v2648
  %v2650 = vpack.c.bf16 %v2616, %v2614
  %v2651 = vpack.c.bf16 %v2620, %v2618
  %v2652 = vpack.c.bf16 %v2624, %v2622
  %v2653 = vpack.c.bf16 %v2628, %v2626
  %v2655 = vsel %vm207, %v2523, 0
  %2657 = vmatpush.bf16.msra.mxu0 0
  %2658 = vmatpush.bf16.msra.mxu0 0
  %2659 = vmatpush.bf16.msra.mxu0 0
  %2660 = vmatpush.bf16.msra.mxu0 0
  %2661 = vmatpush.bf16.msra.mxu0 %v2653
  %2662 = vmatpush.bf16.msra.mxu0 %v2652
  %2663 = vmatpush.bf16.msra.mxu0 %v2651
  %2664 = vmatpush.bf16.msra.mxu0 %v2650
  %2665 = vmatmul.bf16.gmra.mxu0 %v2655
  %v2666 = vpop.f32.mrf.mxu0
  %v2667 = vadd.f32 0.0, %v2666
  %v2668 = vpop.f32.mrf.mxu0
  %2669 = vdwg.mxu0
  %v2670 = vrcp.pop %v2649
  %v2671 = vmul.f32 %v2667, %v2670
  %2672 = vst.msk [vmem:[%s1741 + $0x18] sm:$0xf] %vm376, %v2671
  %v2673 = vld [vmem:[%s1574 + $0x1c] sm:$0xf]
  %v2674 = vpack.c.bf16 %v2673, %v2673
  %v2675 = vld [vmem:[%s1574 + $0x3c] sm:$0xf]
  %v2676 = vpack.c.bf16 %v2675, %v2675
  %v2677 = vld [vmem:[%s1574 + $0x5c] sm:$0xf]
  %v2678 = vpack.c.bf16 %v2677, %v2677
  %2679 = vxpose.xlu0.c.b16.start [1/8] %v2676, 128
  %2680 = vxpose.xlu0.c.b16.cont [2/8] 0, 128
  %2681 = vxpose.xlu0.c.b16.cont [3/8] 0, 128
  %2682 = vxpose.xlu0.c.b16.cont [4/8] 0, 128
  %2683 = vxpose.xlu0.c.b16.cont [5/8] 0, 128
  %2684 = vxpose.xlu0.c.b16.cont [6/8] 0, 128
  %2685 = vxpose.xlu0.c.b16.cont [7/8] 0, 128
  %2686 = vxpose.xlu0.c.b16.end [8/8] 0, 128
  %v2687 = vpop.trf.xlu0
  %v2688 = vpop.trf.xlu0
  %v2689 = vpop.trf.xlu0
  %v2690 = vpop.trf.xlu0
  %v2691 = vpop.trf.xlu0
  %v2692 = vpop.trf.xlu0
  %v2693 = vpop.trf.xlu0
  %v2694 = vpop.trf.xlu0
  %v2696 = vsel %vm242, %v2687, 0
  %v2699 = vsel %vm242, %v2688, 0
  %v2702 = vsel %vm242, %v2689, 0
  %v2705 = vsel %vm242, %v2690, 0
  %v2708 = vsel %vm255, %v2674, 0
  %2710 = vmatpush.bf16.msra.mxu0 0
  %2711 = vmatpush.bf16.msra.mxu0 0
  %2712 = vmatpush.bf16.msra.mxu0 0
  %2713 = vmatpush.bf16.msra.mxu0 0
  %2714 = vmatpush.bf16.msra.mxu0 0
  %2715 = vmatpush.bf16.msra.mxu0 0
  %2716 = vmatpush.bf16.msra.mxu0 0
  %2717 = vmatpush.bf16.msra.mxu0 %v2708
  %2718 = vmatmul.bf16.gmra.mxu0 %v2696
  %v2719 = vpop.f32.mrf.mxu0
  %v2720 = vadd.f32 0.0, %v2719
  %v2721 = vpop.f32.mrf.mxu0
  %v2722 = vadd.f32 0.0, %v2721
  %2723 = vmatmul.bf16.gmra.mxu0 %v2699
  %v2724 = vpop.f32.mrf.mxu0
  %v2725 = vadd.f32 0.0, %v2724
  %v2726 = vpop.f32.mrf.mxu0
  %v2727 = vadd.f32 0.0, %v2726
  %2728 = vmatmul.bf16.gmra.mxu0 %v2702
  %v2729 = vpop.f32.mrf.mxu0
  %v2730 = vadd.f32 0.0, %v2729
  %v2731 = vpop.f32.mrf.mxu0
  %v2732 = vadd.f32 0.0, %v2731
  %2733 = vmatmul.bf16.gmra.mxu0 %v2705
  %v2734 = vpop.f32.mrf.mxu0
  %v2735 = vadd.f32 0.0, %v2734
  %v2736 = vpop.f32.mrf.mxu0
  %v2737 = vadd.f32 0.0, %v2736
  %2738 = vdwg.mxu0
  %v2739 = vsel %vm207, %v2720, -inf
  %v2740 = vsel %vm207, %v2722, -inf
  %v2741 = vsel %vm207, %v2725, -inf
  %v2742 = vsel %vm207, %v2727, -inf
  %v2743 = vsel %vm207, %v2730, -inf
  %v2744 = vmax.f32 %v2739, %v2743
  %v2745 = vsel %vm207, %v2732, -inf
  %v2746 = vmax.f32 %v2740, %v2745
  %v2747 = vsel %vm207, %v2735, -inf
  %v2748 = vmax.f32 %v2741, %v2747
  %v2749 = vsel %vm207, %v2737, -inf
  %v2750 = vmax.f32 %v2742, %v2749
  %v2751 = vmax.f32 %v2744, %v2746
  %v2752 = vmax.f32 %v2748, %v2750
  %v2753 = vmax.f32 %v2751, %v2752
  %v2754 = vrot.slane %v2753, 4
  %v2755 = vmax.f32 %v2753, %v2754
  %v2756 = vrot.slane %v2755, 2
  %v2757 = vmax.f32 %v2755, %v2756
  %v2758 = vrot.slane %v2757, 1
  %v2759 = vmax.f32 %v2757, %v2758
  %v2760 = vsub.f32 %v2720, %v2759
  %v2761 = vsub.f32 %v2722, %v2759
  %v2762 = vsub.f32 %v2725, %v2759
  %v2763 = vsub.f32 %v2727, %v2759
  %v2764 = vsub.f32 %v2730, %v2759
  %v2765 = vsub.f32 %v2732, %v2759
  %v2766 = vsub.f32 %v2735, %v2759
  %v2767 = vsub.f32 %v2737, %v2759
  %v2768 = vmul.f32 %v2760, 1.442695
  %v2769 = vpow.pop %v2768
  %v2770 = vmul.f32 %v2761, 1.442695
  %v2771 = vpow.pop %v2770
  %v2772 = vmul.f32 %v2762, 1.442695
  %v2773 = vpow.pop %v2772
  %v2774 = vmul.f32 %v2763, 1.442695
  %v2775 = vpow.pop %v2774
  %v2776 = vmul.f32 %v2764, 1.442695
  %v2777 = vpow.pop %v2776
  %v2778 = vmul.f32 %v2765, 1.442695
  %v2779 = vpow.pop %v2778
  %v2780 = vmul.f32 %v2766, 1.442695
  %v2781 = vpow.pop %v2780
  %v2782 = vmul.f32 %v2767, 1.442695
  %v2783 = vpow.pop %v2782
  %v2784 = vsel %vm207, %v2769, 0.0
  %v2785 = vsel %vm207, %v2771, 0.0
  %v2786 = vadd.f32 %v2784, %v2785
  %v2787 = vsel %vm207, %v2773, 0.0
  %v2788 = vadd.f32 %v2786, %v2787
  %v2789 = vsel %vm207, %v2775, 0.0
  %v2790 = vadd.f32 %v2788, %v2789
  %v2791 = vsel %vm207, %v2777, 0.0
  %v2792 = vadd.f32 %v2790, %v2791
  %v2793 = vsel %vm207, %v2779, 0.0
  %v2794 = vadd.f32 %v2792, %v2793
  %v2795 = vsel %vm207, %v2781, 0.0
  %v2796 = vadd.f32 %v2794, %v2795
  %v2797 = vsel %vm207, %v2783, 0.0
  %v2798 = vadd.f32 %v2796, %v2797
  %v2799 = vrot.slane %v2798, 4
  %v2800 = vadd.f32 %v2798, %v2799
  %v2801 = vrot.slane %v2800, 2
  %v2802 = vadd.f32 %v2800, %v2801
  %v2803 = vrot.slane %v2802, 1
  %v2804 = vadd.f32 %v2802, %v2803
  %v2805 = vpack.c.bf16 %v2771, %v2769
  %v2806 = vpack.c.bf16 %v2775, %v2773
  %v2807 = vpack.c.bf16 %v2779, %v2777
  %v2808 = vpack.c.bf16 %v2783, %v2781
  %v2810 = vsel %vm207, %v2678, 0
  %2812 = vmatpush.bf16.msra.mxu0 0
  %2813 = vmatpush.bf16.msra.mxu0 0
  %2814 = vmatpush.bf16.msra.mxu0 0
  %2815 = vmatpush.bf16.msra.mxu0 0
  %2816 = vmatpush.bf16.msra.mxu0 %v2808
  %2817 = vmatpush.bf16.msra.mxu0 %v2807
  %2818 = vmatpush.bf16.msra.mxu0 %v2806
  %2819 = vmatpush.bf16.msra.mxu0 %v2805
  %2820 = vmatmul.bf16.gmra.mxu0 %v2810
  %v2821 = vpop.f32.mrf.mxu0
  %v2822 = vadd.f32 0.0, %v2821
  %v2823 = vpop.f32.mrf.mxu0
  %2824 = vdwg.mxu0
  %v2825 = vrcp.pop %v2804
  %v2826 = vmul.f32 %v2822, %v2825
  %2827 = vst.msk [vmem:[%s1741 + $0x1c] sm:$0xf] %vm376, %v2826
  %v2828 = vld [vmem:[%s1741] sm:$0xff]
  %v2829 = vld [vmem:[%s1741 + $0x8] sm:$0xff]
  %v2830 = vld [vmem:[%s1741 + $0x10] sm:$0xff]
  %v2831 = vld [vmem:[%s1741 + $0x18] sm:$0xff]
  %v2832 = vpack.c.bf16 %v2829, %v2828
  %v2833 = vpack.c.bf16 %v2831, %v2830
  %2834 = vmatpush.bf16.msra.mxu0 0
  %2835 = vmatpush.bf16.msra.mxu0 0
  %2836 = vmatpush.bf16.msra.mxu0 0
  %2837 = vmatpush.bf16.msra.mxu0 0
  %2838 = vmatpush.bf16.msra.mxu0 0
  %2839 = vmatpush.bf16.msra.mxu0 0
  %2840 = vmatpush.bf16.msra.mxu0 %v2833
  %2841 = vmatpush.bf16.msra.mxu0 %v2832
  %2842 = vmatmul.bf16.gmra.mxu0 %v1500
  %v2843 = vpop.f32.mrf.mxu0
  %v2844 = vadd.f32 %v1472, %v2843
  %v2845 = vpop.f32.mrf.mxu0
  %v2846 = vadd.f32 %v1477, %v2845
  %2847 = vmatmul.bf16.gmra.mxu0 %v1503
  %v2848 = vpop.f32.mrf.mxu0
  %v2849 = vadd.f32 %v1482, %v2848
  %v2850 = vpop.f32.mrf.mxu0
  %v2851 = vadd.f32 %v1487, %v2850
  %2852 = vdwg.mxu0
  %s2853 = scalar_lea.vmem %s5, 32
  %2854 = vst.msk [vmem:[%s2853] sm:$0xff] %vm207, %v2844
  %2855 = vst.msk [vmem:[%s2853 + $0x8] sm:$0xff] %vm207, %v2846
  %2856 = vst.msk [vmem:[%s2853 + $0x10] sm:$0xff] %vm207, %v2849
  %2857 = vst.msk [vmem:[%s2853 + $0x18] sm:$0xff] %vm207, %v2851
  // Predicated region
  $region22: #{multi_head_self_attention.1} parent=0 // pred_check
    _
  $region23: #{multi_head_self_attention.1} parent=0 // pred_check_branch
    %2859 = sbr.rel (0) target = $region25
  $region24: #{multi_head_self_attention.1} parent=0 // pred_region
    _
  $region25: #{multi_head_self_attention.1} parent=0 // pred_fallthru
    _
  // Predicated region
  $region26: #{multi_head_self_attention.1} parent=0 // pred_check
    _
  $region27: #{multi_head_self_attention.1} parent=0 // pred_check_branch
    %2861 = sbr.rel (0) target = $region29
  $region28: #{multi_head_self_attention.1} parent=0 // pred_region
    _
  $region29: #{multi_head_self_attention.1} parent=0 // pred_fallthru
    _

</llo_original>
